<compile_context>
chip_gen: v5e
topology: v5e:2x2
jax: 0.10.0
libtpu: 0.0.40
codegen_flags: <defaults>
</compile_context>

<pallas_src>
import numpy as np
import jax
import jax.numpy as jnp
from jax import lax
from jax.experimental import pallas as pl
from jax.experimental.pallas import tpu as pltpu


def _round_up(x, m):
    return (x + m - 1) // m * m


def _cdiv(a, b):
    return -(-a // b)


def _chip_caps():
    """(max batch tile, #TensorCores per chip, VMEM capacity bytes)."""
    max_block, num_cores, vmem_cap = 256, 1, 128 * 1024 * 1024
    try:
        kind = jax.devices()[0].device_kind.lower()
    except Exception:
        kind = ""
    if ("v5 lite" in kind) or ("v5e" in kind) or ("v5litepod" in kind):
        # 128x128 MXU -> 128 rows already saturates MXU-M; small scoped VMEM.
        max_block = 128
    elif "v7" in kind:
        num_cores = 2
        vmem_cap = 64 * 1024 * 1024
    return max_block, num_cores, vmem_cap


def _pick_block_b(B, max_block, num_cores):
    """Pick tile count first, then round the tile to bf16 sublane granularity."""
    nt = _cdiv(B, max_block)
    # Split across the two v7x TensorCores only when each half gets >=128 rows.
    if num_cores > 1 and nt < 2 and B >= 2 * 128:
        nt = 2
    return _round_up(_cdiv(B, nt), 16)


def _make_kernel(apply_projection: bool, use_gfeat: bool):
    """Kernel whose ref signature matches the operands actually passed.

    Grid is (batch_tiles, class_tiles). The projected + normalized features are
    computed once per batch tile (at class-tile 0) into a VMEM scratch and
    reused for every class tile.
    """

    def kernel(*refs):
        idx = 0
        feat_ref = refs[idx]; idx += 1
        if apply_projection:
            w_ref = refs[idx]
            b_ref = refs[idx + 1]
            idx += 2
        if use_gfeat:
            gfeat_ref = refs[idx]; idx += 1
        text_ref = refs[idx]
        out_ref = refs[idx + 1]
        x_scr = refs[idx + 2]          # VMEM scratch (block_b, d_feat) bf16

        @pl.when(pl.program_id(1) == 0)
        def _():
            if apply_projection:
                # nn.Linear(inshape, 512): bf16 MXU operands, f32 accumulation.
                x = jnp.dot(feat_ref[...], w_ref[...],
                            preferred_element_type=jnp.float32) + b_ref[...]
            else:
                x = feat_ref[...].astype(jnp.float32)

            # feat = feat / feat.norm(dim=-1, keepdim=True)   (rsqrt -> EUP)
            x = x * lax.rsqrt(jnp.sum(x * x, axis=-1, keepdims=True))

            if use_gfeat:
                x = x - gfeat_ref[...].astype(jnp.float32)
                x = x * lax.rsqrt(jnp.sum(x * x, axis=-1, keepdims=True))

            x_scr[...] = x.astype(x_scr.dtype)

        # scores = 100 * feat @ text^T ; the 100x scale and the appended zero
        # column are folded into text_ref (pre-scaled, zero-padded, lane-dense).
        out_ref[...] = jnp.dot(x_scr[...], text_ref[...],
                               preferred_element_type=jnp.float32)

    return kernel


def prepare_clip_constants(proj_w, proj_b, text_features, inshape):
    """__init__-time prep (runs once, NOT per forward call)."""
    apply_projection = inshape > 512
    d_feat = 512 if apply_projection else inshape

    tf = jnp.asarray(text_features, jnp.float32)
    assert tf.shape[1] == d_feat, "text feature dim must match feature dim"
    num_cls = tf.shape[0]
    # Normalize, fold in the 100x scale, zero-pad the class axis (incl. the
    # appended zero-score column) to a lane-dense tile multiple.
    tf = 100.0 * tf / jnp.linalg.norm(tf, axis=-1, keepdims=True)
    if num_cls + 1 > 512:
        n_tile = 512                                  # class-axis grid tile
    else:
        n_tile = _round_up(num_cls + 1, 128)
    n_out = _round_up(num_cls + 1, n_tile)
    text_t = jnp.zeros((d_feat, n_out), jnp.float32).at[:, :num_cls].set(tf.T)
    text_t = text_t.astype(jnp.bfloat16)

    consts = dict(apply_projection=apply_projection, d_in=inshape,
                  d_feat=d_feat, num_cls=num_cls, n_tile=n_tile, n_out=n_out,
                  text_t=text_t)
    if apply_projection:
        # nn.Linear stores weight as (512, inshape); kernel wants (inshape, 512).
        consts["w_t"] = jnp.asarray(proj_w, jnp.float32).T.astype(jnp.bfloat16)
        consts["b_vec"] = jnp.asarray(proj_b, jnp.float32).reshape(1, 512)
    jax.block_until_ready(text_t)   # pay prep cost at init, not first forward
    return consts


def clip_predictor_forward(feat, consts, gfeat=None, *, block_b=None):
    B, d_in = feat.shape
    assert d_in == consts["d_in"], "feat dim must match prepared constants"
    apply_projection = consts["apply_projection"]
    d_feat = consts["d_feat"]
    num_cls = consts["num_cls"]
    n_tile = consts["n_tile"]
    n_out = consts["n_out"]
    text_t = consts["text_t"]
    use_gfeat = gfeat is not None

    max_block, num_cores, vmem_cap = _chip_caps()
    if block_b is None:
        block_b = _pick_block_b(B, max_block, num_cores)
    b_pad = _round_up(B, block_b)
    grid_b = b_pad // block_b
    grid_n = n_out // n_tile

    # Single bf16 cast; pad only when the batch is ragged (ones, not zeros, so
    # padded rows never hit 0/0 in the norms).
    feat_p = jnp.asarray(feat, jnp.bfloat16)
    if b_pad != B:
        feat_p = jnp.pad(feat_p, ((0, b_pad - B), (0, 0)), constant_values=1.0)

    gfeat_p = None
    if use_gfeat:
        gfeat_p = jnp.asarray(gfeat, jnp.bfloat16)       # upcast in-kernel
        if b_pad != B:
            gfeat_p = jnp.pad(gfeat_p, ((0, b_pad - B), (0, 0)))

    # Rough VMEM footprint (2 buffers everywhere for a conservative estimate).
    def _bytes(shape, itemsize, bufs=2):
        n = 1
        for s in shape:
            n *= s
        return n * itemsize * bufs

    needed = (_bytes((block_b, d_in), 2)
              + _bytes((block_b, n_tile), 4)
              + _bytes((d_feat, n_tile), 2)
              + _bytes((block_b, d_feat), 2, 1))          # scratch
    if apply_projection:
        needed += _bytes((d_in, 512), 2) + _bytes((1, 512), 4)
    if use_gfeat:
        needed += _bytes((block_b, d_feat), 2)
    vmem_limit = int(min(vmem_cap - (8 << 20),
                         max(32 << 20, needed + (4 << 20))))

    def run(single_buffer_consts):
        def const_spec(shape, index_map):
            if single_buffer_consts:
                return pl.BlockSpec(shape, index_map,
                                    pipeline_mode=pl.Buffered(1))
            return pl.BlockSpec(shape, index_map)

        operands = [feat_p]
        in_specs = [pl.BlockSpec((block_b, d_in), lambda i, j: (i, 0))]
        if apply_projection:
            operands += [consts["w_t"], consts["b_vec"]]
            in_specs += [const_spec((d_in, 512), lambda i, j: (0, 0)),
                         const_spec((1, 512), lambda i, j: (0, 0))]
        if use_gfeat:
            operands.append(gfeat_p)
            in_specs.append(pl.BlockSpec((block_b, d_feat),
                                         lambda i, j: (i, 0)))
        operands.append(text_t)
        if grid_n == 1:
            in_specs.append(const_spec((d_feat, n_tile), lambda i, j: (0, 0)))
        else:
            in_specs.append(pl.BlockSpec((d_feat, n_tile),
                                         lambda i, j: (0, j)))

        return pl.pallas_call(
            _make_kernel(apply_projection, use_gfeat),
            out_shape=jax.ShapeDtypeStruct((b_pad, n_out), jnp.float32),
            grid_spec=pltpu.PrefetchScalarGridSpec(
                num_scalar_prefetch=0,
                grid=(grid_b, grid_n),
                in_specs=in_specs,
                out_specs=pl.BlockSpec((block_b, n_tile), lambda i, j: (i, j)),
                scratch_shapes=[pltpu.VMEM((block_b, d_feat), jnp.bfloat16)],
            ),
            compiler_params=pltpu.CompilerParams(
                dimension_semantics=("parallel", "arbitrary"),
                vmem_limit_bytes=vmem_limit),
        )(*operands)

    try:
        out = run(True)       # single-buffered constant operands
    except Exception:
        out = run(False)      # fallback: default (double) buffering

    # Drop batch padding and lane padding (keeping the one zero column that
    # implements torch.cat([scores, zeros], dim=1)).
    return out[:B, :num_cls + 1]


def reference_forward(feat, proj_w, proj_b, text_features, gfeat=None):
    """Pure-numpy replica of ClipPredictor.forward (f32)."""
    feat = np.asarray(feat, np.float32)
    if feat.shape[-1] > 512:
        feat = feat @ np.asarray(proj_w, np.float32).T + np.asarray(proj_b, np.float32)
    feat = feat / np.linalg.norm(feat, axis=-1, keepdims=True)
    if gfeat is not None:
        feat = feat - np.asarray(gfeat, np.float32)
        feat = feat / np.linalg.norm(feat, axis=-1, keepdims=True)
    tf = np.asarray(text_features, np.float32)
    tf = tf / np.linalg.norm(tf, axis=-1, keepdims=True)
    scores = 100.0 * feat @ tf.T
    return np.concatenate(
        [scores, np.zeros((scores.shape[0], 1), np.float32)], axis=1)


if __name__ == "__main__":
    # TODO(synk): clip.load / encode_text (frozen CLIP encoders) only run in
    # __init__; text_features are synthesized deterministically instead.
    key = jax.random.PRNGKey(0)
    k1, k2, k3, k4, k5 = jax.random.split(key, 5)

    B, D_in, NUM_CLS = 16, 1024, 4          # inshape > 512 -> projection path
    feat = jax.random.normal(k1, (B, D_in), jnp.float32)
    proj_w = jax.random.normal(k2, (512, D_in), jnp.float32) * 0.02
    proj_b = jax.random.normal(k3, (512,), jnp.float32) * 0.01
    text_features = jax.random.normal(k4, (NUM_CLS, 512), jnp.float32)
    gfeat = jax.random.normal(k5, (B, 512), jnp.float32)
    gfeat = gfeat / jnp.linalg.norm(gfeat, axis=-1, keepdims=True)

    # __init__-time constant prep (hoisted out of the forward pass).
    consts_proj = prepare_clip_constants(proj_w, proj_b, text_features, D_in)
    consts_id = prepare_clip_constants(proj_w, proj_b, text_features, 512)

    # Path 1: projection + gfeat.
    out = jax.block_until_ready(clip_predictor_forward(feat, consts_proj, gfeat))
    ref = reference_forward(feat, proj_w, proj_b, text_features, gfeat)
    np.testing.assert_allclose(np.asarray(out), ref, rtol=2e-2, atol=2e-1)
    assert out.shape == (B, NUM_CLS + 1)

    # Path 2: inshape == 512 -> no projection, no gfeat (dummy operands dropped).
    feat512 = jax.random.normal(k1, (B, 512), jnp.float32)
    out2 = jax.block_until_ready(clip_predictor_forward(feat512, consts_id, None))
    ref2 = reference_forward(feat512, proj_w, proj_b, text_features, None)
    np.testing.assert_allclose(np.asarray(out2), ref2, rtol=2e-2, atol=2e-1)
    assert out2.shape == (B, NUM_CLS + 1)

    # Path 3: ragged batch (B not a multiple of 16) exercises the pad path.
    B3 = 10
    feat3 = jax.random.normal(k2, (B3, D_in), jnp.float32)
    gfeat3 = jax.random.normal(k3, (B3, 512), jnp.float32)
    gfeat3 = gfeat3 / jnp.linalg.norm(gfeat3, axis=-1, keepdims=True)
    out3 = jax.block_until_ready(clip_predictor_forward(feat3, consts_proj, gfeat3))
    ref3 = reference_forward(feat3, proj_w, proj_b, text_features, gfeat3)
    np.testing.assert_allclose(np.asarray(out3), ref3, rtol=2e-2, atol=2e-1)
    assert out3.shape == (B3, NUM_CLS + 1)

    print("KERNEL_OK")
</pallas_src>

<mosaic_0001>
module attributes {stable_mosaic.version = 11 : i64} {
  func.func @kernel(%arg0: i32, %arg1: i32, %arg2: memref<16x1024xbf16, #tpu.memory_space<vmem>>, %arg3: memref<1024x512xbf16, #tpu.memory_space<vmem>>, %arg4: memref<1x512xf32, #tpu.memory_space<vmem>>, %arg5: memref<16x512xbf16, #tpu.memory_space<vmem>>, %arg6: memref<512x128xbf16, #tpu.memory_space<vmem>>, %arg7: memref<16x128xf32, #tpu.memory_space<vmem>>, %arg8: memref<16x512xbf16, #tpu.memory_space<vmem>>) attributes {dimension_semantics = [#tpu.dimension_semantics<parallel>, #tpu.dimension_semantics<arbitrary>], iteration_bounds = array<i64: 1, 1>, scalar_prefetch = 0 : i64, scratch_operands = 1 : i64, tpu.core_type = #tpu.core_type<tc>, window_params = [{transform_indices = @transform_0, window_bounds = array<i64: 16, 1024>}, {pipeline_mode = #tpu.pipeline_mode<synchronous>, transform_indices = @transform_1, window_bounds = array<i64: 1024, 512>}, {pipeline_mode = #tpu.pipeline_mode<synchronous>, transform_indices = @transform_2, window_bounds = array<i64: 1, 512>}, {transform_indices = @transform_3, window_bounds = array<i64: 16, 512>}, {pipeline_mode = #tpu.pipeline_mode<synchronous>, transform_indices = @transform_4, window_bounds = array<i64: 512, 128>}, {transform_indices = @transform_5, window_bounds = array<i64: 16, 128>}]} {
    %c0_i32 = arith.constant 0 : i32
    %0 = arith.cmpi eq, %arg1, %c0_i32 : i32
    %1 = arith.extui %0 : i1 to i32
    %c0_i32_0 = arith.constant 0 : i32
    %2 = arith.cmpi ne, %1, %c0_i32_0 : i32
    scf.if %2 {
      %c0_6 = arith.constant 0 : index
      %c0_7 = arith.constant 0 : index
      %7 = vector.load %arg2[%c0_6, %c0_7] : memref<16x1024xbf16, #tpu.memory_space<vmem>>, vector<16x1024xbf16>
      %c0_8 = arith.constant 0 : index
      %c0_9 = arith.constant 0 : index
      %8 = vector.load %arg3[%c0_8, %c0_9] : memref<1024x512xbf16, #tpu.memory_space<vmem>>, vector<1024x512xbf16>
      %cst_10 = arith.constant dense<0.000000e+00> : vector<16x512xf32>
      %9 = tpu.matmul %7, %8, %cst_10 {dimension_numbers = #tpu.dot_dimension_numbers<[1], [0], [0], [1], [0, 0, 1, 1], [], []>} : vector<16x1024xbf16>, vector<1024x512xbf16>, vector<16x512xf32> -> vector<16x512xf32>
      %c0_11 = arith.constant 0 : index
      %c0_12 = arith.constant 0 : index
      %10 = vector.load %arg4[%c0_11, %c0_12] : memref<1x512xf32, #tpu.memory_space<vmem>>, vector<1x512xf32>
      %11 = vector.broadcast %10 : vector<1x512xf32> to vector<16x512xf32>
      %12 = arith.addf %9, %11 : vector<16x512xf32>
      %13 = arith.mulf %12, %12 : vector<16x512xf32>
      %cst_13 = arith.constant dense<0.000000e+00> : vector<16xf32>
      %14 = vector.multi_reduction <add>, %13, %cst_13 [1] : vector<16x512xf32> to vector<16xf32>
      %15 = vector.shape_cast %14 : vector<16xf32> to vector<16x1xf32>
      %16 = math.rsqrt %15 : vector<16x1xf32>
      %17 = vector.broadcast %16 : vector<16x1xf32> to vector<16x512xf32>
      %18 = arith.mulf %12, %17 : vector<16x512xf32>
      %c0_14 = arith.constant 0 : index
      %c0_15 = arith.constant 0 : index
      %19 = vector.load %arg5[%c0_14, %c0_15] : memref<16x512xbf16, #tpu.memory_space<vmem>>, vector<16x512xbf16>
      %20 = arith.extf %19 : vector<16x512xbf16> to vector<16x512xf32>
      %21 = arith.subf %18, %20 : vector<16x512xf32>
      %22 = arith.mulf %21, %21 : vector<16x512xf32>
      %cst_16 = arith.constant dense<0.000000e+00> : vector<16xf32>
      %23 = vector.multi_reduction <add>, %22, %cst_16 [1] : vector<16x512xf32> to vector<16xf32>
      %24 = vector.shape_cast %23 : vector<16xf32> to vector<16x1xf32>
      %25 = math.rsqrt %24 : vector<16x1xf32>
      %26 = vector.broadcast %25 : vector<16x1xf32> to vector<16x512xf32>
      %27 = arith.mulf %21, %26 : vector<16x512xf32>
      %28 = arith.truncf %27 : vector<16x512xf32> to vector<16x512xbf16>
      %c0_17 = arith.constant 0 : index
      %c0_18 = arith.constant 0 : index
      %29 = vector.load %arg8[%c0_17, %c0_18] : memref<16x512xbf16, #tpu.memory_space<vmem>>, vector<16x512xbf16>
      tpu.vector_store %arg8[%c0_17, %c0_18], %28 {strides = array<i32>} : memref<16x512xbf16, #tpu.memory_space<vmem>>, vector<16x512xbf16>,
    } else {
    }
    %c0 = arith.constant 0 : index
    %c0_1 = arith.constant 0 : index
    %3 = vector.load %arg8[%c0, %c0_1] : memref<16x512xbf16, #tpu.memory_space<vmem>>, vector<16x512xbf16>
    %c0_2 = arith.constant 0 : index
    %c0_3 = arith.constant 0 : index
    %4 = vector.load %arg6[%c0_2, %c0_3] : memref<512x128xbf16, #tpu.memory_space<vmem>>, vector<512x128xbf16>
    %cst = arith.constant dense<0.000000e+00> : vector<16x128xf32>
    %5 = tpu.matmul %3, %4, %cst {dimension_numbers = #tpu.dot_dimension_numbers<[1], [0], [0], [1], [0, 0, 1, 1], [], []>} : vector<16x512xbf16>, vector<512x128xbf16>, vector<16x128xf32> -> vector<16x128xf32>
    %c0_4 = arith.constant 0 : index
    %c0_5 = arith.constant 0 : index
    %6 = vector.load %arg7[%c0_4, %c0_5] : memref<16x128xf32, #tpu.memory_space<vmem>>, vector<16x128xf32>
    tpu.vector_store %arg7[%c0_4, %c0_5], %5 {strides = array<i32>} : memref<16x128xf32, #tpu.memory_space<vmem>>, vector<16x128xf32>,
    return
  }
  func.func @transform_0(%arg0: i32, %arg1: i32) -> (i32, i32) {
    %c0_i32 = arith.constant 0 : i32
    %c0_i32_0 = arith.constant 0 : i32
    return %arg0, %c0_i32 : i32, i32
  }
  func.func @transform_1(%arg0: i32, %arg1: i32) -> (i32, i32) {
    %c0_i32 = arith.constant 0 : i32
    %c0_i32_0 = arith.constant 0 : i32
    %c0_i32_1 = arith.constant 0 : i32
    return %c0_i32, %c0_i32_0 : i32, i32
  }
  func.func @transform_2(%arg0: i32, %arg1: i32) -> (i32, i32) {
    %c0_i32 = arith.constant 0 : i32
    %c0_i32_0 = arith.constant 0 : i32
    %c0_i32_1 = arith.constant 0 : i32
    return %c0_i32, %c0_i32_0 : i32, i32
  }
  func.func @transform_3(%arg0: i32, %arg1: i32) -> (i32, i32) {
    %c0_i32 = arith.constant 0 : i32
    %c0_i32_0 = arith.constant 0 : i32
    return %arg0, %c0_i32 : i32, i32
  }
  func.func @transform_4(%arg0: i32, %arg1: i32) -> (i32, i32) {
    %c0_i32 = arith.constant 0 : i32
    %c0_i32_0 = arith.constant 0 : i32
    %c0_i32_1 = arith.constant 0 : i32
    return %c0_i32, %c0_i32_0 : i32, i32
  }
  func.func @transform_5(%arg0: i32, %arg1: i32) -> (i32, i32) {
    %c0_i32 = arith.constant 0 : i32
    return %arg0, %arg1 : i32, i32
  }
}

module attributes {stable_mosaic.version = 11 : i64} {
  func.func @kernel(%arg0: i32, %arg1: i32, %arg2: memref<16x1024xbf16, #tpu.memory_space<vmem>>, %arg3: memref<1024x512xbf16, #tpu.memory_space<vmem>>, %arg4: memref<1x512xf32, #tpu.memory_space<vmem>>, %arg5: memref<16x512xbf16, #tpu.memory_space<vmem>>, %arg6: memref<512x128xbf16, #tpu.memory_space<vmem>>, %arg7: memref<16x128xf32, #tpu.memory_space<vmem>>, %arg8: memref<16x512xbf16, #tpu.memory_space<vmem>>) attributes {dimension_semantics = [#tpu.dimension_semantics<parallel>, #tpu.dimension_semantics<arbitrary>], iteration_bounds = array<i64: 1, 1>, scalar_prefetch = 0 : i64, scratch_operands = 1 : i64, tpu.core_type = #tpu.core_type<tc>, window_params = [{transform_indices = @transform_0, window_bounds = array<i64: 16, 1024>}, {pipeline_mode = #tpu.pipeline_mode<synchronous>, transform_indices = @transform_1, window_bounds = array<i64: 1024, 512>}, {pipeline_mode = #tpu.pipeline_mode<synchronous>, transform_indices = @transform_2, window_bounds = array<i64: 1, 512>}, {transform_indices = @transform_3, window_bounds = array<i64: 16, 512>}, {pipeline_mode = #tpu.pipeline_mode<synchronous>, transform_indices = @transform_4, window_bounds = array<i64: 512, 128>}, {transform_indices = @transform_5, window_bounds = array<i64: 16, 128>}]} {
    %c0_i32 = arith.constant 0 : i32
    %0 = arith.cmpi eq, %arg1, %c0_i32 : i32
    %1 = arith.extui %0 : i1 to i32
    %c0_i32_0 = arith.constant 0 : i32
    %2 = arith.cmpi ne, %1, %c0_i32_0 : i32
    scf.if %2 {
      %c0_6 = arith.constant 0 : index
      %c0_7 = arith.constant 0 : index
      %7 = vector.load %arg2[%c0_6, %c0_7] : memref<16x1024xbf16, #tpu.memory_space<vmem>>, vector<16x1024xbf16>
      %c0_8 = arith.constant 0 : index
      %c0_9 = arith.constant 0 : index
      %8 = vector.load %arg3[%c0_8, %c0_9] : memref<1024x512xbf16, #tpu.memory_space<vmem>>, vector<1024x512xbf16>
      %cst_10 = arith.constant dense<0.000000e+00> : vector<16x512xf32>
      %9 = tpu.matmul %7, %8, %cst_10 {dimension_numbers = #tpu.dot_dimension_numbers<[1], [0], [0], [1], [0, 0, 1, 1], [], []>} : vector<16x1024xbf16>, vector<1024x512xbf16>, vector<16x512xf32> -> vector<16x512xf32>
      %c0_11 = arith.constant 0 : index
      %c0_12 = arith.constant 0 : index
      %10 = vector.load %arg4[%c0_11, %c0_12] : memref<1x512xf32, #tpu.memory_space<vmem>>, vector<1x512xf32>
      %11 = vector.broadcast %10 : vector<1x512xf32> to vector<16x512xf32>
      %12 = arith.addf %9, %11 : vector<16x512xf32>
      %13 = arith.mulf %12, %12 : vector<16x512xf32>
      %cst_13 = arith.constant dense<0.000000e+00> : vector<16xf32>
      %14 = vector.multi_reduction <add>, %13, %cst_13 [1] : vector<16x512xf32> to vector<16xf32>
      %15 = vector.shape_cast %14 : vector<16xf32> to vector<16x1xf32>
      %16 = math.rsqrt %15 : vector<16x1xf32>
      %17 = vector.broadcast %16 : vector<16x1xf32> to vector<16x512xf32>
      %18 = arith.mulf %12, %17 : vector<16x512xf32>
      %c0_14 = arith.constant 0 : index
      %c0_15 = arith.constant 0 : index
      %19 = vector.load %arg5[%c0_14, %c0_15] : memref<16x512xbf16, #tpu.memory_space<vmem>>, vector<16x512xbf16>
      %20 = arith.extf %19 : vector<16x512xbf16> to vector<16x512xf32>
      %21 = arith.subf %18, %20 : vector<16x512xf32>
      %22 = arith.mulf %21, %21 : vector<16x512xf32>
      %cst_16 = arith.constant dense<0.000000e+00> : vector<16xf32>
      %23 = vector.multi_reduction <add>, %22, %cst_16 [1] : vector<16x512xf32> to vector<16xf32>
      %24 = vector.shape_cast %23 : vector<16xf32> to vector<16x1xf32>
      %25 = math.rsqrt %24 : vector<16x1xf32>
      %26 = vector.broadcast %25 : vector<16x1xf32> to vector<16x512xf32>
      %27 = arith.mulf %21, %26 : vector<16x512xf32>
      %28 = arith.truncf %27 : vector<16x512xf32> to vector<16x512xbf16>
      %c0_17 = arith.constant 0 : index
      %c0_18 = arith.constant 0 : index
      %29 = vector.load %arg8[%c0_17, %c0_18] : memref<16x512xbf16, #tpu.memory_space<vmem>>, vector<16x512xbf16>
      tpu.vector_store %arg8[%c0_17, %c0_18], %28 {strides = array<i32>} : memref<16x512xbf16, #tpu.memory_space<vmem>>, vector<16x512xbf16>,
    } else {
    }
    %c0 = arith.constant 0 : index
    %c0_1 = arith.constant 0 : index
    %3 = vector.load %arg8[%c0, %c0_1] : memref<16x512xbf16, #tpu.memory_space<vmem>>, vector<16x512xbf16>
    %c0_2 = arith.constant 0 : index
    %c0_3 = arith.constant 0 : index
    %4 = vector.load %arg6[%c0_2, %c0_3] : memref<512x128xbf16, #tpu.memory_space<vmem>>, vector<512x128xbf16>
    %cst = arith.constant dense<0.000000e+00> : vector<16x128xf32>
    %5 = tpu.matmul %3, %4, %cst {dimension_numbers = #tpu.dot_dimension_numbers<[1], [0], [0], [1], [0, 0, 1, 1], [], []>} : vector<16x512xbf16>, vector<512x128xbf16>, vector<16x128xf32> -> vector<16x128xf32>
    %c0_4 = arith.constant 0 : index
    %c0_5 = arith.constant 0 : index
    %6 = vector.load %arg7[%c0_4, %c0_5] : memref<16x128xf32, #tpu.memory_space<vmem>>, vector<16x128xf32>
    tpu.vector_store %arg7[%c0_4, %c0_5], %5 {strides = array<i32>} : memref<16x128xf32, #tpu.memory_space<vmem>>, vector<16x128xf32>,
    return
  }
  func.func @transform_0(%arg0: i32, %arg1: i32) -> (i32, i32) {
    %c0_i32 = arith.constant 0 : i32
    %c0_i32_0 = arith.constant 0 : i32
    return %arg0, %c0_i32 : i32, i32
  }
  func.func @transform_1(%arg0: i32, %arg1: i32) -> (i32, i32) {
    %c0_i32 = arith.constant 0 : i32
    %c0_i32_0 = arith.constant 0 : i32
    %c0_i32_1 = arith.constant 0 : i32
    return %c0_i32, %c0_i32_0 : i32, i32
  }
  func.func @transform_2(%arg0: i32, %arg1: i32) -> (i32, i32) {
    %c0_i32 = arith.constant 0 : i32
    %c0_i32_0 = arith.constant 0 : i32
    %c0_i32_1 = arith.constant 0 : i32
    return %c0_i32, %c0_i32_0 : i32, i32
  }
  func.func @transform_3(%arg0: i32, %arg1: i32) -> (i32, i32) {
    %c0_i32 = arith.constant 0 : i32
    %c0_i32_0 = arith.constant 0 : i32
    return %arg0, %c0_i32 : i32, i32
  }
  func.func @transform_4(%arg0: i32, %arg1: i32) -> (i32, i32) {
    %c0_i32 = arith.constant 0 : i32
    %c0_i32_0 = arith.constant 0 : i32
    %c0_i32_1 = arith.constant 0 : i32
    return %c0_i32, %c0_i32_0 : i32, i32
  }
  func.func @transform_5(%arg0: i32, %arg1: i32) -> (i32, i32) {
    %c0_i32 = arith.constant 0 : i32
    return %arg0, %arg1 : i32, i32
  }
}

</mosaic_0001>

<llo_original>
// kernel: tpu_custom_call.1
$region0: #{tpu_custom_call.1}
  #allocation0 [shape = 'u32[]', space=smem, size = 0x4, offset = 0x4, fixed_abs, tag = 'smem constant byte address 0x4 - core index']
  #allocation1 [shape = 'u32[72,128]{1,0:T(1,128)}', space=vmem, size = 0x9000, scoped, tag = 'internal scratch']
  #allocation2 [shape = 'bf16[16,512]{1,0:T(8,128)(2,1)}', space=vmem, size = 0x4000, scoped, tag = 'scratch operand']
  %s0 = inlined_call_operand.hbm [shape: bf16[16,1024], index: 0, kind: input, shape index: {}]
  %s1 = inlined_call_operand.hbm [shape: bf16[1024,512], index: 1, kind: input, shape index: {}]
  %s2 = inlined_call_operand.hbm [shape: f32[1,512], index: 2, kind: input, shape index: {}]
  %s3 = inlined_call_operand.hbm [shape: bf16[16,512], index: 3, kind: input, shape index: {}]
  %s4 = inlined_call_operand.hbm [shape: bf16[512,128], index: 4, kind: input, shape index: {}]
  %s5 = inlined_call_operand.hbm [shape: f32[16,128], index: 5, kind: output, shape index: {}]
  %s6 = sld [smem:[#allocation0]]
  $region54: #{tpu_custom_call.1} parent=0
    _
  %s8 = ssub.s32 1, %s6
  %s9 = scalar_select 0, %s8, %s6
  $region1: #{tpu_custom_call.1} parent=0
    #allocation3 [shape = 'u8[32768]{0}', space=vmem, size = 0x8000, scoped, tag = 'input window, operand 0, single buffered']
    #allocation4 [shape = 's32[1]{0}', space=sflag, size = 0x4, scoped, tag = 'scoped memory for tpu_custom_call.1']
    #allocation5 [shape = 's32[1]{0}', space=sflag, size = 0x4, scoped, tag = 'scoped memory for tpu_custom_call.1']
    #allocation6 [shape = 'u8[1048576]{0}', space=vmem, size = 0x100000, scoped, tag = 'input window, operand 1, single buffered']
    #allocation7 [shape = 's32[1]{0}', space=sflag, size = 0x4, scoped, tag = 'scoped memory for tpu_custom_call.1']
    #allocation8 [shape = 'u8[2048]{0}', space=vmem, size = 0x800, scoped, tag = 'input window, operand 2, single buffered']
    #allocation9 [shape = 'u8[16384]{0}', space=vmem, size = 0x4000, scoped, tag = 'input window, operand 3, single buffered']
    #allocation10 [shape = 's32[1]{0}', space=sflag, size = 0x4, scoped, tag = 'scoped memory for tpu_custom_call.1']
    #allocation11 [shape = 'u8[131072]{0}', space=vmem, size = 0x20000, scoped, tag = 'input window, operand 4, single buffered']
    #allocation12 [shape = 'u8[8192]{0}', space=vmem, size = 0x2000, scoped, tag = 'output window, operand 0, single buffered']
    %10 = vsyncpa [#allocation4], 0
    %11 = vsyncpa [#allocation7], 0
    %12 = vsyncpa [#allocation10], 0
    %13 = vsyncpa [#allocation5], 0
    // Predicated region
    $region2: #{tpu_custom_call.1} parent=1 // pred_check
      _
    $region3: #{tpu_custom_call.1} parent=1 // pred_check_branch
      %15 = sbr.rel (0) target = $region5
    $region4: #{tpu_custom_call.1} parent=1 // pred_region
      %17 = vsyncadd [#allocation4], 0
      %s18 = sshll.u32 %s0, 4
      %s19 = int_to_ptr.hbm [resolvable:$true] %s18
      %s20 = sshll.u32 [#allocation3], 4
      %s21 = int_to_ptr.vmem [resolvable:$true] %s20
      %26 = dma.hbm_to_vmem [thread:$0]  %s19, 1024, %s21, [#allocation4], 512, 512, 32
    $region5: #{tpu_custom_call.1} parent=1 // pred_fallthru
      _
    // Predicated region
    $region6: #{tpu_custom_call.1} parent=1 // pred_check
      _
    $region7: #{tpu_custom_call.1} parent=1 // pred_check_branch
      %28 = sbr.rel (0) target = $region9
    $region8: #{tpu_custom_call.1} parent=1 // pred_region
      %30 = vsyncadd [#allocation7], 0
      %s31 = sshll.u32 %s1, 4
      %s32 = int_to_ptr.hbm [resolvable:$true] %s31
      %s33 = sshll.u32 [#allocation6], 4
      %s34 = int_to_ptr.vmem [resolvable:$true] %s33
      %39 = dma.hbm_to_vmem [thread:$0]  %s32, 32768, %s34, [#allocation7], 256, 256, 16
    $region9: #{tpu_custom_call.1} parent=1 // pred_fallthru
      _
    // Predicated region
    $region10: #{tpu_custom_call.1} parent=1 // pred_check
      _
    $region11: #{tpu_custom_call.1} parent=1 // pred_check_branch
      %41 = sbr.rel (0) target = $region13
    $region12: #{tpu_custom_call.1} parent=1 // pred_region
      %43 = vsyncadd [#allocation7], 0
      %s45 = sshll.u32 %s2, 4
      %s46 = int_to_ptr.hbm [resolvable:$true] %s45
      %s47 = sshll.u32 [#allocation8], 4
      %s48 = int_to_ptr.vmem [resolvable:$true] %s47
      %50 = dma.hbm_to_vmem [thread:$0]  %s46, 64, %s48, [#allocation7]
    $region13: #{tpu_custom_call.1} parent=1 // pred_fallthru
      _
    // Predicated region
    $region14: #{tpu_custom_call.1} parent=1 // pred_check
      _
    $region15: #{tpu_custom_call.1} parent=1 // pred_check_branch
      %52 = sbr.rel (0) target = $region17
    $region16: #{tpu_custom_call.1} parent=1 // pred_region
      %54 = vsyncadd [#allocation10], 0
      %s55 = sshll.u32 %s3, 4
      %s56 = int_to_ptr.hbm [resolvable:$true] %s55
      %s57 = sshll.u32 [#allocation9], 4
      %s58 = int_to_ptr.vmem [resolvable:$true] %s57
      %63 = dma.hbm_to_vmem [thread:$0]  %s56, 512, %s58, [#allocation10], 256, 256, 16
    $region17: #{tpu_custom_call.1} parent=1 // pred_fallthru
      _
    // Predicated region
    $region18: #{tpu_custom_call.1} parent=1 // pred_check
      _
    $region19: #{tpu_custom_call.1} parent=1 // pred_check_branch
      %65 = sbr.rel (0) target = $region21
    $region20: #{tpu_custom_call.1} parent=1 // pred_region
      %67 = vsyncadd [#allocation10], 0
      %s68 = sshll.u32 %s4, 4
      %s69 = int_to_ptr.hbm [resolvable:$true] %s68
      %s70 = sshll.u32 [#allocation11], 4
      %s71 = int_to_ptr.vmem [resolvable:$true] %s70
      %76 = dma.hbm_to_vmem [thread:$0]  %s69, 4096, %s71, [#allocation10], 64, 64, 4
    $region21: #{tpu_custom_call.1} parent=1 // pred_fallthru
      _
    // Predicated region
    $region22: #{tpu_custom_call.1} parent=1 // pred_check
      _
    $region23: #{tpu_custom_call.1} parent=1 // pred_check_branch
      %78 = sbr.rel (0) target = $region25
    $region24: #{tpu_custom_call.1} parent=1 // pred_region
      %80 = dma.done [#allocation4], 1024
    $region25: #{tpu_custom_call.1} parent=1 // pred_fallthru
      _
    // Predicated region
    $region26: #{tpu_custom_call.1} parent=1 // pred_check
      _
    $region27: #{tpu_custom_call.1} parent=1 // pred_check_branch
      %82 = sbr.rel (0) target = $region29
    $region28: #{tpu_custom_call.1} parent=1 // pred_region
      %84 = dma.done [#allocation7], 32768
    $region29: #{tpu_custom_call.1} parent=1 // pred_fallthru
      _
    // Predicated region
    $region30: #{tpu_custom_call.1} parent=1 // pred_check
      _
    $region31: #{tpu_custom_call.1} parent=1 // pred_check_branch
      %86 = sbr.rel (0) target = $region33
    $region32: #{tpu_custom_call.1} parent=1 // pred_region
      %88 = dma.done [#allocation7], 64
    $region33: #{tpu_custom_call.1} parent=1 // pred_fallthru
      _
    // Predicated region
    $region34: #{tpu_custom_call.1} parent=1 // pred_check
      _
    $region35: #{tpu_custom_call.1} parent=1 // pred_check_branch
      %90 = sbr.rel (0) target = $region37
    $region36: #{tpu_custom_call.1} parent=1 // pred_region
      %92 = dma.done [#allocation10], 512
    $region37: #{tpu_custom_call.1} parent=1 // pred_fallthru
      _
    // Predicated region
    $region38: #{tpu_custom_call.1} parent=1 // pred_check
      _
    $region39: #{tpu_custom_call.1} parent=1 // pred_check_branch
      %94 = sbr.rel (0) target = $region41
    $region40: #{tpu_custom_call.1} parent=1 // pred_region
      %96 = dma.done [#allocation10], 4096
    $region41: #{tpu_custom_call.1} parent=1 // pred_fallthru
      _
    %p97 = scmp.eq.s32.totalorder 0, 0
    // Predicated region
    $region42: #{tpu_custom_call.1} parent=1 // pred_check
      %p98 = pneg %p97
    $region43: #{tpu_custom_call.1} parent=1 // pred_check_branch
      %100 = sbr.rel (%p98) target = $region45
    $region44: #{tpu_custom_call.1} parent=1 // pred_region
      %v101 = vld [vmem:[#allocation3] sm:$0xff]
      %v102 = vld [vmem:[#allocation3 + $0x8] sm:$0xff]
      %v103 = vld [vmem:[#allocation3 + $0x10] sm:$0xff]
      %v104 = vld [vmem:[#allocation3 + $0x18] sm:$0xff]
      %v105 = vld [vmem:[#allocation3 + $0x20] sm:$0xff]
      %v106 = vld [vmem:[#allocation3 + $0x28] sm:$0xff]
      %v107 = vld [vmem:[#allocation3 + $0x30] sm:$0xff]
      %v108 = vld [vmem:[#allocation3 + $0x38] sm:$0xff]
      %v109 = vld [vmem:[#allocation6] sm:$0xff]
      %v110 = vld [vmem:[#allocation6 + $0x8] sm:$0xff]
      %v111 = vld [vmem:[#allocation6 + $0x10] sm:$0xff]
      %v112 = vld [vmem:[#allocation6 + $0x18] sm:$0xff]
      %v113 = vld [vmem:[#allocation6 + $0x20] sm:$0xff]
      %v114 = vld [vmem:[#allocation6 + $0x28] sm:$0xff]
      %v115 = vld [vmem:[#allocation6 + $0x30] sm:$0xff]
      %v116 = vld [vmem:[#allocation6 + $0x38] sm:$0xff]
      %v117 = vld [vmem:[#allocation6 + $0x40] sm:$0xff]
      %v118 = vld [vmem:[#allocation6 + $0x48] sm:$0xff]
      %v119 = vld [vmem:[#allocation6 + $0x50] sm:$0xff]
      %v120 = vld [vmem:[#allocation6 + $0x58] sm:$0xff]
      %v121 = vld [vmem:[#allocation6 + $0x60] sm:$0xff]
      %v122 = vld [vmem:[#allocation6 + $0x68] sm:$0xff]
      %v123 = vld [vmem:[#allocation6 + $0x70] sm:$0xff]
      %v124 = vld [vmem:[#allocation6 + $0x78] sm:$0xff]
      %v125 = vld [vmem:[#allocation6 + $0x80] sm:$0xff]
      %v126 = vld [vmem:[#allocation6 + $0x88] sm:$0xff]
      %v127 = vld [vmem:[#allocation6 + $0x90] sm:$0xff]
      %v128 = vld [vmem:[#allocation6 + $0x98] sm:$0xff]
      %v129 = vld [vmem:[#allocation6 + $0xa0] sm:$0xff]
      %v130 = vld [vmem:[#allocation6 + $0xa8] sm:$0xff]
      %v131 = vld [vmem:[#allocation6 + $0xb0] sm:$0xff]
      %v132 = vld [vmem:[#allocation6 + $0xb8] sm:$0xff]
      %v133 = vld [vmem:[#allocation6 + $0xc0] sm:$0xff]
      %v134 = vld [vmem:[#allocation6 + $0xc8] sm:$0xff]
      %v135 = vld [vmem:[#allocation6 + $0xd0] sm:$0xff]
      %v136 = vld [vmem:[#allocation6 + $0xd8] sm:$0xff]
      %v137 = vld [vmem:[#allocation6 + $0xe0] sm:$0xff]
      %v138 = vld [vmem:[#allocation6 + $0xe8] sm:$0xff]
      %v139 = vld [vmem:[#allocation6 + $0xf0] sm:$0xff]
      %v140 = vld [vmem:[#allocation6 + $0xf8] sm:$0xff]
      %v141 = vld [vmem:[#allocation6 + $0x100] sm:$0xff]
      %v142 = vld [vmem:[#allocation6 + $0x108] sm:$0xff]
      %v143 = vld [vmem:[#allocation6 + $0x110] sm:$0xff]
      %v144 = vld [vmem:[#allocation6 + $0x118] sm:$0xff]
      %v145 = vld [vmem:[#allocation6 + $0x120] sm:$0xff]
      %v146 = vld [vmem:[#allocation6 + $0x128] sm:$0xff]
      %v147 = vld [vmem:[#allocation6 + $0x130] sm:$0xff]
      %v148 = vld [vmem:[#allocation6 + $0x138] sm:$0xff]
      %v149 = vld [vmem:[#allocation6 + $0x140] sm:$0xff]
      %v150 = vld [vmem:[#allocation6 + $0x148] sm:$0xff]
      %v151 = vld [vmem:[#allocation6 + $0x150] sm:$0xff]
      %v152 = vld [vmem:[#allocation6 + $0x158] sm:$0xff]
      %v153 = vld [vmem:[#allocation6 + $0x160] sm:$0xff]
      %v154 = vld [vmem:[#allocation6 + $0x168] sm:$0xff]
      %v155 = vld [vmem:[#allocation6 + $0x170] sm:$0xff]
      %v156 = vld [vmem:[#allocation6 + $0x178] sm:$0xff]
      %v157 = vld [vmem:[#allocation6 + $0x180] sm:$0xff]
      %v158 = vld [vmem:[#allocation6 + $0x188] sm:$0xff]
      %v159 = vld [vmem:[#allocation6 + $0x190] sm:$0xff]
      %v160 = vld [vmem:[#allocation6 + $0x198] sm:$0xff]
      %v161 = vld [vmem:[#allocation6 + $0x1a0] sm:$0xff]
      %v162 = vld [vmem:[#allocation6 + $0x1a8] sm:$0xff]
      %v163 = vld [vmem:[#allocation6 + $0x1b0] sm:$0xff]
      %v164 = vld [vmem:[#allocation6 + $0x1b8] sm:$0xff]
      %v165 = vld [vmem:[#allocation6 + $0x1c0] sm:$0xff]
      %v166 = vld [vmem:[#allocation6 + $0x1c8] sm:$0xff]
      %v167 = vld [vmem:[#allocation6 + $0x1d0] sm:$0xff]
      %v168 = vld [vmem:[#allocation6 + $0x1d8] sm:$0xff]
      %v169 = vld [vmem:[#allocation6 + $0x1e0] sm:$0xff]
      %v170 = vld [vmem:[#allocation6 + $0x1e8] sm:$0xff]
      %v171 = vld [vmem:[#allocation6 + $0x1f0] sm:$0xff]
      %v172 = vld [vmem:[#allocation6 + $0x1f8] sm:$0xff]
      %v173 = vld [vmem:[#allocation6 + $0x200] sm:$0xff]
      %v174 = vld [vmem:[#allocation6 + $0x208] sm:$0xff]
      %v175 = vld [vmem:[#allocation6 + $0x210] sm:$0xff]
      %v176 = vld [vmem:[#allocation6 + $0x218] sm:$0xff]
      %v177 = vld [vmem:[#allocation6 + $0x220] sm:$0xff]
      %v178 = vld [vmem:[#allocation6 + $0x228] sm:$0xff]
      %v179 = vld [vmem:[#allocation6 + $0x230] sm:$0xff]
      %v180 = vld [vmem:[#allocation6 + $0x238] sm:$0xff]
      %v181 = vld [vmem:[#allocation6 + $0x240] sm:$0xff]
      %v182 = vld [vmem:[#allocation6 + $0x248] sm:$0xff]
      %v183 = vld [vmem:[#allocation6 + $0x250] sm:$0xff]
      %v184 = vld [vmem:[#allocation6 + $0x258] sm:$0xff]
      %v185 = vld [vmem:[#allocation6 + $0x260] sm:$0xff]
      %v186 = vld [vmem:[#allocation6 + $0x268] sm:$0xff]
      %v187 = vld [vmem:[#allocation6 + $0x270] sm:$0xff]
      %v188 = vld [vmem:[#allocation6 + $0x278] sm:$0xff]
      %v189 = vld [vmem:[#allocation6 + $0x280] sm:$0xff]
      %v190 = vld [vmem:[#allocation6 + $0x288] sm:$0xff]
      %v191 = vld [vmem:[#allocation6 + $0x290] sm:$0xff]
      %v192 = vld [vmem:[#allocation6 + $0x298] sm:$0xff]
      %v193 = vld [vmem:[#allocation6 + $0x2a0] sm:$0xff]
      %v194 = vld [vmem:[#allocation6 + $0x2a8] sm:$0xff]
      %v195 = vld [vmem:[#allocation6 + $0x2b0] sm:$0xff]
      %v196 = vld [vmem:[#allocation6 + $0x2b8] sm:$0xff]
      %v197 = vld [vmem:[#allocation6 + $0x2c0] sm:$0xff]
      %v198 = vld [vmem:[#allocation6 + $0x2c8] sm:$0xff]
      %v199 = vld [vmem:[#allocation6 + $0x2d0] sm:$0xff]
      %v200 = vld [vmem:[#allocation6 + $0x2d8] sm:$0xff]
      %v201 = vld [vmem:[#allocation6 + $0x2e0] sm:$0xff]
      %v202 = vld [vmem:[#allocation6 + $0x2e8] sm:$0xff]
      %v203 = vld [vmem:[#allocation6 + $0x2f0] sm:$0xff]
      %v204 = vld [vmem:[#allocation6 + $0x2f8] sm:$0xff]
      %v205 = vld [vmem:[#allocation6 + $0x300] sm:$0xff]
      %v206 = vld [vmem:[#allocation6 + $0x308] sm:$0xff]
      %v207 = vld [vmem:[#allocation6 + $0x310] sm:$0xff]
      %v208 = vld [vmem:[#allocation6 + $0x318] sm:$0xff]
      %v209 = vld [vmem:[#allocation6 + $0x320] sm:$0xff]
      %v210 = vld [vmem:[#allocation6 + $0x328] sm:$0xff]
      %v211 = vld [vmem:[#allocation6 + $0x330] sm:$0xff]
      %v212 = vld [vmem:[#allocation6 + $0x338] sm:$0xff]
      %v213 = vld [vmem:[#allocation6 + $0x340] sm:$0xff]
      %v214 = vld [vmem:[#allocation6 + $0x348] sm:$0xff]
      %v215 = vld [vmem:[#allocation6 + $0x350] sm:$0xff]
      %v216 = vld [vmem:[#allocation6 + $0x358] sm:$0xff]
      %v217 = vld [vmem:[#allocation6 + $0x360] sm:$0xff]
      %v218 = vld [vmem:[#allocation6 + $0x368] sm:$0xff]
      %v219 = vld [vmem:[#allocation6 + $0x370] sm:$0xff]
      %v220 = vld [vmem:[#allocation6 + $0x378] sm:$0xff]
      %v221 = vld [vmem:[#allocation6 + $0x380] sm:$0xff]
      %v222 = vld [vmem:[#allocation6 + $0x388] sm:$0xff]
      %v223 = vld [vmem:[#allocation6 + $0x390] sm:$0xff]
      %v224 = vld [vmem:[#allocation6 + $0x398] sm:$0xff]
      %v225 = vld [vmem:[#allocation6 + $0x3a0] sm:$0xff]
      %v226 = vld [vmem:[#allocation6 + $0x3a8] sm:$0xff]
      %v227 = vld [vmem:[#allocation6 + $0x3b0] sm:$0xff]
      %v228 = vld [vmem:[#allocation6 + $0x3b8] sm:$0xff]
      %v229 = vld [vmem:[#allocation6 + $0x3c0] sm:$0xff]
      %v230 = vld [vmem:[#allocation6 + $0x3c8] sm:$0xff]
      %v231 = vld [vmem:[#allocation6 + $0x3d0] sm:$0xff]
      %v232 = vld [vmem:[#allocation6 + $0x3d8] sm:$0xff]
      %v233 = vld [vmem:[#allocation6 + $0x3e0] sm:$0xff]
      %v234 = vld [vmem:[#allocation6 + $0x3e8] sm:$0xff]
      %v235 = vld [vmem:[#allocation6 + $0x3f0] sm:$0xff]
      %v236 = vld [vmem:[#allocation6 + $0x3f8] sm:$0xff]
      %v237 = vld [vmem:[#allocation6 + $0x400] sm:$0xff]
      %v238 = vld [vmem:[#allocation6 + $0x408] sm:$0xff]
      %v239 = vld [vmem:[#allocation6 + $0x410] sm:$0xff]
      %v240 = vld [vmem:[#allocation6 + $0x418] sm:$0xff]
      %v241 = vld [vmem:[#allocation6 + $0x420] sm:$0xff]
      %v242 = vld [vmem:[#allocation6 + $0x428] sm:$0xff]
      %v243 = vld [vmem:[#allocation6 + $0x430] sm:$0xff]
      %v244 = vld [vmem:[#allocation6 + $0x438] sm:$0xff]
      %v245 = vld [vmem:[#allocation6 + $0x440] sm:$0xff]
      %v246 = vld [vmem:[#allocation6 + $0x448] sm:$0xff]
      %v247 = vld [vmem:[#allocation6 + $0x450] sm:$0xff]
      %v248 = vld [vmem:[#allocation6 + $0x458] sm:$0xff]
      %v249 = vld [vmem:[#allocation6 + $0x460] sm:$0xff]
      %v250 = vld [vmem:[#allocation6 + $0x468] sm:$0xff]
      %v251 = vld [vmem:[#allocation6 + $0x470] sm:$0xff]
      %v252 = vld [vmem:[#allocation6 + $0x478] sm:$0xff]
      %v253 = vld [vmem:[#allocation6 + $0x480] sm:$0xff]
      %v254 = vld [vmem:[#allocation6 + $0x488] sm:$0xff]
      %v255 = vld [vmem:[#allocation6 + $0x490] sm:$0xff]
      %v256 = vld [vmem:[#allocation6 + $0x498] sm:$0xff]
      %v257 = vld [vmem:[#allocation6 + $0x4a0] sm:$0xff]
      %v258 = vld [vmem:[#allocation6 + $0x4a8] sm:$0xff]
      %v259 = vld [vmem:[#allocation6 + $0x4b0] sm:$0xff]
      %v260 = vld [vmem:[#allocation6 + $0x4b8] sm:$0xff]
      %v261 = vld [vmem:[#allocation6 + $0x4c0] sm:$0xff]
      %v262 = vld [vmem:[#allocation6 + $0x4c8] sm:$0xff]
      %v263 = vld [vmem:[#allocation6 + $0x4d0] sm:$0xff]
      %v264 = vld [vmem:[#allocation6 + $0x4d8] sm:$0xff]
      %v265 = vld [vmem:[#allocation6 + $0x4e0] sm:$0xff]
      %v266 = vld [vmem:[#allocation6 + $0x4e8] sm:$0xff]
      %v267 = vld [vmem:[#allocation6 + $0x4f0] sm:$0xff]
      %v268 = vld [vmem:[#allocation6 + $0x4f8] sm:$0xff]
      %v269 = vld [vmem:[#allocation6 + $0x500] sm:$0xff]
      %v270 = vld [vmem:[#allocation6 + $0x508] sm:$0xff]
      %v271 = vld [vmem:[#allocation6 + $0x510] sm:$0xff]
      %v272 = vld [vmem:[#allocation6 + $0x518] sm:$0xff]
      %v273 = vld [vmem:[#allocation6 + $0x520] sm:$0xff]
      %v274 = vld [vmem:[#allocation6 + $0x528] sm:$0xff]
      %v275 = vld [vmem:[#allocation6 + $0x530] sm:$0xff]
      %v276 = vld [vmem:[#allocation6 + $0x538] sm:$0xff]
      %v277 = vld [vmem:[#allocation6 + $0x540] sm:$0xff]
      %v278 = vld [vmem:[#allocation6 + $0x548] sm:$0xff]
      %v279 = vld [vmem:[#allocation6 + $0x550] sm:$0xff]
      %v280 = vld [vmem:[#allocation6 + $0x558] sm:$0xff]
      %v281 = vld [vmem:[#allocation6 + $0x560] sm:$0xff]
      %v282 = vld [vmem:[#allocation6 + $0x568] sm:$0xff]
      %v283 = vld [vmem:[#allocation6 + $0x570] sm:$0xff]
      %v284 = vld [vmem:[#allocation6 + $0x578] sm:$0xff]
      %v285 = vld [vmem:[#allocation6 + $0x580] sm:$0xff]
      %v286 = vld [vmem:[#allocation6 + $0x588] sm:$0xff]
      %v287 = vld [vmem:[#allocation6 + $0x590] sm:$0xff]
      %v288 = vld [vmem:[#allocation6 + $0x598] sm:$0xff]
      %v289 = vld [vmem:[#allocation6 + $0x5a0] sm:$0xff]
      %v290 = vld [vmem:[#allocation6 + $0x5a8] sm:$0xff]
      %v291 = vld [vmem:[#allocation6 + $0x5b0] sm:$0xff]
      %v292 = vld [vmem:[#allocation6 + $0x5b8] sm:$0xff]
      %v293 = vld [vmem:[#allocation6 + $0x5c0] sm:$0xff]
      %v294 = vld [vmem:[#allocation6 + $0x5c8] sm:$0xff]
      %v295 = vld [vmem:[#allocation6 + $0x5d0] sm:$0xff]
      %v296 = vld [vmem:[#allocation6 + $0x5d8] sm:$0xff]
      %v297 = vld [vmem:[#allocation6 + $0x5e0] sm:$0xff]
      %v298 = vld [vmem:[#allocation6 + $0x5e8] sm:$0xff]
      %v299 = vld [vmem:[#allocation6 + $0x5f0] sm:$0xff]
      %v300 = vld [vmem:[#allocation6 + $0x5f8] sm:$0xff]
      %v301 = vld [vmem:[#allocation6 + $0x600] sm:$0xff]
      %v302 = vld [vmem:[#allocation6 + $0x608] sm:$0xff]
      %v303 = vld [vmem:[#allocation6 + $0x610] sm:$0xff]
      %v304 = vld [vmem:[#allocation6 + $0x618] sm:$0xff]
      %v305 = vld [vmem:[#allocation6 + $0x620] sm:$0xff]
      %v306 = vld [vmem:[#allocation6 + $0x628] sm:$0xff]
      %v307 = vld [vmem:[#allocation6 + $0x630] sm:$0xff]
      %v308 = vld [vmem:[#allocation6 + $0x638] sm:$0xff]
      %v309 = vld [vmem:[#allocation6 + $0x640] sm:$0xff]
      %v310 = vld [vmem:[#allocation6 + $0x648] sm:$0xff]
      %v311 = vld [vmem:[#allocation6 + $0x650] sm:$0xff]
      %v312 = vld [vmem:[#allocation6 + $0x658] sm:$0xff]
      %v313 = vld [vmem:[#allocation6 + $0x660] sm:$0xff]
      %v314 = vld [vmem:[#allocation6 + $0x668] sm:$0xff]
      %v315 = vld [vmem:[#allocation6 + $0x670] sm:$0xff]
      %v316 = vld [vmem:[#allocation6 + $0x678] sm:$0xff]
      %v317 = vld [vmem:[#allocation6 + $0x680] sm:$0xff]
      %v318 = vld [vmem:[#allocation6 + $0x688] sm:$0xff]
      %v319 = vld [vmem:[#allocation6 + $0x690] sm:$0xff]
      %v320 = vld [vmem:[#allocation6 + $0x698] sm:$0xff]
      %v321 = vld [vmem:[#allocation6 + $0x6a0] sm:$0xff]
      %v322 = vld [vmem:[#allocation6 + $0x6a8] sm:$0xff]
      %v323 = vld [vmem:[#allocation6 + $0x6b0] sm:$0xff]
      %v324 = vld [vmem:[#allocation6 + $0x6b8] sm:$0xff]
      %v325 = vld [vmem:[#allocation6 + $0x6c0] sm:$0xff]
      %v326 = vld [vmem:[#allocation6 + $0x6c8] sm:$0xff]
      %v327 = vld [vmem:[#allocation6 + $0x6d0] sm:$0xff]
      %v328 = vld [vmem:[#allocation6 + $0x6d8] sm:$0xff]
      %v329 = vld [vmem:[#allocation6 + $0x6e0] sm:$0xff]
      %v330 = vld [vmem:[#allocation6 + $0x6e8] sm:$0xff]
      %v331 = vld [vmem:[#allocation6 + $0x6f0] sm:$0xff]
      %v332 = vld [vmem:[#allocation6 + $0x6f8] sm:$0xff]
      %v333 = vld [vmem:[#allocation6 + $0x700] sm:$0xff]
      %v334 = vld [vmem:[#allocation6 + $0x708] sm:$0xff]
      %v335 = vld [vmem:[#allocation6 + $0x710] sm:$0xff]
      %v336 = vld [vmem:[#allocation6 + $0x718] sm:$0xff]
      %v337 = vld [vmem:[#allocation6 + $0x720] sm:$0xff]
      %v338 = vld [vmem:[#allocation6 + $0x728] sm:$0xff]
      %v339 = vld [vmem:[#allocation6 + $0x730] sm:$0xff]
      %v340 = vld [vmem:[#allocation6 + $0x738] sm:$0xff]
      %v341 = vld [vmem:[#allocation6 + $0x740] sm:$0xff]
      %v342 = vld [vmem:[#allocation6 + $0x748] sm:$0xff]
      %v343 = vld [vmem:[#allocation6 + $0x750] sm:$0xff]
      %v344 = vld [vmem:[#allocation6 + $0x758] sm:$0xff]
      %v345 = vld [vmem:[#allocation6 + $0x760] sm:$0xff]
      %v346 = vld [vmem:[#allocation6 + $0x768] sm:$0xff]
      %v347 = vld [vmem:[#allocation6 + $0x770] sm:$0xff]
      %v348 = vld [vmem:[#allocation6 + $0x778] sm:$0xff]
      %v349 = vld [vmem:[#allocation6 + $0x780] sm:$0xff]
      %v350 = vld [vmem:[#allocation6 + $0x788] sm:$0xff]
      %v351 = vld [vmem:[#allocation6 + $0x790] sm:$0xff]
      %v352 = vld [vmem:[#allocation6 + $0x798] sm:$0xff]
      %v353 = vld [vmem:[#allocation6 + $0x7a0] sm:$0xff]
      %v354 = vld [vmem:[#allocation6 + $0x7a8] sm:$0xff]
      %v355 = vld [vmem:[#allocation6 + $0x7b0] sm:$0xff]
      %v356 = vld [vmem:[#allocation6 + $0x7b8] sm:$0xff]
      %v357 = vld [vmem:[#allocation6 + $0x7c0] sm:$0xff]
      %v358 = vld [vmem:[#allocation6 + $0x7c8] sm:$0xff]
      %v359 = vld [vmem:[#allocation6 + $0x7d0] sm:$0xff]
      %v360 = vld [vmem:[#allocation6 + $0x7d8] sm:$0xff]
      %v361 = vld [vmem:[#allocation6 + $0x7e0] sm:$0xff]
      %v362 = vld [vmem:[#allocation6 + $0x7e8] sm:$0xff]
      %v363 = vld [vmem:[#allocation6 + $0x7f0] sm:$0xff]
      %v364 = vld [vmem:[#allocation6 + $0x7f8] sm:$0xff]
      %v365 = vld [vmem:[#allocation8] sm:$0xf]
      %v367 = vperm.slane %v365, 0
      %v368 = vperm.slane %v365, 1
      %v369 = vperm.slane %v365, 2
      %v370 = vperm.slane %v365, 3
      %v383 = vunpack.c.l.b16 %v101
      %v384 = vunpack.c.h.b16 %v101
      %v385 = vunpack.c.l.b16 %v102
      %v386 = vunpack.c.h.b16 %v102
      %v387 = vunpack.c.l.b16 %v103
      %v388 = vunpack.c.h.b16 %v103
      %v389 = vunpack.c.l.b16 %v104
      %v390 = vunpack.c.h.b16 %v104
      %v391 = vunpack.c.l.b16 %v105
      %v392 = vunpack.c.h.b16 %v105
      %v393 = vunpack.c.l.b16 %v106
      %v394 = vunpack.c.h.b16 %v106
      %v395 = vunpack.c.l.b16 %v107
      %v396 = vunpack.c.h.b16 %v107
      %v397 = vunpack.c.l.b16 %v108
      %v398 = vunpack.c.h.b16 %v108
      %v399 = vpack.c.b16 %v391, %v383
      %v400 = vpack.c.b16 %v392, %v384
      %v401 = vpack.c.b16 %v393, %v385
      %v402 = vpack.c.b16 %v394, %v386
      %v403 = vpack.c.b16 %v395, %v387
      %v404 = vpack.c.b16 %v396, %v388
      %v405 = vpack.c.b16 %v397, %v389
      %v406 = vpack.c.b16 %v398, %v390
      %v671 = vunpack.c.l.b16 %v109
      %v672 = vunpack.c.h.b16 %v109
      %v673 = vunpack.c.l.b16 %v110
      %v674 = vunpack.c.h.b16 %v110
      %v675 = vunpack.c.l.b16 %v111
      %v676 = vunpack.c.h.b16 %v111
      %v677 = vunpack.c.l.b16 %v112
      %v678 = vunpack.c.h.b16 %v112
      %v679 = vunpack.c.l.b16 %v113
      %v680 = vunpack.c.h.b16 %v113
      %v681 = vunpack.c.l.b16 %v114
      %v682 = vunpack.c.h.b16 %v114
      %v683 = vunpack.c.l.b16 %v115
      %v684 = vunpack.c.h.b16 %v115
      %v685 = vunpack.c.l.b16 %v116
      %v686 = vunpack.c.h.b16 %v116
      %v687 = vunpack.c.l.b16 %v117
      %v688 = vunpack.c.h.b16 %v117
      %v689 = vunpack.c.l.b16 %v118
      %v690 = vunpack.c.h.b16 %v118
      %v691 = vunpack.c.l.b16 %v119
      %v692 = vunpack.c.h.b16 %v119
      %v693 = vunpack.c.l.b16 %v120
      %v694 = vunpack.c.h.b16 %v120
      %v695 = vunpack.c.l.b16 %v121
      %v696 = vunpack.c.h.b16 %v121
      %v697 = vunpack.c.l.b16 %v122
      %v698 = vunpack.c.h.b16 %v122
      %v699 = vunpack.c.l.b16 %v123
      %v700 = vunpack.c.h.b16 %v123
      %v701 = vunpack.c.l.b16 %v124
      %v702 = vunpack.c.h.b16 %v124
      %v703 = vunpack.c.l.b16 %v125
      %v704 = vunpack.c.h.b16 %v125
      %v705 = vunpack.c.l.b16 %v126
      %v706 = vunpack.c.h.b16 %v126
      %v707 = vunpack.c.l.b16 %v127
      %v708 = vunpack.c.h.b16 %v127
      %v709 = vunpack.c.l.b16 %v128
      %v710 = vunpack.c.h.b16 %v128
      %v711 = vunpack.c.l.b16 %v129
      %v712 = vunpack.c.h.b16 %v129
      %v713 = vunpack.c.l.b16 %v130
      %v714 = vunpack.c.h.b16 %v130
      %v715 = vunpack.c.l.b16 %v131
      %v716 = vunpack.c.h.b16 %v131
      %v717 = vunpack.c.l.b16 %v132
      %v718 = vunpack.c.h.b16 %v132
      %v719 = vunpack.c.l.b16 %v133
      %v720 = vunpack.c.h.b16 %v133
      %v721 = vunpack.c.l.b16 %v134
      %v722 = vunpack.c.h.b16 %v134
      %v723 = vunpack.c.l.b16 %v135
      %v724 = vunpack.c.h.b16 %v135
      %v725 = vunpack.c.l.b16 %v136
      %v726 = vunpack.c.h.b16 %v136
      %v727 = vunpack.c.l.b16 %v137
      %v728 = vunpack.c.h.b16 %v137
      %v729 = vunpack.c.l.b16 %v138
      %v730 = vunpack.c.h.b16 %v138
      %v731 = vunpack.c.l.b16 %v139
      %v732 = vunpack.c.h.b16 %v139
      %v733 = vunpack.c.l.b16 %v140
      %v734 = vunpack.c.h.b16 %v140
      %v735 = vunpack.c.l.b16 %v141
      %v736 = vunpack.c.h.b16 %v141
      %v737 = vunpack.c.l.b16 %v142
      %v738 = vunpack.c.h.b16 %v142
      %v739 = vunpack.c.l.b16 %v143
      %v740 = vunpack.c.h.b16 %v143
      %v741 = vunpack.c.l.b16 %v144
      %v742 = vunpack.c.h.b16 %v144
      %v743 = vunpack.c.l.b16 %v145
      %v744 = vunpack.c.h.b16 %v145
      %v745 = vunpack.c.l.b16 %v146
      %v746 = vunpack.c.h.b16 %v146
      %v747 = vunpack.c.l.b16 %v147
      %v748 = vunpack.c.h.b16 %v147
      %v749 = vunpack.c.l.b16 %v148
      %v750 = vunpack.c.h.b16 %v148
      %v751 = vunpack.c.l.b16 %v149
      %v752 = vunpack.c.h.b16 %v149
      %v753 = vunpack.c.l.b16 %v150
      %v754 = vunpack.c.h.b16 %v150
      %v755 = vunpack.c.l.b16 %v151
      %v756 = vunpack.c.h.b16 %v151
      %v757 = vunpack.c.l.b16 %v152
      %v758 = vunpack.c.h.b16 %v152
      %v759 = vunpack.c.l.b16 %v153
      %v760 = vunpack.c.h.b16 %v153
      %v761 = vunpack.c.l.b16 %v154
      %v762 = vunpack.c.h.b16 %v154
      %v763 = vunpack.c.l.b16 %v155
      %v764 = vunpack.c.h.b16 %v155
      %v765 = vunpack.c.l.b16 %v156
      %v766 = vunpack.c.h.b16 %v156
      %v767 = vunpack.c.l.b16 %v157
      %v768 = vunpack.c.h.b16 %v157
      %v769 = vunpack.c.l.b16 %v158
      %v770 = vunpack.c.h.b16 %v158
      %v771 = vunpack.c.l.b16 %v159
      %v772 = vunpack.c.h.b16 %v159
      %v773 = vunpack.c.l.b16 %v160
      %v774 = vunpack.c.h.b16 %v160
      %v775 = vunpack.c.l.b16 %v161
      %v776 = vunpack.c.h.b16 %v161
      %v777 = vunpack.c.l.b16 %v162
      %v778 = vunpack.c.h.b16 %v162
      %v779 = vunpack.c.l.b16 %v163
      %v780 = vunpack.c.h.b16 %v163
      %v781 = vunpack.c.l.b16 %v164
      %v782 = vunpack.c.h.b16 %v164
      %v783 = vunpack.c.l.b16 %v165
      %v784 = vunpack.c.h.b16 %v165
      %v785 = vunpack.c.l.b16 %v166
      %v786 = vunpack.c.h.b16 %v166
      %v787 = vunpack.c.l.b16 %v167
      %v788 = vunpack.c.h.b16 %v167
      %v789 = vunpack.c.l.b16 %v168
      %v790 = vunpack.c.h.b16 %v168
      %v791 = vunpack.c.l.b16 %v169
      %v792 = vunpack.c.h.b16 %v169
      %v793 = vunpack.c.l.b16 %v170
      %v794 = vunpack.c.h.b16 %v170
      %v795 = vunpack.c.l.b16 %v171
      %v796 = vunpack.c.h.b16 %v171
      %v797 = vunpack.c.l.b16 %v172
      %v798 = vunpack.c.h.b16 %v172
      %v799 = vunpack.c.l.b16 %v173
      %v800 = vunpack.c.h.b16 %v173
      %v801 = vunpack.c.l.b16 %v174
      %v802 = vunpack.c.h.b16 %v174
      %v803 = vunpack.c.l.b16 %v175
      %v804 = vunpack.c.h.b16 %v175
      %v805 = vunpack.c.l.b16 %v176
      %v806 = vunpack.c.h.b16 %v176
      %v807 = vunpack.c.l.b16 %v177
      %v808 = vunpack.c.h.b16 %v177
      %v809 = vunpack.c.l.b16 %v178
      %v810 = vunpack.c.h.b16 %v178
      %v811 = vunpack.c.l.b16 %v179
      %v812 = vunpack.c.h.b16 %v179
      %v813 = vunpack.c.l.b16 %v180
      %v814 = vunpack.c.h.b16 %v180
      %v815 = vunpack.c.l.b16 %v181
      %v816 = vunpack.c.h.b16 %v181
      %v817 = vunpack.c.l.b16 %v182
      %v818 = vunpack.c.h.b16 %v182
      %v819 = vunpack.c.l.b16 %v183
      %v820 = vunpack.c.h.b16 %v183
      %v821 = vunpack.c.l.b16 %v184
      %v822 = vunpack.c.h.b16 %v184
      %v823 = vunpack.c.l.b16 %v185
      %v824 = vunpack.c.h.b16 %v185
      %v825 = vunpack.c.l.b16 %v186
      %v826 = vunpack.c.h.b16 %v186
      %v827 = vunpack.c.l.b16 %v187
      %v828 = vunpack.c.h.b16 %v187
      %v829 = vunpack.c.l.b16 %v188
      %v830 = vunpack.c.h.b16 %v188
      %v831 = vunpack.c.l.b16 %v189
      %v832 = vunpack.c.h.b16 %v189
      %v833 = vunpack.c.l.b16 %v190
      %v834 = vunpack.c.h.b16 %v190
      %v835 = vunpack.c.l.b16 %v191
      %v836 = vunpack.c.h.b16 %v191
      %v837 = vunpack.c.l.b16 %v192
      %v838 = vunpack.c.h.b16 %v192
      %v839 = vunpack.c.l.b16 %v193
      %v840 = vunpack.c.h.b16 %v193
      %v841 = vunpack.c.l.b16 %v194
      %v842 = vunpack.c.h.b16 %v194
      %v843 = vunpack.c.l.b16 %v195
      %v844 = vunpack.c.h.b16 %v195
      %v845 = vunpack.c.l.b16 %v196
      %v846 = vunpack.c.h.b16 %v196
      %v847 = vunpack.c.l.b16 %v197
      %v848 = vunpack.c.h.b16 %v197
      %v849 = vunpack.c.l.b16 %v198
      %v850 = vunpack.c.h.b16 %v198
      %v851 = vunpack.c.l.b16 %v199
      %v852 = vunpack.c.h.b16 %v199
      %v853 = vunpack.c.l.b16 %v200
      %v854 = vunpack.c.h.b16 %v200
      %v855 = vunpack.c.l.b16 %v201
      %v856 = vunpack.c.h.b16 %v201
      %v857 = vunpack.c.l.b16 %v202
      %v858 = vunpack.c.h.b16 %v202
      %v859 = vunpack.c.l.b16 %v203
      %v860 = vunpack.c.h.b16 %v203
      %v861 = vunpack.c.l.b16 %v204
      %v862 = vunpack.c.h.b16 %v204
      %v863 = vunpack.c.l.b16 %v205
      %v864 = vunpack.c.h.b16 %v205
      %v865 = vunpack.c.l.b16 %v206
      %v866 = vunpack.c.h.b16 %v206
      %v867 = vunpack.c.l.b16 %v207
      %v868 = vunpack.c.h.b16 %v207
      %v869 = vunpack.c.l.b16 %v208
      %v870 = vunpack.c.h.b16 %v208
      %v871 = vunpack.c.l.b16 %v209
      %v872 = vunpack.c.h.b16 %v209
      %v873 = vunpack.c.l.b16 %v210
      %v874 = vunpack.c.h.b16 %v210
      %v875 = vunpack.c.l.b16 %v211
      %v876 = vunpack.c.h.b16 %v211
      %v877 = vunpack.c.l.b16 %v212
      %v878 = vunpack.c.h.b16 %v212
      %v879 = vunpack.c.l.b16 %v213
      %v880 = vunpack.c.h.b16 %v213
      %v881 = vunpack.c.l.b16 %v214
      %v882 = vunpack.c.h.b16 %v214
      %v883 = vunpack.c.l.b16 %v215
      %v884 = vunpack.c.h.b16 %v215
      %v885 = vunpack.c.l.b16 %v216
      %v886 = vunpack.c.h.b16 %v216
      %v887 = vunpack.c.l.b16 %v217
      %v888 = vunpack.c.h.b16 %v217
      %v889 = vunpack.c.l.b16 %v218
      %v890 = vunpack.c.h.b16 %v218
      %v891 = vunpack.c.l.b16 %v219
      %v892 = vunpack.c.h.b16 %v219
      %v893 = vunpack.c.l.b16 %v220
      %v894 = vunpack.c.h.b16 %v220
      %v895 = vunpack.c.l.b16 %v221
      %v896 = vunpack.c.h.b16 %v221
      %v897 = vunpack.c.l.b16 %v222
      %v898 = vunpack.c.h.b16 %v222
      %v899 = vunpack.c.l.b16 %v223
      %v900 = vunpack.c.h.b16 %v223
      %v901 = vunpack.c.l.b16 %v224
      %v902 = vunpack.c.h.b16 %v224
      %v903 = vunpack.c.l.b16 %v225
      %v904 = vunpack.c.h.b16 %v225
      %v905 = vunpack.c.l.b16 %v226
      %v906 = vunpack.c.h.b16 %v226
      %v907 = vunpack.c.l.b16 %v227
      %v908 = vunpack.c.h.b16 %v227
      %v909 = vunpack.c.l.b16 %v228
      %v910 = vunpack.c.h.b16 %v228
      %v911 = vunpack.c.l.b16 %v229
      %v912 = vunpack.c.h.b16 %v229
      %v913 = vunpack.c.l.b16 %v230
      %v914 = vunpack.c.h.b16 %v230
      %v915 = vunpack.c.l.b16 %v231
      %v916 = vunpack.c.h.b16 %v231
      %v917 = vunpack.c.l.b16 %v232
      %v918 = vunpack.c.h.b16 %v232
      %v919 = vunpack.c.l.b16 %v233
      %v920 = vunpack.c.h.b16 %v233
      %v921 = vunpack.c.l.b16 %v234
      %v922 = vunpack.c.h.b16 %v234
      %v923 = vunpack.c.l.b16 %v235
      %v924 = vunpack.c.h.b16 %v235
      %v925 = vunpack.c.l.b16 %v236
      %v926 = vunpack.c.h.b16 %v236
      %v927 = vunpack.c.l.b16 %v237
      %v928 = vunpack.c.h.b16 %v237
      %v929 = vunpack.c.l.b16 %v238
      %v930 = vunpack.c.h.b16 %v238
      %v931 = vunpack.c.l.b16 %v239
      %v932 = vunpack.c.h.b16 %v239
      %v933 = vunpack.c.l.b16 %v240
      %v934 = vunpack.c.h.b16 %v240
      %v935 = vunpack.c.l.b16 %v241
      %v936 = vunpack.c.h.b16 %v241
      %v937 = vunpack.c.l.b16 %v242
      %v938 = vunpack.c.h.b16 %v242
      %v939 = vunpack.c.l.b16 %v243
      %v940 = vunpack.c.h.b16 %v243
      %v941 = vunpack.c.l.b16 %v244
      %v942 = vunpack.c.h.b16 %v244
      %v943 = vunpack.c.l.b16 %v245
      %v944 = vunpack.c.h.b16 %v245
      %v945 = vunpack.c.l.b16 %v246
      %v946 = vunpack.c.h.b16 %v246
      %v947 = vunpack.c.l.b16 %v247
      %v948 = vunpack.c.h.b16 %v247
      %v949 = vunpack.c.l.b16 %v248
      %v950 = vunpack.c.h.b16 %v248
      %v951 = vunpack.c.l.b16 %v249
      %v952 = vunpack.c.h.b16 %v249
      %v953 = vunpack.c.l.b16 %v250
      %v954 = vunpack.c.h.b16 %v250
      %v955 = vunpack.c.l.b16 %v251
      %v956 = vunpack.c.h.b16 %v251
      %v957 = vunpack.c.l.b16 %v252
      %v958 = vunpack.c.h.b16 %v252
      %v959 = vunpack.c.l.b16 %v253
      %v960 = vunpack.c.h.b16 %v253
      %v961 = vunpack.c.l.b16 %v254
      %v962 = vunpack.c.h.b16 %v254
      %v963 = vunpack.c.l.b16 %v255
      %v964 = vunpack.c.h.b16 %v255
      %v965 = vunpack.c.l.b16 %v256
      %v966 = vunpack.c.h.b16 %v256
      %v967 = vunpack.c.l.b16 %v257
      %v968 = vunpack.c.h.b16 %v257
      %v969 = vunpack.c.l.b16 %v258
      %v970 = vunpack.c.h.b16 %v258
      %v971 = vunpack.c.l.b16 %v259
      %v972 = vunpack.c.h.b16 %v259
      %v973 = vunpack.c.l.b16 %v260
      %v974 = vunpack.c.h.b16 %v260
      %v975 = vunpack.c.l.b16 %v261
      %v976 = vunpack.c.h.b16 %v261
      %v977 = vunpack.c.l.b16 %v262
      %v978 = vunpack.c.h.b16 %v262
      %v979 = vunpack.c.l.b16 %v263
      %v980 = vunpack.c.h.b16 %v263
      %v981 = vunpack.c.l.b16 %v264
      %v982 = vunpack.c.h.b16 %v264
      %v983 = vunpack.c.l.b16 %v265
      %v984 = vunpack.c.h.b16 %v265
      %v985 = vunpack.c.l.b16 %v266
      %v986 = vunpack.c.h.b16 %v266
      %v987 = vunpack.c.l.b16 %v267
      %v988 = vunpack.c.h.b16 %v267
      %v989 = vunpack.c.l.b16 %v268
      %v990 = vunpack.c.h.b16 %v268
      %v991 = vunpack.c.l.b16 %v269
      %v992 = vunpack.c.h.b16 %v269
      %v993 = vunpack.c.l.b16 %v270
      %v994 = vunpack.c.h.b16 %v270
      %v995 = vunpack.c.l.b16 %v271
      %v996 = vunpack.c.h.b16 %v271
      %v997 = vunpack.c.l.b16 %v272
      %v998 = vunpack.c.h.b16 %v272
      %v999 = vunpack.c.l.b16 %v273
      %v1000 = vunpack.c.h.b16 %v273
      %v1001 = vunpack.c.l.b16 %v274
      %v1002 = vunpack.c.h.b16 %v274
      %v1003 = vunpack.c.l.b16 %v275
      %v1004 = vunpack.c.h.b16 %v275
      %v1005 = vunpack.c.l.b16 %v276
      %v1006 = vunpack.c.h.b16 %v276
      %v1007 = vunpack.c.l.b16 %v277
      %v1008 = vunpack.c.h.b16 %v277
      %v1009 = vunpack.c.l.b16 %v278
      %v1010 = vunpack.c.h.b16 %v278
      %v1011 = vunpack.c.l.b16 %v279
      %v1012 = vunpack.c.h.b16 %v279
      %v1013 = vunpack.c.l.b16 %v280
      %v1014 = vunpack.c.h.b16 %v280
      %v1015 = vunpack.c.l.b16 %v281
      %v1016 = vunpack.c.h.b16 %v281
      %v1017 = vunpack.c.l.b16 %v282
      %v1018 = vunpack.c.h.b16 %v282
      %v1019 = vunpack.c.l.b16 %v283
      %v1020 = vunpack.c.h.b16 %v283
      %v1021 = vunpack.c.l.b16 %v284
      %v1022 = vunpack.c.h.b16 %v284
      %v1023 = vunpack.c.l.b16 %v285
      %v1024 = vunpack.c.h.b16 %v285
      %v1025 = vunpack.c.l.b16 %v286
      %v1026 = vunpack.c.h.b16 %v286
      %v1027 = vunpack.c.l.b16 %v287
      %v1028 = vunpack.c.h.b16 %v287
      %v1029 = vunpack.c.l.b16 %v288
      %v1030 = vunpack.c.h.b16 %v288
      %v1031 = vunpack.c.l.b16 %v289
      %v1032 = vunpack.c.h.b16 %v289
      %v1033 = vunpack.c.l.b16 %v290
      %v1034 = vunpack.c.h.b16 %v290
      %v1035 = vunpack.c.l.b16 %v291
      %v1036 = vunpack.c.h.b16 %v291
      %v1037 = vunpack.c.l.b16 %v292
      %v1038 = vunpack.c.h.b16 %v292
      %v1039 = vunpack.c.l.b16 %v293
      %v1040 = vunpack.c.h.b16 %v293
      %v1041 = vunpack.c.l.b16 %v294
      %v1042 = vunpack.c.h.b16 %v294
      %v1043 = vunpack.c.l.b16 %v295
      %v1044 = vunpack.c.h.b16 %v295
      %v1045 = vunpack.c.l.b16 %v296
      %v1046 = vunpack.c.h.b16 %v296
      %v1047 = vunpack.c.l.b16 %v297
      %v1048 = vunpack.c.h.b16 %v297
      %v1049 = vunpack.c.l.b16 %v298
      %v1050 = vunpack.c.h.b16 %v298
      %v1051 = vunpack.c.l.b16 %v299
      %v1052 = vunpack.c.h.b16 %v299
      %v1053 = vunpack.c.l.b16 %v300
      %v1054 = vunpack.c.h.b16 %v300
      %v1055 = vunpack.c.l.b16 %v301
      %v1056 = vunpack.c.h.b16 %v301
      %v1057 = vunpack.c.l.b16 %v302
      %v1058 = vunpack.c.h.b16 %v302
      %v1059 = vunpack.c.l.b16 %v303
      %v1060 = vunpack.c.h.b16 %v303
      %v1061 = vunpack.c.l.b16 %v304
      %v1062 = vunpack.c.h.b16 %v304
      %v1063 = vunpack.c.l.b16 %v305
      %v1064 = vunpack.c.h.b16 %v305
      %v1065 = vunpack.c.l.b16 %v306
      %v1066 = vunpack.c.h.b16 %v306
      %v1067 = vunpack.c.l.b16 %v307
      %v1068 = vunpack.c.h.b16 %v307
      %v1069 = vunpack.c.l.b16 %v308
      %v1070 = vunpack.c.h.b16 %v308
      %v1071 = vunpack.c.l.b16 %v309
      %v1072 = vunpack.c.h.b16 %v309
      %v1073 = vunpack.c.l.b16 %v310
      %v1074 = vunpack.c.h.b16 %v310
      %v1075 = vunpack.c.l.b16 %v311
      %v1076 = vunpack.c.h.b16 %v311
      %v1077 = vunpack.c.l.b16 %v312
      %v1078 = vunpack.c.h.b16 %v312
      %v1079 = vunpack.c.l.b16 %v313
      %v1080 = vunpack.c.h.b16 %v313
      %v1081 = vunpack.c.l.b16 %v314
      %v1082 = vunpack.c.h.b16 %v314
      %v1083 = vunpack.c.l.b16 %v315
      %v1084 = vunpack.c.h.b16 %v315
      %v1085 = vunpack.c.l.b16 %v316
      %v1086 = vunpack.c.h.b16 %v316
      %v1087 = vunpack.c.l.b16 %v317
      %v1088 = vunpack.c.h.b16 %v317
      %v1089 = vunpack.c.l.b16 %v318
      %v1090 = vunpack.c.h.b16 %v318
      %v1091 = vunpack.c.l.b16 %v319
      %v1092 = vunpack.c.h.b16 %v319
      %v1093 = vunpack.c.l.b16 %v320
      %v1094 = vunpack.c.h.b16 %v320
      %v1095 = vunpack.c.l.b16 %v321
      %v1096 = vunpack.c.h.b16 %v321
      %v1097 = vunpack.c.l.b16 %v322
      %v1098 = vunpack.c.h.b16 %v322
      %v1099 = vunpack.c.l.b16 %v323
      %v1100 = vunpack.c.h.b16 %v323
      %v1101 = vunpack.c.l.b16 %v324
      %v1102 = vunpack.c.h.b16 %v324
      %v1103 = vunpack.c.l.b16 %v325
      %v1104 = vunpack.c.h.b16 %v325
      %v1105 = vunpack.c.l.b16 %v326
      %v1106 = vunpack.c.h.b16 %v326
      %v1107 = vunpack.c.l.b16 %v327
      %v1108 = vunpack.c.h.b16 %v327
      %v1109 = vunpack.c.l.b16 %v328
      %v1110 = vunpack.c.h.b16 %v328
      %v1111 = vunpack.c.l.b16 %v329
      %v1112 = vunpack.c.h.b16 %v329
      %v1113 = vunpack.c.l.b16 %v330
      %v1114 = vunpack.c.h.b16 %v330
      %v1115 = vunpack.c.l.b16 %v331
      %v1116 = vunpack.c.h.b16 %v331
      %v1117 = vunpack.c.l.b16 %v332
      %v1118 = vunpack.c.h.b16 %v332
      %v1119 = vunpack.c.l.b16 %v333
      %v1120 = vunpack.c.h.b16 %v333
      %v1121 = vunpack.c.l.b16 %v334
      %v1122 = vunpack.c.h.b16 %v334
      %v1123 = vunpack.c.l.b16 %v335
      %v1124 = vunpack.c.h.b16 %v335
      %v1125 = vunpack.c.l.b16 %v336
      %v1126 = vunpack.c.h.b16 %v336
      %v1127 = vunpack.c.l.b16 %v337
      %v1128 = vunpack.c.h.b16 %v337
      %v1129 = vunpack.c.l.b16 %v338
      %v1130 = vunpack.c.h.b16 %v338
      %v1131 = vunpack.c.l.b16 %v339
      %v1132 = vunpack.c.h.b16 %v339
      %v1133 = vunpack.c.l.b16 %v340
      %v1134 = vunpack.c.h.b16 %v340
      %v1135 = vunpack.c.l.b16 %v341
      %v1136 = vunpack.c.h.b16 %v341
      %v1137 = vunpack.c.l.b16 %v342
      %v1138 = vunpack.c.h.b16 %v342
      %v1139 = vunpack.c.l.b16 %v343
      %v1140 = vunpack.c.h.b16 %v343
      %v1141 = vunpack.c.l.b16 %v344
      %v1142 = vunpack.c.h.b16 %v344
      %v1143 = vunpack.c.l.b16 %v345
      %v1144 = vunpack.c.h.b16 %v345
      %v1145 = vunpack.c.l.b16 %v346
      %v1146 = vunpack.c.h.b16 %v346
      %v1147 = vunpack.c.l.b16 %v347
      %v1148 = vunpack.c.h.b16 %v347
      %v1149 = vunpack.c.l.b16 %v348
      %v1150 = vunpack.c.h.b16 %v348
      %v1151 = vunpack.c.l.b16 %v349
      %v1152 = vunpack.c.h.b16 %v349
      %v1153 = vunpack.c.l.b16 %v350
      %v1154 = vunpack.c.h.b16 %v350
      %v1155 = vunpack.c.l.b16 %v351
      %v1156 = vunpack.c.h.b16 %v351
      %v1157 = vunpack.c.l.b16 %v352
      %v1158 = vunpack.c.h.b16 %v352
      %v1159 = vunpack.c.l.b16 %v353
      %v1160 = vunpack.c.h.b16 %v353
      %v1161 = vunpack.c.l.b16 %v354
      %v1162 = vunpack.c.h.b16 %v354
      %v1163 = vunpack.c.l.b16 %v355
      %v1164 = vunpack.c.h.b16 %v355
      %v1165 = vunpack.c.l.b16 %v356
      %v1166 = vunpack.c.h.b16 %v356
      %v1167 = vunpack.c.l.b16 %v357
      %v1168 = vunpack.c.h.b16 %v357
      %v1169 = vunpack.c.l.b16 %v358
      %v1170 = vunpack.c.h.b16 %v358
      %v1171 = vunpack.c.l.b16 %v359
      %v1172 = vunpack.c.h.b16 %v359
      %v1173 = vunpack.c.l.b16 %v360
      %v1174 = vunpack.c.h.b16 %v360
      %v1175 = vunpack.c.l.b16 %v361
      %v1176 = vunpack.c.h.b16 %v361
      %v1177 = vunpack.c.l.b16 %v362
      %v1178 = vunpack.c.h.b16 %v362
      %v1179 = vunpack.c.l.b16 %v363
      %v1180 = vunpack.c.h.b16 %v363
      %v1181 = vunpack.c.l.b16 %v364
      %v1182 = vunpack.c.h.b16 %v364
      %v1183 = vpack.c.b16 %v675, %v671
      %v1184 = vpack.c.b16 %v676, %v672
      %v1185 = vpack.c.b16 %v677, %v673
      %v1186 = vpack.c.b16 %v678, %v674
      %v1187 = vpack.c.b16 %v683, %v679
      %v1188 = vpack.c.b16 %v684, %v680
      %v1189 = vpack.c.b16 %v685, %v681
      %v1190 = vpack.c.b16 %v686, %v682
      %v1191 = vpack.c.b16 %v691, %v687
      %v1192 = vpack.c.b16 %v692, %v688
      %v1193 = vpack.c.b16 %v693, %v689
      %v1194 = vpack.c.b16 %v694, %v690
      %v1195 = vpack.c.b16 %v699, %v695
      %v1196 = vpack.c.b16 %v700, %v696
      %v1197 = vpack.c.b16 %v701, %v697
      %v1198 = vpack.c.b16 %v702, %v698
      %v1199 = vpack.c.b16 %v707, %v703
      %v1200 = vpack.c.b16 %v708, %v704
      %v1201 = vpack.c.b16 %v709, %v705
      %v1202 = vpack.c.b16 %v710, %v706
      %v1203 = vpack.c.b16 %v715, %v711
      %v1204 = vpack.c.b16 %v716, %v712
      %v1205 = vpack.c.b16 %v717, %v713
      %v1206 = vpack.c.b16 %v718, %v714
      %v1207 = vpack.c.b16 %v723, %v719
      %v1208 = vpack.c.b16 %v724, %v720
      %v1209 = vpack.c.b16 %v725, %v721
      %v1210 = vpack.c.b16 %v726, %v722
      %v1211 = vpack.c.b16 %v731, %v727
      %v1212 = vpack.c.b16 %v732, %v728
      %v1213 = vpack.c.b16 %v733, %v729
      %v1214 = vpack.c.b16 %v734, %v730
      %v1215 = vpack.c.b16 %v739, %v735
      %v1216 = vpack.c.b16 %v740, %v736
      %v1217 = vpack.c.b16 %v741, %v737
      %v1218 = vpack.c.b16 %v742, %v738
      %v1219 = vpack.c.b16 %v747, %v743
      %v1220 = vpack.c.b16 %v748, %v744
      %v1221 = vpack.c.b16 %v749, %v745
      %v1222 = vpack.c.b16 %v750, %v746
      %v1223 = vpack.c.b16 %v755, %v751
      %v1224 = vpack.c.b16 %v756, %v752
      %v1225 = vpack.c.b16 %v757, %v753
      %v1226 = vpack.c.b16 %v758, %v754
      %v1227 = vpack.c.b16 %v763, %v759
      %v1228 = vpack.c.b16 %v764, %v760
      %v1229 = vpack.c.b16 %v765, %v761
      %v1230 = vpack.c.b16 %v766, %v762
      %v1231 = vpack.c.b16 %v771, %v767
      %v1232 = vpack.c.b16 %v772, %v768
      %v1233 = vpack.c.b16 %v773, %v769
      %v1234 = vpack.c.b16 %v774, %v770
      %v1235 = vpack.c.b16 %v779, %v775
      %v1236 = vpack.c.b16 %v780, %v776
      %v1237 = vpack.c.b16 %v781, %v777
      %v1238 = vpack.c.b16 %v782, %v778
      %v1239 = vpack.c.b16 %v787, %v783
      %v1240 = vpack.c.b16 %v788, %v784
      %v1241 = vpack.c.b16 %v789, %v785
      %v1242 = vpack.c.b16 %v790, %v786
      %v1243 = vpack.c.b16 %v795, %v791
      %v1244 = vpack.c.b16 %v796, %v792
      %v1245 = vpack.c.b16 %v797, %v793
      %v1246 = vpack.c.b16 %v798, %v794
      %v1247 = vpack.c.b16 %v803, %v799
      %v1248 = vpack.c.b16 %v804, %v800
      %v1249 = vpack.c.b16 %v805, %v801
      %v1250 = vpack.c.b16 %v806, %v802
      %v1251 = vpack.c.b16 %v811, %v807
      %v1252 = vpack.c.b16 %v812, %v808
      %v1253 = vpack.c.b16 %v813, %v809
      %v1254 = vpack.c.b16 %v814, %v810
      %v1255 = vpack.c.b16 %v819, %v815
      %v1256 = vpack.c.b16 %v820, %v816
      %v1257 = vpack.c.b16 %v821, %v817
      %v1258 = vpack.c.b16 %v822, %v818
      %v1259 = vpack.c.b16 %v827, %v823
      %v1260 = vpack.c.b16 %v828, %v824
      %v1261 = vpack.c.b16 %v829, %v825
      %v1262 = vpack.c.b16 %v830, %v826
      %v1263 = vpack.c.b16 %v835, %v831
      %v1264 = vpack.c.b16 %v836, %v832
      %v1265 = vpack.c.b16 %v837, %v833
      %v1266 = vpack.c.b16 %v838, %v834
      %v1267 = vpack.c.b16 %v843, %v839
      %v1268 = vpack.c.b16 %v844, %v840
      %v1269 = vpack.c.b16 %v845, %v841
      %v1270 = vpack.c.b16 %v846, %v842
      %v1271 = vpack.c.b16 %v851, %v847
      %v1272 = vpack.c.b16 %v852, %v848
      %v1273 = vpack.c.b16 %v853, %v849
      %v1274 = vpack.c.b16 %v854, %v850
      %v1275 = vpack.c.b16 %v859, %v855
      %v1276 = vpack.c.b16 %v860, %v856
      %v1277 = vpack.c.b16 %v861, %v857
      %v1278 = vpack.c.b16 %v862, %v858
      %v1279 = vpack.c.b16 %v867, %v863
      %v1280 = vpack.c.b16 %v868, %v864
      %v1281 = vpack.c.b16 %v869, %v865
      %v1282 = vpack.c.b16 %v870, %v866
      %v1283 = vpack.c.b16 %v875, %v871
      %v1284 = vpack.c.b16 %v876, %v872
      %v1285 = vpack.c.b16 %v877, %v873
      %v1286 = vpack.c.b16 %v878, %v874
      %v1287 = vpack.c.b16 %v883, %v879
      %v1288 = vpack.c.b16 %v884, %v880
      %v1289 = vpack.c.b16 %v885, %v881
      %v1290 = vpack.c.b16 %v886, %v882
      %v1291 = vpack.c.b16 %v891, %v887
      %v1292 = vpack.c.b16 %v892, %v888
      %v1293 = vpack.c.b16 %v893, %v889
      %v1294 = vpack.c.b16 %v894, %v890
      %v1295 = vpack.c.b16 %v899, %v895
      %v1296 = vpack.c.b16 %v900, %v896
      %v1297 = vpack.c.b16 %v901, %v897
      %v1298 = vpack.c.b16 %v902, %v898
      %v1299 = vpack.c.b16 %v907, %v903
      %v1300 = vpack.c.b16 %v908, %v904
      %v1301 = vpack.c.b16 %v909, %v905
      %v1302 = vpack.c.b16 %v910, %v906
      %v1303 = vpack.c.b16 %v915, %v911
      %v1304 = vpack.c.b16 %v916, %v912
      %v1305 = vpack.c.b16 %v917, %v913
      %v1306 = vpack.c.b16 %v918, %v914
      %v1307 = vpack.c.b16 %v923, %v919
      %v1308 = vpack.c.b16 %v924, %v920
      %v1309 = vpack.c.b16 %v925, %v921
      %v1310 = vpack.c.b16 %v926, %v922
      %v1311 = vpack.c.b16 %v931, %v927
      %v1312 = vpack.c.b16 %v932, %v928
      %v1313 = vpack.c.b16 %v933, %v929
      %v1314 = vpack.c.b16 %v934, %v930
      %v1315 = vpack.c.b16 %v939, %v935
      %v1316 = vpack.c.b16 %v940, %v936
      %v1317 = vpack.c.b16 %v941, %v937
      %v1318 = vpack.c.b16 %v942, %v938
      %v1319 = vpack.c.b16 %v947, %v943
      %v1320 = vpack.c.b16 %v948, %v944
      %v1321 = vpack.c.b16 %v949, %v945
      %v1322 = vpack.c.b16 %v950, %v946
      %v1323 = vpack.c.b16 %v955, %v951
      %v1324 = vpack.c.b16 %v956, %v952
      %v1325 = vpack.c.b16 %v957, %v953
      %v1326 = vpack.c.b16 %v958, %v954
      %v1327 = vpack.c.b16 %v963, %v959
      %v1328 = vpack.c.b16 %v964, %v960
      %v1329 = vpack.c.b16 %v965, %v961
      %v1330 = vpack.c.b16 %v966, %v962
      %v1331 = vpack.c.b16 %v971, %v967
      %v1332 = vpack.c.b16 %v972, %v968
      %v1333 = vpack.c.b16 %v973, %v969
      %v1334 = vpack.c.b16 %v974, %v970
      %v1335 = vpack.c.b16 %v979, %v975
      %v1336 = vpack.c.b16 %v980, %v976
      %v1337 = vpack.c.b16 %v981, %v977
      %v1338 = vpack.c.b16 %v982, %v978
      %v1339 = vpack.c.b16 %v987, %v983
      %v1340 = vpack.c.b16 %v988, %v984
      %v1341 = vpack.c.b16 %v989, %v985
      %v1342 = vpack.c.b16 %v990, %v986
      %v1343 = vpack.c.b16 %v995, %v991
      %v1344 = vpack.c.b16 %v996, %v992
      %v1345 = vpack.c.b16 %v997, %v993
      %v1346 = vpack.c.b16 %v998, %v994
      %v1347 = vpack.c.b16 %v1003, %v999
      %v1348 = vpack.c.b16 %v1004, %v1000
      %v1349 = vpack.c.b16 %v1005, %v1001
      %v1350 = vpack.c.b16 %v1006, %v1002
      %v1351 = vpack.c.b16 %v1011, %v1007
      %v1352 = vpack.c.b16 %v1012, %v1008
      %v1353 = vpack.c.b16 %v1013, %v1009
      %v1354 = vpack.c.b16 %v1014, %v1010
      %v1355 = vpack.c.b16 %v1019, %v1015
      %v1356 = vpack.c.b16 %v1020, %v1016
      %v1357 = vpack.c.b16 %v1021, %v1017
      %v1358 = vpack.c.b16 %v1022, %v1018
      %v1359 = vpack.c.b16 %v1027, %v1023
      %v1360 = vpack.c.b16 %v1028, %v1024
      %v1361 = vpack.c.b16 %v1029, %v1025
      %v1362 = vpack.c.b16 %v1030, %v1026
      %v1363 = vpack.c.b16 %v1035, %v1031
      %v1364 = vpack.c.b16 %v1036, %v1032
      %v1365 = vpack.c.b16 %v1037, %v1033
      %v1366 = vpack.c.b16 %v1038, %v1034
      %v1367 = vpack.c.b16 %v1043, %v1039
      %v1368 = vpack.c.b16 %v1044, %v1040
      %v1369 = vpack.c.b16 %v1045, %v1041
      %v1370 = vpack.c.b16 %v1046, %v1042
      %v1371 = vpack.c.b16 %v1051, %v1047
      %v1372 = vpack.c.b16 %v1052, %v1048
      %v1373 = vpack.c.b16 %v1053, %v1049
      %v1374 = vpack.c.b16 %v1054, %v1050
      %v1375 = vpack.c.b16 %v1059, %v1055
      %v1376 = vpack.c.b16 %v1060, %v1056
      %v1377 = vpack.c.b16 %v1061, %v1057
      %v1378 = vpack.c.b16 %v1062, %v1058
      %v1379 = vpack.c.b16 %v1067, %v1063
      %v1380 = vpack.c.b16 %v1068, %v1064
      %v1381 = vpack.c.b16 %v1069, %v1065
      %v1382 = vpack.c.b16 %v1070, %v1066
      %v1383 = vpack.c.b16 %v1075, %v1071
      %v1384 = vpack.c.b16 %v1076, %v1072
      %v1385 = vpack.c.b16 %v1077, %v1073
      %v1386 = vpack.c.b16 %v1078, %v1074
      %v1387 = vpack.c.b16 %v1083, %v1079
      %v1388 = vpack.c.b16 %v1084, %v1080
      %v1389 = vpack.c.b16 %v1085, %v1081
      %v1390 = vpack.c.b16 %v1086, %v1082
      %v1391 = vpack.c.b16 %v1091, %v1087
      %v1392 = vpack.c.b16 %v1092, %v1088
      %v1393 = vpack.c.b16 %v1093, %v1089
      %v1394 = vpack.c.b16 %v1094, %v1090
      %v1395 = vpack.c.b16 %v1099, %v1095
      %v1396 = vpack.c.b16 %v1100, %v1096
      %v1397 = vpack.c.b16 %v1101, %v1097
      %v1398 = vpack.c.b16 %v1102, %v1098
      %v1399 = vpack.c.b16 %v1107, %v1103
      %v1400 = vpack.c.b16 %v1108, %v1104
      %v1401 = vpack.c.b16 %v1109, %v1105
      %v1402 = vpack.c.b16 %v1110, %v1106
      %v1403 = vpack.c.b16 %v1115, %v1111
      %v1404 = vpack.c.b16 %v1116, %v1112
      %v1405 = vpack.c.b16 %v1117, %v1113
      %v1406 = vpack.c.b16 %v1118, %v1114
      %v1407 = vpack.c.b16 %v1123, %v1119
      %v1408 = vpack.c.b16 %v1124, %v1120
      %v1409 = vpack.c.b16 %v1125, %v1121
      %v1410 = vpack.c.b16 %v1126, %v1122
      %v1411 = vpack.c.b16 %v1131, %v1127
      %v1412 = vpack.c.b16 %v1132, %v1128
      %v1413 = vpack.c.b16 %v1133, %v1129
      %v1414 = vpack.c.b16 %v1134, %v1130
      %v1415 = vpack.c.b16 %v1139, %v1135
      %v1416 = vpack.c.b16 %v1140, %v1136
      %v1417 = vpack.c.b16 %v1141, %v1137
      %v1418 = vpack.c.b16 %v1142, %v1138
      %v1419 = vpack.c.b16 %v1147, %v1143
      %v1420 = vpack.c.b16 %v1148, %v1144
      %v1421 = vpack.c.b16 %v1149, %v1145
      %v1422 = vpack.c.b16 %v1150, %v1146
      %v1423 = vpack.c.b16 %v1155, %v1151
      %v1424 = vpack.c.b16 %v1156, %v1152
      %v1425 = vpack.c.b16 %v1157, %v1153
      %v1426 = vpack.c.b16 %v1158, %v1154
      %v1427 = vpack.c.b16 %v1163, %v1159
      %v1428 = vpack.c.b16 %v1164, %v1160
      %v1429 = vpack.c.b16 %v1165, %v1161
      %v1430 = vpack.c.b16 %v1166, %v1162
      %v1431 = vpack.c.b16 %v1171, %v1167
      %v1432 = vpack.c.b16 %v1172, %v1168
      %v1433 = vpack.c.b16 %v1173, %v1169
      %v1434 = vpack.c.b16 %v1174, %v1170
      %v1435 = vpack.c.b16 %v1179, %v1175
      %v1436 = vpack.c.b16 %v1180, %v1176
      %v1437 = vpack.c.b16 %v1181, %v1177
      %v1438 = vpack.c.b16 %v1182, %v1178
      %1695 = vmatpush.bf16.msra.mxu0 %v1211
      %1696 = vmatpush.bf16.msra.mxu0 %v1207
      %1697 = vmatpush.bf16.msra.mxu0 %v1203
      %1698 = vmatpush.bf16.msra.mxu0 %v1199
      %1699 = vmatpush.bf16.msra.mxu0 %v1195
      %1700 = vmatpush.bf16.msra.mxu0 %v1191
      %1701 = vmatpush.bf16.msra.mxu0 %v1187
      %1702 = vmatpush.bf16.msra.mxu0 %v1183
      %1703 = vmatmul.bf16.gmra.mxu0 %v399
      %v1704 = vpop.f32.mrf.mxu0
      %v1705 = vadd.f32 %v367, %v1704
      %v1706 = vpop.f32.mrf.mxu0
      %v1707 = vadd.f32 %v367, %v1706
      %1708 = vdwg.mxu0
      %1709 = vmatpush.bf16.msra.mxu0 %v1243
      %1710 = vmatpush.bf16.msra.mxu0 %v1239
      %1711 = vmatpush.bf16.msra.mxu0 %v1235
      %1712 = vmatpush.bf16.msra.mxu0 %v1231
      %1713 = vmatpush.bf16.msra.mxu0 %v1227
      %1714 = vmatpush.bf16.msra.mxu0 %v1223
      %1715 = vmatpush.bf16.msra.mxu0 %v1219
      %1716 = vmatpush.bf16.msra.mxu0 %v1215
      %1717 = vmatmul.bf16.gmra.mxu0 %v400
      %v1718 = vpop.f32.mrf.mxu0
      %v1719 = vadd.f32 %v1705, %v1718
      %v1720 = vpop.f32.mrf.mxu0
      %v1721 = vadd.f32 %v1707, %v1720
      %1722 = vdwg.mxu0
      %1723 = vmatpush.bf16.msra.mxu0 %v1275
      %1724 = vmatpush.bf16.msra.mxu0 %v1271
      %1725 = vmatpush.bf16.msra.mxu0 %v1267
      %1726 = vmatpush.bf16.msra.mxu0 %v1263
      %1727 = vmatpush.bf16.msra.mxu0 %v1259
      %1728 = vmatpush.bf16.msra.mxu0 %v1255
      %1729 = vmatpush.bf16.msra.mxu0 %v1251
      %1730 = vmatpush.bf16.msra.mxu0 %v1247
      %1731 = vmatmul.bf16.gmra.mxu0 %v401
      %v1732 = vpop.f32.mrf.mxu0
      %v1733 = vadd.f32 %v1719, %v1732
      %v1734 = vpop.f32.mrf.mxu0
      %v1735 = vadd.f32 %v1721, %v1734
      %1736 = vdwg.mxu0
      %1737 = vmatpush.bf16.msra.mxu0 %v1307
      %1738 = vmatpush.bf16.msra.mxu0 %v1303
      %1739 = vmatpush.bf16.msra.mxu0 %v1299
      %1740 = vmatpush.bf16.msra.mxu0 %v1295
      %1741 = vmatpush.bf16.msra.mxu0 %v1291
      %1742 = vmatpush.bf16.msra.mxu0 %v1287
      %1743 = vmatpush.bf16.msra.mxu0 %v1283
      %1744 = vmatpush.bf16.msra.mxu0 %v1279
      %1745 = vmatmul.bf16.gmra.mxu0 %v402
      %v1746 = vpop.f32.mrf.mxu0
      %v1747 = vadd.f32 %v1733, %v1746
      %v1748 = vpop.f32.mrf.mxu0
      %v1749 = vadd.f32 %v1735, %v1748
      %1750 = vdwg.mxu0
      %1751 = vmatpush.bf16.msra.mxu0 %v1339
      %1752 = vmatpush.bf16.msra.mxu0 %v1335
      %1753 = vmatpush.bf16.msra.mxu0 %v1331
      %1754 = vmatpush.bf16.msra.mxu0 %v1327
      %1755 = vmatpush.bf16.msra.mxu0 %v1323
      %1756 = vmatpush.bf16.msra.mxu0 %v1319
      %1757 = vmatpush.bf16.msra.mxu0 %v1315
      %1758 = vmatpush.bf16.msra.mxu0 %v1311
      %1759 = vmatmul.bf16.gmra.mxu0 %v403
      %v1760 = vpop.f32.mrf.mxu0
      %v1761 = vadd.f32 %v1747, %v1760
      %v1762 = vpop.f32.mrf.mxu0
      %v1763 = vadd.f32 %v1749, %v1762
      %1764 = vdwg.mxu0
      %1765 = vmatpush.bf16.msra.mxu0 %v1371
      %1766 = vmatpush.bf16.msra.mxu0 %v1367
      %1767 = vmatpush.bf16.msra.mxu0 %v1363
      %1768 = vmatpush.bf16.msra.mxu0 %v1359
      %1769 = vmatpush.bf16.msra.mxu0 %v1355
      %1770 = vmatpush.bf16.msra.mxu0 %v1351
      %1771 = vmatpush.bf16.msra.mxu0 %v1347
      %1772 = vmatpush.bf16.msra.mxu0 %v1343
      %1773 = vmatmul.bf16.gmra.mxu0 %v404
      %v1774 = vpop.f32.mrf.mxu0
      %v1775 = vadd.f32 %v1761, %v1774
      %v1776 = vpop.f32.mrf.mxu0
      %v1777 = vadd.f32 %v1763, %v1776
      %1778 = vdwg.mxu0
      %1779 = vmatpush.bf16.msra.mxu0 %v1403
      %1780 = vmatpush.bf16.msra.mxu0 %v1399
      %1781 = vmatpush.bf16.msra.mxu0 %v1395
      %1782 = vmatpush.bf16.msra.mxu0 %v1391
      %1783 = vmatpush.bf16.msra.mxu0 %v1387
      %1784 = vmatpush.bf16.msra.mxu0 %v1383
      %1785 = vmatpush.bf16.msra.mxu0 %v1379
      %1786 = vmatpush.bf16.msra.mxu0 %v1375
      %1787 = vmatmul.bf16.gmra.mxu0 %v405
      %v1788 = vpop.f32.mrf.mxu0
      %v1789 = vadd.f32 %v1775, %v1788
      %v1790 = vpop.f32.mrf.mxu0
      %v1791 = vadd.f32 %v1777, %v1790
      %1792 = vdwg.mxu0
      %1793 = vmatpush.bf16.msra.mxu0 %v1435
      %1794 = vmatpush.bf16.msra.mxu0 %v1431
      %1795 = vmatpush.bf16.msra.mxu0 %v1427
      %1796 = vmatpush.bf16.msra.mxu0 %v1423
      %1797 = vmatpush.bf16.msra.mxu0 %v1419
      %1798 = vmatpush.bf16.msra.mxu0 %v1415
      %1799 = vmatpush.bf16.msra.mxu0 %v1411
      %1800 = vmatpush.bf16.msra.mxu0 %v1407
      %1801 = vmatmul.bf16.gmra.mxu0 %v406
      %v1802 = vpop.f32.mrf.mxu0
      %v1803 = vadd.f32 %v1789, %v1802
      %v1804 = vpop.f32.mrf.mxu0
      %v1805 = vadd.f32 %v1791, %v1804
      %1806 = vdwg.mxu0
      %1807 = vmatpush.bf16.msra.mxu0 %v1212
      %1808 = vmatpush.bf16.msra.mxu0 %v1208
      %1809 = vmatpush.bf16.msra.mxu0 %v1204
      %1810 = vmatpush.bf16.msra.mxu0 %v1200
      %1811 = vmatpush.bf16.msra.mxu0 %v1196
      %1812 = vmatpush.bf16.msra.mxu0 %v1192
      %1813 = vmatpush.bf16.msra.mxu0 %v1188
      %1814 = vmatpush.bf16.msra.mxu0 %v1184
      %1815 = vmatmul.bf16.gmra.mxu0 %v399
      %v1816 = vpop.f32.mrf.mxu0
      %v1817 = vadd.f32 %v368, %v1816
      %v1818 = vpop.f32.mrf.mxu0
      %v1819 = vadd.f32 %v368, %v1818
      %1820 = vdwg.mxu0
      %1821 = vmatpush.bf16.msra.mxu0 %v1244
      %1822 = vmatpush.bf16.msra.mxu0 %v1240
      %1823 = vmatpush.bf16.msra.mxu0 %v1236
      %1824 = vmatpush.bf16.msra.mxu0 %v1232
      %1825 = vmatpush.bf16.msra.mxu0 %v1228
      %1826 = vmatpush.bf16.msra.mxu0 %v1224
      %1827 = vmatpush.bf16.msra.mxu0 %v1220
      %1828 = vmatpush.bf16.msra.mxu0 %v1216
      %1829 = vmatmul.bf16.gmra.mxu0 %v400
      %v1830 = vpop.f32.mrf.mxu0
      %v1831 = vadd.f32 %v1817, %v1830
      %v1832 = vpop.f32.mrf.mxu0
      %v1833 = vadd.f32 %v1819, %v1832
      %1834 = vdwg.mxu0
      %1835 = vmatpush.bf16.msra.mxu0 %v1276
      %1836 = vmatpush.bf16.msra.mxu0 %v1272
      %1837 = vmatpush.bf16.msra.mxu0 %v1268
      %1838 = vmatpush.bf16.msra.mxu0 %v1264
      %1839 = vmatpush.bf16.msra.mxu0 %v1260
      %1840 = vmatpush.bf16.msra.mxu0 %v1256
      %1841 = vmatpush.bf16.msra.mxu0 %v1252
      %1842 = vmatpush.bf16.msra.mxu0 %v1248
      %1843 = vmatmul.bf16.gmra.mxu0 %v401
      %v1844 = vpop.f32.mrf.mxu0
      %v1845 = vadd.f32 %v1831, %v1844
      %v1846 = vpop.f32.mrf.mxu0
      %v1847 = vadd.f32 %v1833, %v1846
      %1848 = vdwg.mxu0
      %1849 = vmatpush.bf16.msra.mxu0 %v1308
      %1850 = vmatpush.bf16.msra.mxu0 %v1304
      %1851 = vmatpush.bf16.msra.mxu0 %v1300
      %1852 = vmatpush.bf16.msra.mxu0 %v1296
      %1853 = vmatpush.bf16.msra.mxu0 %v1292
      %1854 = vmatpush.bf16.msra.mxu0 %v1288
      %1855 = vmatpush.bf16.msra.mxu0 %v1284
      %1856 = vmatpush.bf16.msra.mxu0 %v1280
      %1857 = vmatmul.bf16.gmra.mxu0 %v402
      %v1858 = vpop.f32.mrf.mxu0
      %v1859 = vadd.f32 %v1845, %v1858
      %v1860 = vpop.f32.mrf.mxu0
      %v1861 = vadd.f32 %v1847, %v1860
      %1862 = vdwg.mxu0
      %1863 = vmatpush.bf16.msra.mxu0 %v1340
      %1864 = vmatpush.bf16.msra.mxu0 %v1336
      %1865 = vmatpush.bf16.msra.mxu0 %v1332
      %1866 = vmatpush.bf16.msra.mxu0 %v1328
      %1867 = vmatpush.bf16.msra.mxu0 %v1324
      %1868 = vmatpush.bf16.msra.mxu0 %v1320
      %1869 = vmatpush.bf16.msra.mxu0 %v1316
      %1870 = vmatpush.bf16.msra.mxu0 %v1312
      %1871 = vmatmul.bf16.gmra.mxu0 %v403
      %v1872 = vpop.f32.mrf.mxu0
      %v1873 = vadd.f32 %v1859, %v1872
      %v1874 = vpop.f32.mrf.mxu0
      %v1875 = vadd.f32 %v1861, %v1874
      %1876 = vdwg.mxu0
      %1877 = vmatpush.bf16.msra.mxu0 %v1372
      %1878 = vmatpush.bf16.msra.mxu0 %v1368
      %1879 = vmatpush.bf16.msra.mxu0 %v1364
      %1880 = vmatpush.bf16.msra.mxu0 %v1360
      %1881 = vmatpush.bf16.msra.mxu0 %v1356
      %1882 = vmatpush.bf16.msra.mxu0 %v1352
      %1883 = vmatpush.bf16.msra.mxu0 %v1348
      %1884 = vmatpush.bf16.msra.mxu0 %v1344
      %1885 = vmatmul.bf16.gmra.mxu0 %v404
      %v1886 = vpop.f32.mrf.mxu0
      %v1887 = vadd.f32 %v1873, %v1886
      %v1888 = vpop.f32.mrf.mxu0
      %v1889 = vadd.f32 %v1875, %v1888
      %1890 = vdwg.mxu0
      %1891 = vmatpush.bf16.msra.mxu0 %v1404
      %1892 = vmatpush.bf16.msra.mxu0 %v1400
      %1893 = vmatpush.bf16.msra.mxu0 %v1396
      %1894 = vmatpush.bf16.msra.mxu0 %v1392
      %1895 = vmatpush.bf16.msra.mxu0 %v1388
      %1896 = vmatpush.bf16.msra.mxu0 %v1384
      %1897 = vmatpush.bf16.msra.mxu0 %v1380
      %1898 = vmatpush.bf16.msra.mxu0 %v1376
      %1899 = vmatmul.bf16.gmra.mxu0 %v405
      %v1900 = vpop.f32.mrf.mxu0
      %v1901 = vadd.f32 %v1887, %v1900
      %v1902 = vpop.f32.mrf.mxu0
      %v1903 = vadd.f32 %v1889, %v1902
      %1904 = vdwg.mxu0
      %1905 = vmatpush.bf16.msra.mxu0 %v1436
      %1906 = vmatpush.bf16.msra.mxu0 %v1432
      %1907 = vmatpush.bf16.msra.mxu0 %v1428
      %1908 = vmatpush.bf16.msra.mxu0 %v1424
      %1909 = vmatpush.bf16.msra.mxu0 %v1420
      %1910 = vmatpush.bf16.msra.mxu0 %v1416
      %1911 = vmatpush.bf16.msra.mxu0 %v1412
      %1912 = vmatpush.bf16.msra.mxu0 %v1408
      %1913 = vmatmul.bf16.gmra.mxu0 %v406
      %v1914 = vpop.f32.mrf.mxu0
      %v1915 = vadd.f32 %v1901, %v1914
      %v1916 = vpop.f32.mrf.mxu0
      %v1917 = vadd.f32 %v1903, %v1916
      %1918 = vdwg.mxu0
      %1919 = vmatpush.bf16.msra.mxu0 %v1213
      %1920 = vmatpush.bf16.msra.mxu0 %v1209
      %1921 = vmatpush.bf16.msra.mxu0 %v1205
      %1922 = vmatpush.bf16.msra.mxu0 %v1201
      %1923 = vmatpush.bf16.msra.mxu0 %v1197
      %1924 = vmatpush.bf16.msra.mxu0 %v1193
      %1925 = vmatpush.bf16.msra.mxu0 %v1189
      %1926 = vmatpush.bf16.msra.mxu0 %v1185
      %1927 = vmatmul.bf16.gmra.mxu0 %v399
      %v1928 = vpop.f32.mrf.mxu0
      %v1929 = vadd.f32 %v369, %v1928
      %v1930 = vpop.f32.mrf.mxu0
      %v1931 = vadd.f32 %v369, %v1930
      %1932 = vdwg.mxu0
      %1933 = vmatpush.bf16.msra.mxu0 %v1245
      %1934 = vmatpush.bf16.msra.mxu0 %v1241
      %1935 = vmatpush.bf16.msra.mxu0 %v1237
      %1936 = vmatpush.bf16.msra.mxu0 %v1233
      %1937 = vmatpush.bf16.msra.mxu0 %v1229
      %1938 = vmatpush.bf16.msra.mxu0 %v1225
      %1939 = vmatpush.bf16.msra.mxu0 %v1221
      %1940 = vmatpush.bf16.msra.mxu0 %v1217
      %1941 = vmatmul.bf16.gmra.mxu0 %v400
      %v1942 = vpop.f32.mrf.mxu0
      %v1943 = vadd.f32 %v1929, %v1942
      %v1944 = vpop.f32.mrf.mxu0
      %v1945 = vadd.f32 %v1931, %v1944
      %1946 = vdwg.mxu0
      %1947 = vmatpush.bf16.msra.mxu0 %v1277
      %1948 = vmatpush.bf16.msra.mxu0 %v1273
      %1949 = vmatpush.bf16.msra.mxu0 %v1269
      %1950 = vmatpush.bf16.msra.mxu0 %v1265
      %1951 = vmatpush.bf16.msra.mxu0 %v1261
      %1952 = vmatpush.bf16.msra.mxu0 %v1257
      %1953 = vmatpush.bf16.msra.mxu0 %v1253
      %1954 = vmatpush.bf16.msra.mxu0 %v1249
      %1955 = vmatmul.bf16.gmra.mxu0 %v401
      %v1956 = vpop.f32.mrf.mxu0
      %v1957 = vadd.f32 %v1943, %v1956
      %v1958 = vpop.f32.mrf.mxu0
      %v1959 = vadd.f32 %v1945, %v1958
      %1960 = vdwg.mxu0
      %1961 = vmatpush.bf16.msra.mxu0 %v1309
      %1962 = vmatpush.bf16.msra.mxu0 %v1305
      %1963 = vmatpush.bf16.msra.mxu0 %v1301
      %1964 = vmatpush.bf16.msra.mxu0 %v1297
      %1965 = vmatpush.bf16.msra.mxu0 %v1293
      %1966 = vmatpush.bf16.msra.mxu0 %v1289
      %1967 = vmatpush.bf16.msra.mxu0 %v1285
      %1968 = vmatpush.bf16.msra.mxu0 %v1281
      %1969 = vmatmul.bf16.gmra.mxu0 %v402
      %v1970 = vpop.f32.mrf.mxu0
      %v1971 = vadd.f32 %v1957, %v1970
      %v1972 = vpop.f32.mrf.mxu0
      %v1973 = vadd.f32 %v1959, %v1972
      %1974 = vdwg.mxu0
      %1975 = vmatpush.bf16.msra.mxu0 %v1341
      %1976 = vmatpush.bf16.msra.mxu0 %v1337
      %1977 = vmatpush.bf16.msra.mxu0 %v1333
      %1978 = vmatpush.bf16.msra.mxu0 %v1329
      %1979 = vmatpush.bf16.msra.mxu0 %v1325
      %1980 = vmatpush.bf16.msra.mxu0 %v1321
      %1981 = vmatpush.bf16.msra.mxu0 %v1317
      %1982 = vmatpush.bf16.msra.mxu0 %v1313
      %1983 = vmatmul.bf16.gmra.mxu0 %v403
      %v1984 = vpop.f32.mrf.mxu0
      %v1985 = vadd.f32 %v1971, %v1984
      %v1986 = vpop.f32.mrf.mxu0
      %v1987 = vadd.f32 %v1973, %v1986
      %1988 = vdwg.mxu0
      %1989 = vmatpush.bf16.msra.mxu0 %v1373
      %1990 = vmatpush.bf16.msra.mxu0 %v1369
      %1991 = vmatpush.bf16.msra.mxu0 %v1365
      %1992 = vmatpush.bf16.msra.mxu0 %v1361
      %1993 = vmatpush.bf16.msra.mxu0 %v1357
      %1994 = vmatpush.bf16.msra.mxu0 %v1353
      %1995 = vmatpush.bf16.msra.mxu0 %v1349
      %1996 = vmatpush.bf16.msra.mxu0 %v1345
      %1997 = vmatmul.bf16.gmra.mxu0 %v404
      %v1998 = vpop.f32.mrf.mxu0
      %v1999 = vadd.f32 %v1985, %v1998
      %v2000 = vpop.f32.mrf.mxu0
      %v2001 = vadd.f32 %v1987, %v2000
      %2002 = vdwg.mxu0
      %2003 = vmatpush.bf16.msra.mxu0 %v1405
      %2004 = vmatpush.bf16.msra.mxu0 %v1401
      %2005 = vmatpush.bf16.msra.mxu0 %v1397
      %2006 = vmatpush.bf16.msra.mxu0 %v1393
      %2007 = vmatpush.bf16.msra.mxu0 %v1389
      %2008 = vmatpush.bf16.msra.mxu0 %v1385
      %2009 = vmatpush.bf16.msra.mxu0 %v1381
      %2010 = vmatpush.bf16.msra.mxu0 %v1377
      %2011 = vmatmul.bf16.gmra.mxu0 %v405
      %v2012 = vpop.f32.mrf.mxu0
      %v2013 = vadd.f32 %v1999, %v2012
      %v2014 = vpop.f32.mrf.mxu0
      %v2015 = vadd.f32 %v2001, %v2014
      %2016 = vdwg.mxu0
      %2017 = vmatpush.bf16.msra.mxu0 %v1437
      %2018 = vmatpush.bf16.msra.mxu0 %v1433
      %2019 = vmatpush.bf16.msra.mxu0 %v1429
      %2020 = vmatpush.bf16.msra.mxu0 %v1425
      %2021 = vmatpush.bf16.msra.mxu0 %v1421
      %2022 = vmatpush.bf16.msra.mxu0 %v1417
      %2023 = vmatpush.bf16.msra.mxu0 %v1413
      %2024 = vmatpush.bf16.msra.mxu0 %v1409
      %2025 = vmatmul.bf16.gmra.mxu0 %v406
      %v2026 = vpop.f32.mrf.mxu0
      %v2027 = vadd.f32 %v2013, %v2026
      %v2028 = vpop.f32.mrf.mxu0
      %v2029 = vadd.f32 %v2015, %v2028
      %2030 = vdwg.mxu0
      %2031 = vmatpush.bf16.msra.mxu0 %v1214
      %2032 = vmatpush.bf16.msra.mxu0 %v1210
      %2033 = vmatpush.bf16.msra.mxu0 %v1206
      %2034 = vmatpush.bf16.msra.mxu0 %v1202
      %2035 = vmatpush.bf16.msra.mxu0 %v1198
      %2036 = vmatpush.bf16.msra.mxu0 %v1194
      %2037 = vmatpush.bf16.msra.mxu0 %v1190
      %2038 = vmatpush.bf16.msra.mxu0 %v1186
      %2039 = vmatmul.bf16.gmra.mxu0 %v399
      %v2040 = vpop.f32.mrf.mxu0
      %v2041 = vadd.f32 %v370, %v2040
      %v2042 = vpop.f32.mrf.mxu0
      %v2043 = vadd.f32 %v370, %v2042
      %2044 = vdwg.mxu0
      %2045 = vmatpush.bf16.msra.mxu0 %v1246
      %2046 = vmatpush.bf16.msra.mxu0 %v1242
      %2047 = vmatpush.bf16.msra.mxu0 %v1238
      %2048 = vmatpush.bf16.msra.mxu0 %v1234
      %2049 = vmatpush.bf16.msra.mxu0 %v1230
      %2050 = vmatpush.bf16.msra.mxu0 %v1226
      %2051 = vmatpush.bf16.msra.mxu0 %v1222
      %2052 = vmatpush.bf16.msra.mxu0 %v1218
      %2053 = vmatmul.bf16.gmra.mxu0 %v400
      %v2054 = vpop.f32.mrf.mxu0
      %v2055 = vadd.f32 %v2041, %v2054
      %v2056 = vpop.f32.mrf.mxu0
      %v2057 = vadd.f32 %v2043, %v2056
      %2058 = vdwg.mxu0
      %2059 = vmatpush.bf16.msra.mxu0 %v1278
      %2060 = vmatpush.bf16.msra.mxu0 %v1274
      %2061 = vmatpush.bf16.msra.mxu0 %v1270
      %2062 = vmatpush.bf16.msra.mxu0 %v1266
      %2063 = vmatpush.bf16.msra.mxu0 %v1262
      %2064 = vmatpush.bf16.msra.mxu0 %v1258
      %2065 = vmatpush.bf16.msra.mxu0 %v1254
      %2066 = vmatpush.bf16.msra.mxu0 %v1250
      %2067 = vmatmul.bf16.gmra.mxu0 %v401
      %v2068 = vpop.f32.mrf.mxu0
      %v2069 = vadd.f32 %v2055, %v2068
      %v2070 = vpop.f32.mrf.mxu0
      %v2071 = vadd.f32 %v2057, %v2070
      %2072 = vdwg.mxu0
      %2073 = vmatpush.bf16.msra.mxu0 %v1310
      %2074 = vmatpush.bf16.msra.mxu0 %v1306
      %2075 = vmatpush.bf16.msra.mxu0 %v1302
      %2076 = vmatpush.bf16.msra.mxu0 %v1298
      %2077 = vmatpush.bf16.msra.mxu0 %v1294
      %2078 = vmatpush.bf16.msra.mxu0 %v1290
      %2079 = vmatpush.bf16.msra.mxu0 %v1286
      %2080 = vmatpush.bf16.msra.mxu0 %v1282
      %2081 = vmatmul.bf16.gmra.mxu0 %v402
      %v2082 = vpop.f32.mrf.mxu0
      %v2083 = vadd.f32 %v2069, %v2082
      %v2084 = vpop.f32.mrf.mxu0
      %v2085 = vadd.f32 %v2071, %v2084
      %2086 = vdwg.mxu0
      %2087 = vmatpush.bf16.msra.mxu0 %v1342
      %2088 = vmatpush.bf16.msra.mxu0 %v1338
      %2089 = vmatpush.bf16.msra.mxu0 %v1334
      %2090 = vmatpush.bf16.msra.mxu0 %v1330
      %2091 = vmatpush.bf16.msra.mxu0 %v1326
      %2092 = vmatpush.bf16.msra.mxu0 %v1322
      %2093 = vmatpush.bf16.msra.mxu0 %v1318
      %2094 = vmatpush.bf16.msra.mxu0 %v1314
      %2095 = vmatmul.bf16.gmra.mxu0 %v403
      %v2096 = vpop.f32.mrf.mxu0
      %v2097 = vadd.f32 %v2083, %v2096
      %v2098 = vpop.f32.mrf.mxu0
      %v2099 = vadd.f32 %v2085, %v2098
      %2100 = vdwg.mxu0
      %2101 = vmatpush.bf16.msra.mxu0 %v1374
      %2102 = vmatpush.bf16.msra.mxu0 %v1370
      %2103 = vmatpush.bf16.msra.mxu0 %v1366
      %2104 = vmatpush.bf16.msra.mxu0 %v1362
      %2105 = vmatpush.bf16.msra.mxu0 %v1358
      %2106 = vmatpush.bf16.msra.mxu0 %v1354
      %2107 = vmatpush.bf16.msra.mxu0 %v1350
      %2108 = vmatpush.bf16.msra.mxu0 %v1346
      %2109 = vmatmul.bf16.gmra.mxu0 %v404
      %v2110 = vpop.f32.mrf.mxu0
      %v2111 = vadd.f32 %v2097, %v2110
      %v2112 = vpop.f32.mrf.mxu0
      %v2113 = vadd.f32 %v2099, %v2112
      %2114 = vdwg.mxu0
      %2115 = vmatpush.bf16.msra.mxu0 %v1406
      %2116 = vmatpush.bf16.msra.mxu0 %v1402
      %2117 = vmatpush.bf16.msra.mxu0 %v1398
      %2118 = vmatpush.bf16.msra.mxu0 %v1394
      %2119 = vmatpush.bf16.msra.mxu0 %v1390
      %2120 = vmatpush.bf16.msra.mxu0 %v1386
      %2121 = vmatpush.bf16.msra.mxu0 %v1382
      %2122 = vmatpush.bf16.msra.mxu0 %v1378
      %2123 = vmatmul.bf16.gmra.mxu0 %v405
      %v2124 = vpop.f32.mrf.mxu0
      %v2125 = vadd.f32 %v2111, %v2124
      %v2126 = vpop.f32.mrf.mxu0
      %v2127 = vadd.f32 %v2113, %v2126
      %2128 = vdwg.mxu0
      %2129 = vmatpush.bf16.msra.mxu0 %v1438
      %2130 = vmatpush.bf16.msra.mxu0 %v1434
      %2131 = vmatpush.bf16.msra.mxu0 %v1430
      %2132 = vmatpush.bf16.msra.mxu0 %v1426
      %2133 = vmatpush.bf16.msra.mxu0 %v1422
      %2134 = vmatpush.bf16.msra.mxu0 %v1418
      %2135 = vmatpush.bf16.msra.mxu0 %v1414
      %2136 = vmatpush.bf16.msra.mxu0 %v1410
      %2137 = vmatmul.bf16.gmra.mxu0 %v406
      %v2138 = vpop.f32.mrf.mxu0
      %v2139 = vadd.f32 %v2125, %v2138
      %v2140 = vpop.f32.mrf.mxu0
      %v2141 = vadd.f32 %v2127, %v2140
      %2142 = vdwg.mxu0
      %v2143 = vmul.f32 %v1803, %v1803
      %v2144 = vmul.f32 %v1915, %v1915
      %v2145 = vmul.f32 %v2027, %v2027
      %v2146 = vmul.f32 %v2139, %v2139
      %v2147 = vmul.f32 %v1805, %v1805
      %v2148 = vmul.f32 %v1917, %v1917
      %v2149 = vmul.f32 %v2029, %v2029
      %v2150 = vmul.f32 %v2141, %v2141
      %v2151 = vadd.f32 %v2143, %v2144
      %v2152 = vadd.f32 %v2151, %v2145
      %v2153 = vadd.f32 %v2152, %v2146
      %2154 = vadd.xlane.f32.xlu0 %v2153
      %v2155 = vpop.xlane.xlu0 %2154
      %v2156 = vadd.f32 %v2147, %v2148
      %v2157 = vadd.f32 %v2156, %v2149
      %v2158 = vadd.f32 %v2157, %v2150
      %2159 = vadd.xlane.f32.xlu0 %v2158
      %v2160 = vpop.xlane.xlu0 %2159
      %v2161 = vrsqrt.pop %v2155
      %v2162 = vmul.f32 %v2161, %v2155
      %v2163 = vmul.f32 %v2162, %v2161
      %v2164 = vmul.f32 0.5, %v2163
      %v2165 = vsub.f32 1.5, %v2164
      %v2166 = vmul.f32 %v2161, %v2165
      %vm2167 = vweird.f32 %v2155
      %vm2168 = vweird.f32 %v2161
      %vm2169 = vmor %vm2167, %vm2168
      %v2170 = vsel %vm2169, %v2161, %v2166
      %v2171 = vrsqrt.pop %v2160
      %v2172 = vmul.f32 %v2171, %v2160
      %v2173 = vmul.f32 %v2172, %v2171
      %v2174 = vmul.f32 0.5, %v2173
      %v2175 = vsub.f32 1.5, %v2174
      %v2176 = vmul.f32 %v2171, %v2175
      %vm2177 = vweird.f32 %v2160
      %vm2178 = vweird.f32 %v2171
      %vm2179 = vmor %vm2177, %vm2178
      %v2180 = vsel %vm2179, %v2171, %v2176
      %v2181 = vmul.f32 %v1803, %v2170
      %v2182 = vmul.f32 %v1915, %v2170
      %v2183 = vmul.f32 %v2027, %v2170
      %v2184 = vmul.f32 %v2139, %v2170
      %v2185 = vmul.f32 %v1805, %v2180
      %v2186 = vmul.f32 %v1917, %v2180
      %v2187 = vmul.f32 %v2029, %v2180
      %v2188 = vmul.f32 %v2141, %v2180
      %v2189 = vld [vmem:[#allocation9] sm:$0xff]
      %v2190 = vld [vmem:[#allocation9 + $0x8] sm:$0xff]
      %v2191 = vld [vmem:[#allocation9 + $0x10] sm:$0xff]
      %v2192 = vld [vmem:[#allocation9 + $0x18] sm:$0xff]
      %v2193 = vunpack.c.l.bf16 %v2189
      %v2194 = vunpack.c.h.bf16 %v2189
      %v2195 = vunpack.c.l.bf16 %v2190
      %v2196 = vunpack.c.h.bf16 %v2190
      %v2197 = vunpack.c.l.bf16 %v2191
      %v2198 = vunpack.c.h.bf16 %v2191
      %v2199 = vunpack.c.l.bf16 %v2192
      %v2200 = vunpack.c.h.bf16 %v2192
      %v2201 = vsub.f32 %v2181, %v2193
      %v2202 = vsub.f32 %v2182, %v2194
      %v2203 = vsub.f32 %v2183, %v2195
      %v2204 = vsub.f32 %v2184, %v2196
      %v2205 = vsub.f32 %v2185, %v2197
      %v2206 = vsub.f32 %v2186, %v2198
      %v2207 = vsub.f32 %v2187, %v2199
      %v2208 = vsub.f32 %v2188, %v2200
      %v2209 = vmul.f32 %v2201, %v2201
      %v2210 = vmul.f32 %v2202, %v2202
      %v2211 = vmul.f32 %v2203, %v2203
      %v2212 = vmul.f32 %v2204, %v2204
      %v2213 = vmul.f32 %v2205, %v2205
      %v2214 = vmul.f32 %v2206, %v2206
      %v2215 = vmul.f32 %v2207, %v2207
      %v2216 = vmul.f32 %v2208, %v2208
      %v2217 = vadd.f32 %v2209, %v2210
      %v2218 = vadd.f32 %v2217, %v2211
      %v2219 = vadd.f32 %v2218, %v2212
      %2220 = vadd.xlane.f32.xlu0 %v2219
      %v2221 = vpop.xlane.xlu0 %2220
      %v2222 = vadd.f32 %v2213, %v2214
      %v2223 = vadd.f32 %v2222, %v2215
      %v2224 = vadd.f32 %v2223, %v2216
      %2225 = vadd.xlane.f32.xlu0 %v2224
      %v2226 = vpop.xlane.xlu0 %2225
      %v2227 = vrsqrt.pop %v2221
      %v2228 = vmul.f32 %v2227, %v2221
      %v2229 = vmul.f32 %v2228, %v2227
      %v2230 = vmul.f32 0.5, %v2229
      %v2231 = vsub.f32 1.5, %v2230
      %v2232 = vmul.f32 %v2227, %v2231
      %vm2233 = vweird.f32 %v2221
      %vm2234 = vweird.f32 %v2227
      %vm2235 = vmor %vm2233, %vm2234
      %v2236 = vsel %vm2235, %v2227, %v2232
      %v2237 = vrsqrt.pop %v2226
      %v2238 = vmul.f32 %v2237, %v2226
      %v2239 = vmul.f32 %v2238, %v2237
      %v2240 = vmul.f32 0.5, %v2239
      %v2241 = vsub.f32 1.5, %v2240
      %v2242 = vmul.f32 %v2237, %v2241
      %vm2243 = vweird.f32 %v2226
      %vm2244 = vweird.f32 %v2237
      %vm2245 = vmor %vm2243, %vm2244
      %v2246 = vsel %vm2245, %v2237, %v2242
      %v2247 = vmul.f32 %v2201, %v2236
      %v2248 = vmul.f32 %v2202, %v2236
      %v2249 = vmul.f32 %v2203, %v2236
      %v2250 = vmul.f32 %v2204, %v2236
      %v2251 = vmul.f32 %v2205, %v2246
      %v2252 = vmul.f32 %v2206, %v2246
      %v2253 = vmul.f32 %v2207, %v2246
      %v2254 = vmul.f32 %v2208, %v2246
      %v2255 = vpack.c.bf16 %v2248, %v2247
      %v2256 = vpack.c.bf16 %v2250, %v2249
      %v2257 = vpack.c.bf16 %v2252, %v2251
      %v2258 = vpack.c.bf16 %v2254, %v2253
      %2259 = vst [vmem:[#allocation2] sm:$0xff] %v2255
      %2260 = vst [vmem:[#allocation2 + $0x8] sm:$0xff] %v2256
      %2261 = vst [vmem:[#allocation2 + $0x10] sm:$0xff] %v2257
      %2262 = vst [vmem:[#allocation2 + $0x18] sm:$0xff] %v2258
    $region45: #{tpu_custom_call.1} parent=1 // pred_fallthru
      _
    %v2263 = vld [vmem:[#allocation2] sm:$0xff]
    %v2264 = vld [vmem:[#allocation2 + $0x8] sm:$0xff]
    %v2265 = vld [vmem:[#allocation2 + $0x10] sm:$0xff]
    %v2266 = vld [vmem:[#allocation2 + $0x18] sm:$0xff]
    %v2267 = vld [vmem:[#allocation11] sm:$0xf]
    %v2268 = vld [vmem:[#allocation11 + $0x4] sm:$0xf]
    %v2269 = vld [vmem:[#allocation11 + $0x8] sm:$0xf]
    %v2270 = vld [vmem:[#allocation11 + $0xc] sm:$0xf]
    %v2271 = vld [vmem:[#allocation11 + $0x10] sm:$0xf]
    %v2272 = vld [vmem:[#allocation11 + $0x14] sm:$0xf]
    %v2273 = vld [vmem:[#allocation11 + $0x18] sm:$0xf]
    %v2274 = vld [vmem:[#allocation11 + $0x1c] sm:$0xf]
    %v2275 = vld [vmem:[#allocation11 + $0x20] sm:$0xf]
    %v2276 = vld [vmem:[#allocation11 + $0x24] sm:$0xf]
    %v2277 = vld [vmem:[#allocation11 + $0x28] sm:$0xf]
    %v2278 = vld [vmem:[#allocation11 + $0x2c] sm:$0xf]
    %v2279 = vld [vmem:[#allocation11 + $0x30] sm:$0xf]
    %v2280 = vld [vmem:[#allocation11 + $0x34] sm:$0xf]
    %v2281 = vld [vmem:[#allocation11 + $0x38] sm:$0xf]
    %v2282 = vld [vmem:[#allocation11 + $0x3c] sm:$0xf]
    %v2283 = vld [vmem:[#allocation11 + $0x40] sm:$0xf]
    %v2284 = vld [vmem:[#allocation11 + $0x44] sm:$0xf]
    %v2285 = vld [vmem:[#allocation11 + $0x48] sm:$0xf]
    %v2286 = vld [vmem:[#allocation11 + $0x4c] sm:$0xf]
    %v2287 = vld [vmem:[#allocation11 + $0x50] sm:$0xf]
    %v2288 = vld [vmem:[#allocation11 + $0x54] sm:$0xf]
    %v2289 = vld [vmem:[#allocation11 + $0x58] sm:$0xf]
    %v2290 = vld [vmem:[#allocation11 + $0x5c] sm:$0xf]
    %v2291 = vld [vmem:[#allocation11 + $0x60] sm:$0xf]
    %v2292 = vld [vmem:[#allocation11 + $0x64] sm:$0xf]
    %v2293 = vld [vmem:[#allocation11 + $0x68] sm:$0xf]
    %v2294 = vld [vmem:[#allocation11 + $0x6c] sm:$0xf]
    %v2295 = vld [vmem:[#allocation11 + $0x70] sm:$0xf]
    %v2296 = vld [vmem:[#allocation11 + $0x74] sm:$0xf]
    %v2297 = vld [vmem:[#allocation11 + $0x78] sm:$0xf]
    %v2298 = vld [vmem:[#allocation11 + $0x7c] sm:$0xf]
    %v2299 = vld [vmem:[#allocation11 + $0x80] sm:$0xf]
    %v2300 = vld [vmem:[#allocation11 + $0x84] sm:$0xf]
    %v2301 = vld [vmem:[#allocation11 + $0x88] sm:$0xf]
    %v2302 = vld [vmem:[#allocation11 + $0x8c] sm:$0xf]
    %v2303 = vld [vmem:[#allocation11 + $0x90] sm:$0xf]
    %v2304 = vld [vmem:[#allocation11 + $0x94] sm:$0xf]
    %v2305 = vld [vmem:[#allocation11 + $0x98] sm:$0xf]
    %v2306 = vld [vmem:[#allocation11 + $0x9c] sm:$0xf]
    %v2307 = vld [vmem:[#allocation11 + $0xa0] sm:$0xf]
    %v2308 = vld [vmem:[#allocation11 + $0xa4] sm:$0xf]
    %v2309 = vld [vmem:[#allocation11 + $0xa8] sm:$0xf]
    %v2310 = vld [vmem:[#allocation11 + $0xac] sm:$0xf]
    %v2311 = vld [vmem:[#allocation11 + $0xb0] sm:$0xf]
    %v2312 = vld [vmem:[#allocation11 + $0xb4] sm:$0xf]
    %v2313 = vld [vmem:[#allocation11 + $0xb8] sm:$0xf]
    %v2314 = vld [vmem:[#allocation11 + $0xbc] sm:$0xf]
    %v2315 = vld [vmem:[#allocation11 + $0xc0] sm:$0xf]
    %v2316 = vld [vmem:[#allocation11 + $0xc4] sm:$0xf]
    %v2317 = vld [vmem:[#allocation11 + $0xc8] sm:$0xf]
    %v2318 = vld [vmem:[#allocation11 + $0xcc] sm:$0xf]
    %v2319 = vld [vmem:[#allocation11 + $0xd0] sm:$0xf]
    %v2320 = vld [vmem:[#allocation11 + $0xd4] sm:$0xf]
    %v2321 = vld [vmem:[#allocation11 + $0xd8] sm:$0xf]
    %v2322 = vld [vmem:[#allocation11 + $0xdc] sm:$0xf]
    %v2323 = vld [vmem:[#allocation11 + $0xe0] sm:$0xf]
    %v2324 = vld [vmem:[#allocation11 + $0xe4] sm:$0xf]
    %v2325 = vld [vmem:[#allocation11 + $0xe8] sm:$0xf]
    %v2326 = vld [vmem:[#allocation11 + $0xec] sm:$0xf]
    %v2327 = vld [vmem:[#allocation11 + $0xf0] sm:$0xf]
    %v2328 = vld [vmem:[#allocation11 + $0xf4] sm:$0xf]
    %v2329 = vld [vmem:[#allocation11 + $0xf8] sm:$0xf]
    %v2330 = vld [vmem:[#allocation11 + $0xfc] sm:$0xf]
    %v2335 = vunpack.c.l.b16 %v2263
    %v2336 = vunpack.c.h.b16 %v2263
    %v2337 = vunpack.c.l.b16 %v2264
    %v2338 = vunpack.c.h.b16 %v2264
    %v2339 = vunpack.c.l.b16 %v2265
    %v2340 = vunpack.c.h.b16 %v2265
    %v2341 = vunpack.c.l.b16 %v2266
    %v2342 = vunpack.c.h.b16 %v2266
    %v2343 = vpack.c.b16 %v2339, %v2335
    %v2344 = vpack.c.b16 %v2340, %v2336
    %v2345 = vpack.c.b16 %v2341, %v2337
    %v2346 = vpack.c.b16 %v2342, %v2338
    %v2415 = vunpack.c.l.b16 %v2267
    %v2416 = vunpack.c.l.b16 %v2268
    %v2417 = vunpack.c.l.b16 %v2269
    %v2418 = vunpack.c.l.b16 %v2270
    %v2419 = vunpack.c.l.b16 %v2271
    %v2420 = vunpack.c.l.b16 %v2272
    %v2421 = vunpack.c.l.b16 %v2273
    %v2422 = vunpack.c.l.b16 %v2274
    %v2423 = vunpack.c.l.b16 %v2275
    %v2424 = vunpack.c.l.b16 %v2276
    %v2425 = vunpack.c.l.b16 %v2277
    %v2426 = vunpack.c.l.b16 %v2278
    %v2427 = vunpack.c.l.b16 %v2279
    %v2428 = vunpack.c.l.b16 %v2280
    %v2429 = vunpack.c.l.b16 %v2281
    %v2430 = vunpack.c.l.b16 %v2282
    %v2431 = vunpack.c.l.b16 %v2283
    %v2432 = vunpack.c.l.b16 %v2284
    %v2433 = vunpack.c.l.b16 %v2285
    %v2434 = vunpack.c.l.b16 %v2286
    %v2435 = vunpack.c.l.b16 %v2287
    %v2436 = vunpack.c.l.b16 %v2288
    %v2437 = vunpack.c.l.b16 %v2289
    %v2438 = vunpack.c.l.b16 %v2290
    %v2439 = vunpack.c.l.b16 %v2291
    %v2440 = vunpack.c.l.b16 %v2292
    %v2441 = vunpack.c.l.b16 %v2293
    %v2442 = vunpack.c.l.b16 %v2294
    %v2443 = vunpack.c.l.b16 %v2295
    %v2444 = vunpack.c.l.b16 %v2296
    %v2445 = vunpack.c.l.b16 %v2297
    %v2446 = vunpack.c.l.b16 %v2298
    %v2447 = vunpack.c.l.b16 %v2299
    %v2448 = vunpack.c.l.b16 %v2300
    %v2449 = vunpack.c.l.b16 %v2301
    %v2450 = vunpack.c.l.b16 %v2302
    %v2451 = vunpack.c.l.b16 %v2303
    %v2452 = vunpack.c.l.b16 %v2304
    %v2453 = vunpack.c.l.b16 %v2305
    %v2454 = vunpack.c.l.b16 %v2306
    %v2455 = vunpack.c.l.b16 %v2307
    %v2456 = vunpack.c.l.b16 %v2308
    %v2457 = vunpack.c.l.b16 %v2309
    %v2458 = vunpack.c.l.b16 %v2310
    %v2459 = vunpack.c.l.b16 %v2311
    %v2460 = vunpack.c.l.b16 %v2312
    %v2461 = vunpack.c.l.b16 %v2313
    %v2462 = vunpack.c.l.b16 %v2314
    %v2463 = vunpack.c.l.b16 %v2315
    %v2464 = vunpack.c.l.b16 %v2316
    %v2465 = vunpack.c.l.b16 %v2317
    %v2466 = vunpack.c.l.b16 %v2318
    %v2467 = vunpack.c.l.b16 %v2319
    %v2468 = vunpack.c.l.b16 %v2320
    %v2469 = vunpack.c.l.b16 %v2321
    %v2470 = vunpack.c.l.b16 %v2322
    %v2471 = vunpack.c.l.b16 %v2323
    %v2472 = vunpack.c.l.b16 %v2324
    %v2473 = vunpack.c.l.b16 %v2325
    %v2474 = vunpack.c.l.b16 %v2326
    %v2475 = vunpack.c.l.b16 %v2327
    %v2476 = vunpack.c.l.b16 %v2328
    %v2477 = vunpack.c.l.b16 %v2329
    %v2478 = vunpack.c.l.b16 %v2330
    %v2479 = vpack.c.b16 %v2416, %v2415
    %v2480 = vpack.c.b16 %v2418, %v2417
    %v2481 = vpack.c.b16 %v2420, %v2419
    %v2482 = vpack.c.b16 %v2422, %v2421
    %v2483 = vpack.c.b16 %v2424, %v2423
    %v2484 = vpack.c.b16 %v2426, %v2425
    %v2485 = vpack.c.b16 %v2428, %v2427
    %v2486 = vpack.c.b16 %v2430, %v2429
    %v2487 = vpack.c.b16 %v2432, %v2431
    %v2488 = vpack.c.b16 %v2434, %v2433
    %v2489 = vpack.c.b16 %v2436, %v2435
    %v2490 = vpack.c.b16 %v2438, %v2437
    %v2491 = vpack.c.b16 %v2440, %v2439
    %v2492 = vpack.c.b16 %v2442, %v2441
    %v2493 = vpack.c.b16 %v2444, %v2443
    %v2494 = vpack.c.b16 %v2446, %v2445
    %v2495 = vpack.c.b16 %v2448, %v2447
    %v2496 = vpack.c.b16 %v2450, %v2449
    %v2497 = vpack.c.b16 %v2452, %v2451
    %v2498 = vpack.c.b16 %v2454, %v2453
    %v2499 = vpack.c.b16 %v2456, %v2455
    %v2500 = vpack.c.b16 %v2458, %v2457
    %v2501 = vpack.c.b16 %v2460, %v2459
    %v2502 = vpack.c.b16 %v2462, %v2461
    %v2503 = vpack.c.b16 %v2464, %v2463
    %v2504 = vpack.c.b16 %v2466, %v2465
    %v2505 = vpack.c.b16 %v2468, %v2467
    %v2506 = vpack.c.b16 %v2470, %v2469
    %v2507 = vpack.c.b16 %v2472, %v2471
    %v2508 = vpack.c.b16 %v2474, %v2473
    %v2509 = vpack.c.b16 %v2476, %v2475
    %v2510 = vpack.c.b16 %v2478, %v2477
    %2543 = vmatpush.bf16.msra.mxu0 %v2486
    %2544 = vmatpush.bf16.msra.mxu0 %v2485
    %2545 = vmatpush.bf16.msra.mxu0 %v2484
    %2546 = vmatpush.bf16.msra.mxu0 %v2483
    %2547 = vmatpush.bf16.msra.mxu0 %v2482
    %2548 = vmatpush.bf16.msra.mxu0 %v2481
    %2549 = vmatpush.bf16.msra.mxu0 %v2480
    %2550 = vmatpush.bf16.msra.mxu0 %v2479
    %2551 = vmatmul.bf16.gmra.mxu0 %v2343
    %v2552 = vpop.f32.mrf.mxu0
    %v2553 = vadd.f32 0.0, %v2552
    %v2554 = vpop.f32.mrf.mxu0
    %v2555 = vadd.f32 0.0, %v2554
    %2556 = vdwg.mxu0
    %2557 = vmatpush.bf16.msra.mxu0 %v2494
    %2558 = vmatpush.bf16.msra.mxu0 %v2493
    %2559 = vmatpush.bf16.msra.mxu0 %v2492
    %2560 = vmatpush.bf16.msra.mxu0 %v2491
    %2561 = vmatpush.bf16.msra.mxu0 %v2490
    %2562 = vmatpush.bf16.msra.mxu0 %v2489
    %2563 = vmatpush.bf16.msra.mxu0 %v2488
    %2564 = vmatpush.bf16.msra.mxu0 %v2487
    %2565 = vmatmul.bf16.gmra.mxu0 %v2344
    %v2566 = vpop.f32.mrf.mxu0
    %v2567 = vadd.f32 %v2553, %v2566
    %v2568 = vpop.f32.mrf.mxu0
    %v2569 = vadd.f32 %v2555, %v2568
    %2570 = vdwg.mxu0
    %2571 = vmatpush.bf16.msra.mxu0 %v2502
    %2572 = vmatpush.bf16.msra.mxu0 %v2501
    %2573 = vmatpush.bf16.msra.mxu0 %v2500
    %2574 = vmatpush.bf16.msra.mxu0 %v2499
    %2575 = vmatpush.bf16.msra.mxu0 %v2498
    %2576 = vmatpush.bf16.msra.mxu0 %v2497
    %2577 = vmatpush.bf16.msra.mxu0 %v2496
    %2578 = vmatpush.bf16.msra.mxu0 %v2495
    %2579 = vmatmul.bf16.gmra.mxu0 %v2345
    %v2580 = vpop.f32.mrf.mxu0
    %v2581 = vadd.f32 %v2567, %v2580
    %v2582 = vpop.f32.mrf.mxu0
    %v2583 = vadd.f32 %v2569, %v2582
    %2584 = vdwg.mxu0
    %2585 = vmatpush.bf16.msra.mxu0 %v2510
    %2586 = vmatpush.bf16.msra.mxu0 %v2509
    %2587 = vmatpush.bf16.msra.mxu0 %v2508
    %2588 = vmatpush.bf16.msra.mxu0 %v2507
    %2589 = vmatpush.bf16.msra.mxu0 %v2506
    %2590 = vmatpush.bf16.msra.mxu0 %v2505
    %2591 = vmatpush.bf16.msra.mxu0 %v2504
    %2592 = vmatpush.bf16.msra.mxu0 %v2503
    %2593 = vmatmul.bf16.gmra.mxu0 %v2346
    %v2594 = vpop.f32.mrf.mxu0
    %v2595 = vadd.f32 %v2581, %v2594
    %v2596 = vpop.f32.mrf.mxu0
    %v2597 = vadd.f32 %v2583, %v2596
    %2598 = vdwg.mxu0
    %2599 = vst [vmem:[#allocation12] sm:$0xff] %v2595
    %2600 = vst [vmem:[#allocation12 + $0x8] sm:$0xff] %v2597
    // Predicated region
    $region46: #{tpu_custom_call.1} parent=1 // pred_check
      _
    $region47: #{tpu_custom_call.1} parent=1 // pred_check_branch
      %2602 = sbr.rel (0) target = $region49
    $region48: #{tpu_custom_call.1} parent=1 // pred_region
      %2604 = vsyncadd [#allocation5], 0
      %s2605 = sshll.u32 [#allocation12], 4
      %s2606 = int_to_ptr.vmem [resolvable:$true] %s2605
      %s2607 = sshll.u32 %s5, 4
      %s2608 = int_to_ptr.hbm [resolvable:$true] %s2607
      %2613 = dma.vmem_to_hbm [thread:$0]  %s2606, 256, %s2608, [#allocation5], 128, 128, 8
    $region49: #{tpu_custom_call.1} parent=1 // pred_fallthru
      _
    // Predicated region
    $region50: #{tpu_custom_call.1} parent=1 // pred_check
      _
    $region51: #{tpu_custom_call.1} parent=1 // pred_check_branch
      %2615 = sbr.rel (0) target = $region53
    $region52: #{tpu_custom_call.1} parent=1 // pred_region
      %2617 = dma.done [#allocation5], 256
    $region53: #{tpu_custom_call.1} parent=1 // pred_fallthru
      _
    %2618 = vsyncpa [#allocation4], 1
    %2619 = vsyncpa [#allocation7], 1
    %2620 = vsyncpa [#allocation10], 1
    %2621 = vsyncpa [#allocation5], 1

// kernel: tpu_custom_call.1
$region0: #{tpu_custom_call.1}
  #allocation0 [shape = 'u32[]', space=smem, size = 0x4, offset = 0x4, fixed_abs, tag = 'smem constant byte address 0x4 - core index']
  #allocation1 [shape = 'u32[72,128]{1,0:T(1,128)}', space=vmem, size = 0x9000, scoped, tag = 'internal scratch']
  #allocation2 [shape = 'bf16[16,512]{1,0:T(8,128)(2,1)}', space=vmem, size = 0x4000, scoped, tag = 'scratch operand']
  %s0 = inlined_call_operand.hbm [shape: bf16[16,1024], index: 0, kind: input, shape index: {}]
  %s1 = inlined_call_operand.hbm [shape: bf16[1024,512], index: 1, kind: input, shape index: {}]
  %s2 = inlined_call_operand.hbm [shape: f32[1,512], index: 2, kind: input, shape index: {}]
  %s3 = inlined_call_operand.hbm [shape: bf16[16,512], index: 3, kind: input, shape index: {}]
  %s4 = inlined_call_operand.hbm [shape: bf16[512,128], index: 4, kind: input, shape index: {}]
  %s5 = inlined_call_operand.hbm [shape: f32[16,128], index: 5, kind: output, shape index: {}]
  %s6 = sld [smem:[#allocation0]]
  $region54: #{tpu_custom_call.1} parent=0
    _
  %s8 = ssub.s32 1, %s6
  %s9 = scalar_select 0, %s8, %s6
  $region1: #{tpu_custom_call.1} parent=0
    #allocation3 [shape = 'u8[32768]{0}', space=vmem, size = 0x8000, scoped, tag = 'input window, operand 0, single buffered']
    #allocation4 [shape = 's32[1]{0}', space=sflag, size = 0x4, scoped, tag = 'scoped memory for tpu_custom_call.1']
    #allocation5 [shape = 's32[1]{0}', space=sflag, size = 0x4, scoped, tag = 'scoped memory for tpu_custom_call.1']
    #allocation6 [shape = 'u8[1048576]{0}', space=vmem, size = 0x100000, scoped, tag = 'input window, operand 1, single buffered']
    #allocation7 [shape = 's32[1]{0}', space=sflag, size = 0x4, scoped, tag = 'scoped memory for tpu_custom_call.1']
    #allocation8 [shape = 'u8[2048]{0}', space=vmem, size = 0x800, scoped, tag = 'input window, operand 2, single buffered']
    #allocation9 [shape = 'u8[16384]{0}', space=vmem, size = 0x4000, scoped, tag = 'input window, operand 3, single buffered']
    #allocation10 [shape = 's32[1]{0}', space=sflag, size = 0x4, scoped, tag = 'scoped memory for tpu_custom_call.1']
    #allocation11 [shape = 'u8[131072]{0}', space=vmem, size = 0x20000, scoped, tag = 'input window, operand 4, single buffered']
    #allocation12 [shape = 'u8[8192]{0}', space=vmem, size = 0x2000, scoped, tag = 'output window, operand 0, single buffered']
    %10 = vsyncpa [#allocation4], 0
    %11 = vsyncpa [#allocation7], 0
    %12 = vsyncpa [#allocation10], 0
    %13 = vsyncpa [#allocation5], 0
    // Predicated region
    $region2: #{tpu_custom_call.1} parent=1 // pred_check
      _
    $region3: #{tpu_custom_call.1} parent=1 // pred_check_branch
      %15 = sbr.rel (0) target = $region5
    $region4: #{tpu_custom_call.1} parent=1 // pred_region
      %17 = vsyncadd [#allocation4], 0
      %s18 = sshll.u32 %s0, 4
      %s19 = int_to_ptr.hbm [resolvable:$true] %s18
      %s20 = sshll.u32 [#allocation3], 4
      %s21 = int_to_ptr.vmem [resolvable:$true] %s20
      %26 = dma.hbm_to_vmem [thread:$0]  %s19, 1024, %s21, [#allocation4], 512, 512, 32
    $region5: #{tpu_custom_call.1} parent=1 // pred_fallthru
      _
    // Predicated region
    $region6: #{tpu_custom_call.1} parent=1 // pred_check
      _
    $region7: #{tpu_custom_call.1} parent=1 // pred_check_branch
      %28 = sbr.rel (0) target = $region9
    $region8: #{tpu_custom_call.1} parent=1 // pred_region
      %30 = vsyncadd [#allocation7], 0
      %s31 = sshll.u32 %s1, 4
      %s32 = int_to_ptr.hbm [resolvable:$true] %s31
      %s33 = sshll.u32 [#allocation6], 4
      %s34 = int_to_ptr.vmem [resolvable:$true] %s33
      %39 = dma.hbm_to_vmem [thread:$0]  %s32, 32768, %s34, [#allocation7], 256, 256, 16
    $region9: #{tpu_custom_call.1} parent=1 // pred_fallthru
      _
    // Predicated region
    $region10: #{tpu_custom_call.1} parent=1 // pred_check
      _
    $region11: #{tpu_custom_call.1} parent=1 // pred_check_branch
      %41 = sbr.rel (0) target = $region13
    $region12: #{tpu_custom_call.1} parent=1 // pred_region
      %43 = vsyncadd [#allocation7], 0
      %s45 = sshll.u32 %s2, 4
      %s46 = int_to_ptr.hbm [resolvable:$true] %s45
      %s47 = sshll.u32 [#allocation8], 4
      %s48 = int_to_ptr.vmem [resolvable:$true] %s47
      %50 = dma.hbm_to_vmem [thread:$0]  %s46, 64, %s48, [#allocation7]
    $region13: #{tpu_custom_call.1} parent=1 // pred_fallthru
      _
    // Predicated region
    $region14: #{tpu_custom_call.1} parent=1 // pred_check
      _
    $region15: #{tpu_custom_call.1} parent=1 // pred_check_branch
      %52 = sbr.rel (0) target = $region17
    $region16: #{tpu_custom_call.1} parent=1 // pred_region
      %54 = vsyncadd [#allocation10], 0
      %s55 = sshll.u32 %s3, 4
      %s56 = int_to_ptr.hbm [resolvable:$true] %s55
      %s57 = sshll.u32 [#allocation9], 4
      %s58 = int_to_ptr.vmem [resolvable:$true] %s57
      %63 = dma.hbm_to_vmem [thread:$0]  %s56, 512, %s58, [#allocation10], 256, 256, 16
    $region17: #{tpu_custom_call.1} parent=1 // pred_fallthru
      _
    // Predicated region
    $region18: #{tpu_custom_call.1} parent=1 // pred_check
      _
    $region19: #{tpu_custom_call.1} parent=1 // pred_check_branch
      %65 = sbr.rel (0) target = $region21
    $region20: #{tpu_custom_call.1} parent=1 // pred_region
      %67 = vsyncadd [#allocation10], 0
      %s68 = sshll.u32 %s4, 4
      %s69 = int_to_ptr.hbm [resolvable:$true] %s68
      %s70 = sshll.u32 [#allocation11], 4
      %s71 = int_to_ptr.vmem [resolvable:$true] %s70
      %76 = dma.hbm_to_vmem [thread:$0]  %s69, 4096, %s71, [#allocation10], 64, 64, 4
    $region21: #{tpu_custom_call.1} parent=1 // pred_fallthru
      _
    // Predicated region
    $region22: #{tpu_custom_call.1} parent=1 // pred_check
      _
    $region23: #{tpu_custom_call.1} parent=1 // pred_check_branch
      %78 = sbr.rel (0) target = $region25
    $region24: #{tpu_custom_call.1} parent=1 // pred_region
      %80 = dma.done [#allocation4], 1024
    $region25: #{tpu_custom_call.1} parent=1 // pred_fallthru
      _
    // Predicated region
    $region26: #{tpu_custom_call.1} parent=1 // pred_check
      _
    $region27: #{tpu_custom_call.1} parent=1 // pred_check_branch
      %82 = sbr.rel (0) target = $region29
    $region28: #{tpu_custom_call.1} parent=1 // pred_region
      %84 = dma.done [#allocation7], 32768
    $region29: #{tpu_custom_call.1} parent=1 // pred_fallthru
      _
    // Predicated region
    $region30: #{tpu_custom_call.1} parent=1 // pred_check
      _
    $region31: #{tpu_custom_call.1} parent=1 // pred_check_branch
      %86 = sbr.rel (0) target = $region33
    $region32: #{tpu_custom_call.1} parent=1 // pred_region
      %88 = dma.done [#allocation7], 64
    $region33: #{tpu_custom_call.1} parent=1 // pred_fallthru
      _
    // Predicated region
    $region34: #{tpu_custom_call.1} parent=1 // pred_check
      _
    $region35: #{tpu_custom_call.1} parent=1 // pred_check_branch
      %90 = sbr.rel (0) target = $region37
    $region36: #{tpu_custom_call.1} parent=1 // pred_region
      %92 = dma.done [#allocation10], 512
    $region37: #{tpu_custom_call.1} parent=1 // pred_fallthru
      _
    // Predicated region
    $region38: #{tpu_custom_call.1} parent=1 // pred_check
      _
    $region39: #{tpu_custom_call.1} parent=1 // pred_check_branch
      %94 = sbr.rel (0) target = $region41
    $region40: #{tpu_custom_call.1} parent=1 // pred_region
      %96 = dma.done [#allocation10], 4096
    $region41: #{tpu_custom_call.1} parent=1 // pred_fallthru
      _
    %p97 = scmp.eq.s32.totalorder 0, 0
    // Predicated region
    $region42: #{tpu_custom_call.1} parent=1 // pred_check
      %p98 = pneg %p97
    $region43: #{tpu_custom_call.1} parent=1 // pred_check_branch
      %100 = sbr.rel (%p98) target = $region45
    $region44: #{tpu_custom_call.1} parent=1 // pred_region
      %v101 = vld [vmem:[#allocation3] sm:$0xff]
      %v102 = vld [vmem:[#allocation3 + $0x8] sm:$0xff]
      %v103 = vld [vmem:[#allocation3 + $0x10] sm:$0xff]
      %v104 = vld [vmem:[#allocation3 + $0x18] sm:$0xff]
      %v105 = vld [vmem:[#allocation3 + $0x20] sm:$0xff]
      %v106 = vld [vmem:[#allocation3 + $0x28] sm:$0xff]
      %v107 = vld [vmem:[#allocation3 + $0x30] sm:$0xff]
      %v108 = vld [vmem:[#allocation3 + $0x38] sm:$0xff]
      %v109 = vld [vmem:[#allocation6] sm:$0xff]
      %v110 = vld [vmem:[#allocation6 + $0x8] sm:$0xff]
      %v111 = vld [vmem:[#allocation6 + $0x10] sm:$0xff]
      %v112 = vld [vmem:[#allocation6 + $0x18] sm:$0xff]
      %v113 = vld [vmem:[#allocation6 + $0x20] sm:$0xff]
      %v114 = vld [vmem:[#allocation6 + $0x28] sm:$0xff]
      %v115 = vld [vmem:[#allocation6 + $0x30] sm:$0xff]
      %v116 = vld [vmem:[#allocation6 + $0x38] sm:$0xff]
      %v117 = vld [vmem:[#allocation6 + $0x40] sm:$0xff]
      %v118 = vld [vmem:[#allocation6 + $0x48] sm:$0xff]
      %v119 = vld [vmem:[#allocation6 + $0x50] sm:$0xff]
      %v120 = vld [vmem:[#allocation6 + $0x58] sm:$0xff]
      %v121 = vld [vmem:[#allocation6 + $0x60] sm:$0xff]
      %v122 = vld [vmem:[#allocation6 + $0x68] sm:$0xff]
      %v123 = vld [vmem:[#allocation6 + $0x70] sm:$0xff]
      %v124 = vld [vmem:[#allocation6 + $0x78] sm:$0xff]
      %v125 = vld [vmem:[#allocation6 + $0x80] sm:$0xff]
      %v126 = vld [vmem:[#allocation6 + $0x88] sm:$0xff]
      %v127 = vld [vmem:[#allocation6 + $0x90] sm:$0xff]
      %v128 = vld [vmem:[#allocation6 + $0x98] sm:$0xff]
      %v129 = vld [vmem:[#allocation6 + $0xa0] sm:$0xff]
      %v130 = vld [vmem:[#allocation6 + $0xa8] sm:$0xff]
      %v131 = vld [vmem:[#allocation6 + $0xb0] sm:$0xff]
      %v132 = vld [vmem:[#allocation6 + $0xb8] sm:$0xff]
      %v133 = vld [vmem:[#allocation6 + $0xc0] sm:$0xff]
      %v134 = vld [vmem:[#allocation6 + $0xc8] sm:$0xff]
      %v135 = vld [vmem:[#allocation6 + $0xd0] sm:$0xff]
      %v136 = vld [vmem:[#allocation6 + $0xd8] sm:$0xff]
      %v137 = vld [vmem:[#allocation6 + $0xe0] sm:$0xff]
      %v138 = vld [vmem:[#allocation6 + $0xe8] sm:$0xff]
      %v139 = vld [vmem:[#allocation6 + $0xf0] sm:$0xff]
      %v140 = vld [vmem:[#allocation6 + $0xf8] sm:$0xff]
      %v141 = vld [vmem:[#allocation6 + $0x100] sm:$0xff]
      %v142 = vld [vmem:[#allocation6 + $0x108] sm:$0xff]
      %v143 = vld [vmem:[#allocation6 + $0x110] sm:$0xff]
      %v144 = vld [vmem:[#allocation6 + $0x118] sm:$0xff]
      %v145 = vld [vmem:[#allocation6 + $0x120] sm:$0xff]
      %v146 = vld [vmem:[#allocation6 + $0x128] sm:$0xff]
      %v147 = vld [vmem:[#allocation6 + $0x130] sm:$0xff]
      %v148 = vld [vmem:[#allocation6 + $0x138] sm:$0xff]
      %v149 = vld [vmem:[#allocation6 + $0x140] sm:$0xff]
      %v150 = vld [vmem:[#allocation6 + $0x148] sm:$0xff]
      %v151 = vld [vmem:[#allocation6 + $0x150] sm:$0xff]
      %v152 = vld [vmem:[#allocation6 + $0x158] sm:$0xff]
      %v153 = vld [vmem:[#allocation6 + $0x160] sm:$0xff]
      %v154 = vld [vmem:[#allocation6 + $0x168] sm:$0xff]
      %v155 = vld [vmem:[#allocation6 + $0x170] sm:$0xff]
      %v156 = vld [vmem:[#allocation6 + $0x178] sm:$0xff]
      %v157 = vld [vmem:[#allocation6 + $0x180] sm:$0xff]
      %v158 = vld [vmem:[#allocation6 + $0x188] sm:$0xff]
      %v159 = vld [vmem:[#allocation6 + $0x190] sm:$0xff]
      %v160 = vld [vmem:[#allocation6 + $0x198] sm:$0xff]
      %v161 = vld [vmem:[#allocation6 + $0x1a0] sm:$0xff]
      %v162 = vld [vmem:[#allocation6 + $0x1a8] sm:$0xff]
      %v163 = vld [vmem:[#allocation6 + $0x1b0] sm:$0xff]
      %v164 = vld [vmem:[#allocation6 + $0x1b8] sm:$0xff]
      %v165 = vld [vmem:[#allocation6 + $0x1c0] sm:$0xff]
      %v166 = vld [vmem:[#allocation6 + $0x1c8] sm:$0xff]
      %v167 = vld [vmem:[#allocation6 + $0x1d0] sm:$0xff]
      %v168 = vld [vmem:[#allocation6 + $0x1d8] sm:$0xff]
      %v169 = vld [vmem:[#allocation6 + $0x1e0] sm:$0xff]
      %v170 = vld [vmem:[#allocation6 + $0x1e8] sm:$0xff]
      %v171 = vld [vmem:[#allocation6 + $0x1f0] sm:$0xff]
      %v172 = vld [vmem:[#allocation6 + $0x1f8] sm:$0xff]
      %v173 = vld [vmem:[#allocation6 + $0x200] sm:$0xff]
      %v174 = vld [vmem:[#allocation6 + $0x208] sm:$0xff]
      %v175 = vld [vmem:[#allocation6 + $0x210] sm:$0xff]
      %v176 = vld [vmem:[#allocation6 + $0x218] sm:$0xff]
      %v177 = vld [vmem:[#allocation6 + $0x220] sm:$0xff]
      %v178 = vld [vmem:[#allocation6 + $0x228] sm:$0xff]
      %v179 = vld [vmem:[#allocation6 + $0x230] sm:$0xff]
      %v180 = vld [vmem:[#allocation6 + $0x238] sm:$0xff]
      %v181 = vld [vmem:[#allocation6 + $0x240] sm:$0xff]
      %v182 = vld [vmem:[#allocation6 + $0x248] sm:$0xff]
      %v183 = vld [vmem:[#allocation6 + $0x250] sm:$0xff]
      %v184 = vld [vmem:[#allocation6 + $0x258] sm:$0xff]
      %v185 = vld [vmem:[#allocation6 + $0x260] sm:$0xff]
      %v186 = vld [vmem:[#allocation6 + $0x268] sm:$0xff]
      %v187 = vld [vmem:[#allocation6 + $0x270] sm:$0xff]
      %v188 = vld [vmem:[#allocation6 + $0x278] sm:$0xff]
      %v189 = vld [vmem:[#allocation6 + $0x280] sm:$0xff]
      %v190 = vld [vmem:[#allocation6 + $0x288] sm:$0xff]
      %v191 = vld [vmem:[#allocation6 + $0x290] sm:$0xff]
      %v192 = vld [vmem:[#allocation6 + $0x298] sm:$0xff]
      %v193 = vld [vmem:[#allocation6 + $0x2a0] sm:$0xff]
      %v194 = vld [vmem:[#allocation6 + $0x2a8] sm:$0xff]
      %v195 = vld [vmem:[#allocation6 + $0x2b0] sm:$0xff]
      %v196 = vld [vmem:[#allocation6 + $0x2b8] sm:$0xff]
      %v197 = vld [vmem:[#allocation6 + $0x2c0] sm:$0xff]
      %v198 = vld [vmem:[#allocation6 + $0x2c8] sm:$0xff]
      %v199 = vld [vmem:[#allocation6 + $0x2d0] sm:$0xff]
      %v200 = vld [vmem:[#allocation6 + $0x2d8] sm:$0xff]
      %v201 = vld [vmem:[#allocation6 + $0x2e0] sm:$0xff]
      %v202 = vld [vmem:[#allocation6 + $0x2e8] sm:$0xff]
      %v203 = vld [vmem:[#allocation6 + $0x2f0] sm:$0xff]
      %v204 = vld [vmem:[#allocation6 + $0x2f8] sm:$0xff]
      %v205 = vld [vmem:[#allocation6 + $0x300] sm:$0xff]
      %v206 = vld [vmem:[#allocation6 + $0x308] sm:$0xff]
      %v207 = vld [vmem:[#allocation6 + $0x310] sm:$0xff]
      %v208 = vld [vmem:[#allocation6 + $0x318] sm:$0xff]
      %v209 = vld [vmem:[#allocation6 + $0x320] sm:$0xff]
      %v210 = vld [vmem:[#allocation6 + $0x328] sm:$0xff]
      %v211 = vld [vmem:[#allocation6 + $0x330] sm:$0xff]
      %v212 = vld [vmem:[#allocation6 + $0x338] sm:$0xff]
      %v213 = vld [vmem:[#allocation6 + $0x340] sm:$0xff]
      %v214 = vld [vmem:[#allocation6 + $0x348] sm:$0xff]
      %v215 = vld [vmem:[#allocation6 + $0x350] sm:$0xff]
      %v216 = vld [vmem:[#allocation6 + $0x358] sm:$0xff]
      %v217 = vld [vmem:[#allocation6 + $0x360] sm:$0xff]
      %v218 = vld [vmem:[#allocation6 + $0x368] sm:$0xff]
      %v219 = vld [vmem:[#allocation6 + $0x370] sm:$0xff]
      %v220 = vld [vmem:[#allocation6 + $0x378] sm:$0xff]
      %v221 = vld [vmem:[#allocation6 + $0x380] sm:$0xff]
      %v222 = vld [vmem:[#allocation6 + $0x388] sm:$0xff]
      %v223 = vld [vmem:[#allocation6 + $0x390] sm:$0xff]
      %v224 = vld [vmem:[#allocation6 + $0x398] sm:$0xff]
      %v225 = vld [vmem:[#allocation6 + $0x3a0] sm:$0xff]
      %v226 = vld [vmem:[#allocation6 + $0x3a8] sm:$0xff]
      %v227 = vld [vmem:[#allocation6 + $0x3b0] sm:$0xff]
      %v228 = vld [vmem:[#allocation6 + $0x3b8] sm:$0xff]
      %v229 = vld [vmem:[#allocation6 + $0x3c0] sm:$0xff]
      %v230 = vld [vmem:[#allocation6 + $0x3c8] sm:$0xff]
      %v231 = vld [vmem:[#allocation6 + $0x3d0] sm:$0xff]
      %v232 = vld [vmem:[#allocation6 + $0x3d8] sm:$0xff]
      %v233 = vld [vmem:[#allocation6 + $0x3e0] sm:$0xff]
      %v234 = vld [vmem:[#allocation6 + $0x3e8] sm:$0xff]
      %v235 = vld [vmem:[#allocation6 + $0x3f0] sm:$0xff]
      %v236 = vld [vmem:[#allocation6 + $0x3f8] sm:$0xff]
      %v237 = vld [vmem:[#allocation6 + $0x400] sm:$0xff]
      %v238 = vld [vmem:[#allocation6 + $0x408] sm:$0xff]
      %v239 = vld [vmem:[#allocation6 + $0x410] sm:$0xff]
      %v240 = vld [vmem:[#allocation6 + $0x418] sm:$0xff]
      %v241 = vld [vmem:[#allocation6 + $0x420] sm:$0xff]
      %v242 = vld [vmem:[#allocation6 + $0x428] sm:$0xff]
      %v243 = vld [vmem:[#allocation6 + $0x430] sm:$0xff]
      %v244 = vld [vmem:[#allocation6 + $0x438] sm:$0xff]
      %v245 = vld [vmem:[#allocation6 + $0x440] sm:$0xff]
      %v246 = vld [vmem:[#allocation6 + $0x448] sm:$0xff]
      %v247 = vld [vmem:[#allocation6 + $0x450] sm:$0xff]
      %v248 = vld [vmem:[#allocation6 + $0x458] sm:$0xff]
      %v249 = vld [vmem:[#allocation6 + $0x460] sm:$0xff]
      %v250 = vld [vmem:[#allocation6 + $0x468] sm:$0xff]
      %v251 = vld [vmem:[#allocation6 + $0x470] sm:$0xff]
      %v252 = vld [vmem:[#allocation6 + $0x478] sm:$0xff]
      %v253 = vld [vmem:[#allocation6 + $0x480] sm:$0xff]
      %v254 = vld [vmem:[#allocation6 + $0x488] sm:$0xff]
      %v255 = vld [vmem:[#allocation6 + $0x490] sm:$0xff]
      %v256 = vld [vmem:[#allocation6 + $0x498] sm:$0xff]
      %v257 = vld [vmem:[#allocation6 + $0x4a0] sm:$0xff]
      %v258 = vld [vmem:[#allocation6 + $0x4a8] sm:$0xff]
      %v259 = vld [vmem:[#allocation6 + $0x4b0] sm:$0xff]
      %v260 = vld [vmem:[#allocation6 + $0x4b8] sm:$0xff]
      %v261 = vld [vmem:[#allocation6 + $0x4c0] sm:$0xff]
      %v262 = vld [vmem:[#allocation6 + $0x4c8] sm:$0xff]
      %v263 = vld [vmem:[#allocation6 + $0x4d0] sm:$0xff]
      %v264 = vld [vmem:[#allocation6 + $0x4d8] sm:$0xff]
      %v265 = vld [vmem:[#allocation6 + $0x4e0] sm:$0xff]
      %v266 = vld [vmem:[#allocation6 + $0x4e8] sm:$0xff]
      %v267 = vld [vmem:[#allocation6 + $0x4f0] sm:$0xff]
      %v268 = vld [vmem:[#allocation6 + $0x4f8] sm:$0xff]
      %v269 = vld [vmem:[#allocation6 + $0x500] sm:$0xff]
      %v270 = vld [vmem:[#allocation6 + $0x508] sm:$0xff]
      %v271 = vld [vmem:[#allocation6 + $0x510] sm:$0xff]
      %v272 = vld [vmem:[#allocation6 + $0x518] sm:$0xff]
      %v273 = vld [vmem:[#allocation6 + $0x520] sm:$0xff]
      %v274 = vld [vmem:[#allocation6 + $0x528] sm:$0xff]
      %v275 = vld [vmem:[#allocation6 + $0x530] sm:$0xff]
      %v276 = vld [vmem:[#allocation6 + $0x538] sm:$0xff]
      %v277 = vld [vmem:[#allocation6 + $0x540] sm:$0xff]
      %v278 = vld [vmem:[#allocation6 + $0x548] sm:$0xff]
      %v279 = vld [vmem:[#allocation6 + $0x550] sm:$0xff]
      %v280 = vld [vmem:[#allocation6 + $0x558] sm:$0xff]
      %v281 = vld [vmem:[#allocation6 + $0x560] sm:$0xff]
      %v282 = vld [vmem:[#allocation6 + $0x568] sm:$0xff]
      %v283 = vld [vmem:[#allocation6 + $0x570] sm:$0xff]
      %v284 = vld [vmem:[#allocation6 + $0x578] sm:$0xff]
      %v285 = vld [vmem:[#allocation6 + $0x580] sm:$0xff]
      %v286 = vld [vmem:[#allocation6 + $0x588] sm:$0xff]
      %v287 = vld [vmem:[#allocation6 + $0x590] sm:$0xff]
      %v288 = vld [vmem:[#allocation6 + $0x598] sm:$0xff]
      %v289 = vld [vmem:[#allocation6 + $0x5a0] sm:$0xff]
      %v290 = vld [vmem:[#allocation6 + $0x5a8] sm:$0xff]
      %v291 = vld [vmem:[#allocation6 + $0x5b0] sm:$0xff]
      %v292 = vld [vmem:[#allocation6 + $0x5b8] sm:$0xff]
      %v293 = vld [vmem:[#allocation6 + $0x5c0] sm:$0xff]
      %v294 = vld [vmem:[#allocation6 + $0x5c8] sm:$0xff]
      %v295 = vld [vmem:[#allocation6 + $0x5d0] sm:$0xff]
      %v296 = vld [vmem:[#allocation6 + $0x5d8] sm:$0xff]
      %v297 = vld [vmem:[#allocation6 + $0x5e0] sm:$0xff]
      %v298 = vld [vmem:[#allocation6 + $0x5e8] sm:$0xff]
      %v299 = vld [vmem:[#allocation6 + $0x5f0] sm:$0xff]
      %v300 = vld [vmem:[#allocation6 + $0x5f8] sm:$0xff]
      %v301 = vld [vmem:[#allocation6 + $0x600] sm:$0xff]
      %v302 = vld [vmem:[#allocation6 + $0x608] sm:$0xff]
      %v303 = vld [vmem:[#allocation6 + $0x610] sm:$0xff]
      %v304 = vld [vmem:[#allocation6 + $0x618] sm:$0xff]
      %v305 = vld [vmem:[#allocation6 + $0x620] sm:$0xff]
      %v306 = vld [vmem:[#allocation6 + $0x628] sm:$0xff]
      %v307 = vld [vmem:[#allocation6 + $0x630] sm:$0xff]
      %v308 = vld [vmem:[#allocation6 + $0x638] sm:$0xff]
      %v309 = vld [vmem:[#allocation6 + $0x640] sm:$0xff]
      %v310 = vld [vmem:[#allocation6 + $0x648] sm:$0xff]
      %v311 = vld [vmem:[#allocation6 + $0x650] sm:$0xff]
      %v312 = vld [vmem:[#allocation6 + $0x658] sm:$0xff]
      %v313 = vld [vmem:[#allocation6 + $0x660] sm:$0xff]
      %v314 = vld [vmem:[#allocation6 + $0x668] sm:$0xff]
      %v315 = vld [vmem:[#allocation6 + $0x670] sm:$0xff]
      %v316 = vld [vmem:[#allocation6 + $0x678] sm:$0xff]
      %v317 = vld [vmem:[#allocation6 + $0x680] sm:$0xff]
      %v318 = vld [vmem:[#allocation6 + $0x688] sm:$0xff]
      %v319 = vld [vmem:[#allocation6 + $0x690] sm:$0xff]
      %v320 = vld [vmem:[#allocation6 + $0x698] sm:$0xff]
      %v321 = vld [vmem:[#allocation6 + $0x6a0] sm:$0xff]
      %v322 = vld [vmem:[#allocation6 + $0x6a8] sm:$0xff]
      %v323 = vld [vmem:[#allocation6 + $0x6b0] sm:$0xff]
      %v324 = vld [vmem:[#allocation6 + $0x6b8] sm:$0xff]
      %v325 = vld [vmem:[#allocation6 + $0x6c0] sm:$0xff]
      %v326 = vld [vmem:[#allocation6 + $0x6c8] sm:$0xff]
      %v327 = vld [vmem:[#allocation6 + $0x6d0] sm:$0xff]
      %v328 = vld [vmem:[#allocation6 + $0x6d8] sm:$0xff]
      %v329 = vld [vmem:[#allocation6 + $0x6e0] sm:$0xff]
      %v330 = vld [vmem:[#allocation6 + $0x6e8] sm:$0xff]
      %v331 = vld [vmem:[#allocation6 + $0x6f0] sm:$0xff]
      %v332 = vld [vmem:[#allocation6 + $0x6f8] sm:$0xff]
      %v333 = vld [vmem:[#allocation6 + $0x700] sm:$0xff]
      %v334 = vld [vmem:[#allocation6 + $0x708] sm:$0xff]
      %v335 = vld [vmem:[#allocation6 + $0x710] sm:$0xff]
      %v336 = vld [vmem:[#allocation6 + $0x718] sm:$0xff]
      %v337 = vld [vmem:[#allocation6 + $0x720] sm:$0xff]
      %v338 = vld [vmem:[#allocation6 + $0x728] sm:$0xff]
      %v339 = vld [vmem:[#allocation6 + $0x730] sm:$0xff]
      %v340 = vld [vmem:[#allocation6 + $0x738] sm:$0xff]
      %v341 = vld [vmem:[#allocation6 + $0x740] sm:$0xff]
      %v342 = vld [vmem:[#allocation6 + $0x748] sm:$0xff]
      %v343 = vld [vmem:[#allocation6 + $0x750] sm:$0xff]
      %v344 = vld [vmem:[#allocation6 + $0x758] sm:$0xff]
      %v345 = vld [vmem:[#allocation6 + $0x760] sm:$0xff]
      %v346 = vld [vmem:[#allocation6 + $0x768] sm:$0xff]
      %v347 = vld [vmem:[#allocation6 + $0x770] sm:$0xff]
      %v348 = vld [vmem:[#allocation6 + $0x778] sm:$0xff]
      %v349 = vld [vmem:[#allocation6 + $0x780] sm:$0xff]
      %v350 = vld [vmem:[#allocation6 + $0x788] sm:$0xff]
      %v351 = vld [vmem:[#allocation6 + $0x790] sm:$0xff]
      %v352 = vld [vmem:[#allocation6 + $0x798] sm:$0xff]
      %v353 = vld [vmem:[#allocation6 + $0x7a0] sm:$0xff]
      %v354 = vld [vmem:[#allocation6 + $0x7a8] sm:$0xff]
      %v355 = vld [vmem:[#allocation6 + $0x7b0] sm:$0xff]
      %v356 = vld [vmem:[#allocation6 + $0x7b8] sm:$0xff]
      %v357 = vld [vmem:[#allocation6 + $0x7c0] sm:$0xff]
      %v358 = vld [vmem:[#allocation6 + $0x7c8] sm:$0xff]
      %v359 = vld [vmem:[#allocation6 + $0x7d0] sm:$0xff]
      %v360 = vld [vmem:[#allocation6 + $0x7d8] sm:$0xff]
      %v361 = vld [vmem:[#allocation6 + $0x7e0] sm:$0xff]
      %v362 = vld [vmem:[#allocation6 + $0x7e8] sm:$0xff]
      %v363 = vld [vmem:[#allocation6 + $0x7f0] sm:$0xff]
      %v364 = vld [vmem:[#allocation6 + $0x7f8] sm:$0xff]
      %v365 = vld [vmem:[#allocation8] sm:$0xf]
      %v367 = vperm.slane %v365, 0
      %v368 = vperm.slane %v365, 1
      %v369 = vperm.slane %v365, 2
      %v370 = vperm.slane %v365, 3
      %v383 = vunpack.c.l.b16 %v101
      %v384 = vunpack.c.h.b16 %v101
      %v385 = vunpack.c.l.b16 %v102
      %v386 = vunpack.c.h.b16 %v102
      %v387 = vunpack.c.l.b16 %v103
      %v388 = vunpack.c.h.b16 %v103
      %v389 = vunpack.c.l.b16 %v104
      %v390 = vunpack.c.h.b16 %v104
      %v391 = vunpack.c.l.b16 %v105
      %v392 = vunpack.c.h.b16 %v105
      %v393 = vunpack.c.l.b16 %v106
      %v394 = vunpack.c.h.b16 %v106
      %v395 = vunpack.c.l.b16 %v107
      %v396 = vunpack.c.h.b16 %v107
      %v397 = vunpack.c.l.b16 %v108
      %v398 = vunpack.c.h.b16 %v108
      %v399 = vpack.c.b16 %v391, %v383
      %v400 = vpack.c.b16 %v392, %v384
      %v401 = vpack.c.b16 %v393, %v385
      %v402 = vpack.c.b16 %v394, %v386
      %v403 = vpack.c.b16 %v395, %v387
      %v404 = vpack.c.b16 %v396, %v388
      %v405 = vpack.c.b16 %v397, %v389
      %v406 = vpack.c.b16 %v398, %v390
      %v671 = vunpack.c.l.b16 %v109
      %v672 = vunpack.c.h.b16 %v109
      %v673 = vunpack.c.l.b16 %v110
      %v674 = vunpack.c.h.b16 %v110
      %v675 = vunpack.c.l.b16 %v111
      %v676 = vunpack.c.h.b16 %v111
      %v677 = vunpack.c.l.b16 %v112
      %v678 = vunpack.c.h.b16 %v112
      %v679 = vunpack.c.l.b16 %v113
      %v680 = vunpack.c.h.b16 %v113
      %v681 = vunpack.c.l.b16 %v114
      %v682 = vunpack.c.h.b16 %v114
      %v683 = vunpack.c.l.b16 %v115
      %v684 = vunpack.c.h.b16 %v115
      %v685 = vunpack.c.l.b16 %v116
      %v686 = vunpack.c.h.b16 %v116
      %v687 = vunpack.c.l.b16 %v117
      %v688 = vunpack.c.h.b16 %v117
      %v689 = vunpack.c.l.b16 %v118
      %v690 = vunpack.c.h.b16 %v118
      %v691 = vunpack.c.l.b16 %v119
      %v692 = vunpack.c.h.b16 %v119
      %v693 = vunpack.c.l.b16 %v120
      %v694 = vunpack.c.h.b16 %v120
      %v695 = vunpack.c.l.b16 %v121
      %v696 = vunpack.c.h.b16 %v121
      %v697 = vunpack.c.l.b16 %v122
      %v698 = vunpack.c.h.b16 %v122
      %v699 = vunpack.c.l.b16 %v123
      %v700 = vunpack.c.h.b16 %v123
      %v701 = vunpack.c.l.b16 %v124
      %v702 = vunpack.c.h.b16 %v124
      %v703 = vunpack.c.l.b16 %v125
      %v704 = vunpack.c.h.b16 %v125
      %v705 = vunpack.c.l.b16 %v126
      %v706 = vunpack.c.h.b16 %v126
      %v707 = vunpack.c.l.b16 %v127
      %v708 = vunpack.c.h.b16 %v127
      %v709 = vunpack.c.l.b16 %v128
      %v710 = vunpack.c.h.b16 %v128
      %v711 = vunpack.c.l.b16 %v129
      %v712 = vunpack.c.h.b16 %v129
      %v713 = vunpack.c.l.b16 %v130
      %v714 = vunpack.c.h.b16 %v130
      %v715 = vunpack.c.l.b16 %v131
      %v716 = vunpack.c.h.b16 %v131
      %v717 = vunpack.c.l.b16 %v132
      %v718 = vunpack.c.h.b16 %v132
      %v719 = vunpack.c.l.b16 %v133
      %v720 = vunpack.c.h.b16 %v133
      %v721 = vunpack.c.l.b16 %v134
      %v722 = vunpack.c.h.b16 %v134
      %v723 = vunpack.c.l.b16 %v135
      %v724 = vunpack.c.h.b16 %v135
      %v725 = vunpack.c.l.b16 %v136
      %v726 = vunpack.c.h.b16 %v136
      %v727 = vunpack.c.l.b16 %v137
      %v728 = vunpack.c.h.b16 %v137
      %v729 = vunpack.c.l.b16 %v138
      %v730 = vunpack.c.h.b16 %v138
      %v731 = vunpack.c.l.b16 %v139
      %v732 = vunpack.c.h.b16 %v139
      %v733 = vunpack.c.l.b16 %v140
      %v734 = vunpack.c.h.b16 %v140
      %v735 = vunpack.c.l.b16 %v141
      %v736 = vunpack.c.h.b16 %v141
      %v737 = vunpack.c.l.b16 %v142
      %v738 = vunpack.c.h.b16 %v142
      %v739 = vunpack.c.l.b16 %v143
      %v740 = vunpack.c.h.b16 %v143
      %v741 = vunpack.c.l.b16 %v144
      %v742 = vunpack.c.h.b16 %v144
      %v743 = vunpack.c.l.b16 %v145
      %v744 = vunpack.c.h.b16 %v145
      %v745 = vunpack.c.l.b16 %v146
      %v746 = vunpack.c.h.b16 %v146
      %v747 = vunpack.c.l.b16 %v147
      %v748 = vunpack.c.h.b16 %v147
      %v749 = vunpack.c.l.b16 %v148
      %v750 = vunpack.c.h.b16 %v148
      %v751 = vunpack.c.l.b16 %v149
      %v752 = vunpack.c.h.b16 %v149
      %v753 = vunpack.c.l.b16 %v150
      %v754 = vunpack.c.h.b16 %v150
      %v755 = vunpack.c.l.b16 %v151
      %v756 = vunpack.c.h.b16 %v151
      %v757 = vunpack.c.l.b16 %v152
      %v758 = vunpack.c.h.b16 %v152
      %v759 = vunpack.c.l.b16 %v153
      %v760 = vunpack.c.h.b16 %v153
      %v761 = vunpack.c.l.b16 %v154
      %v762 = vunpack.c.h.b16 %v154
      %v763 = vunpack.c.l.b16 %v155
      %v764 = vunpack.c.h.b16 %v155
      %v765 = vunpack.c.l.b16 %v156
      %v766 = vunpack.c.h.b16 %v156
      %v767 = vunpack.c.l.b16 %v157
      %v768 = vunpack.c.h.b16 %v157
      %v769 = vunpack.c.l.b16 %v158
      %v770 = vunpack.c.h.b16 %v158
      %v771 = vunpack.c.l.b16 %v159
      %v772 = vunpack.c.h.b16 %v159
      %v773 = vunpack.c.l.b16 %v160
      %v774 = vunpack.c.h.b16 %v160
      %v775 = vunpack.c.l.b16 %v161
      %v776 = vunpack.c.h.b16 %v161
      %v777 = vunpack.c.l.b16 %v162
      %v778 = vunpack.c.h.b16 %v162
      %v779 = vunpack.c.l.b16 %v163
      %v780 = vunpack.c.h.b16 %v163
      %v781 = vunpack.c.l.b16 %v164
      %v782 = vunpack.c.h.b16 %v164
      %v783 = vunpack.c.l.b16 %v165
      %v784 = vunpack.c.h.b16 %v165
      %v785 = vunpack.c.l.b16 %v166
      %v786 = vunpack.c.h.b16 %v166
      %v787 = vunpack.c.l.b16 %v167
      %v788 = vunpack.c.h.b16 %v167
      %v789 = vunpack.c.l.b16 %v168
      %v790 = vunpack.c.h.b16 %v168
      %v791 = vunpack.c.l.b16 %v169
      %v792 = vunpack.c.h.b16 %v169
      %v793 = vunpack.c.l.b16 %v170
      %v794 = vunpack.c.h.b16 %v170
      %v795 = vunpack.c.l.b16 %v171
      %v796 = vunpack.c.h.b16 %v171
      %v797 = vunpack.c.l.b16 %v172
      %v798 = vunpack.c.h.b16 %v172
      %v799 = vunpack.c.l.b16 %v173
      %v800 = vunpack.c.h.b16 %v173
      %v801 = vunpack.c.l.b16 %v174
      %v802 = vunpack.c.h.b16 %v174
      %v803 = vunpack.c.l.b16 %v175
      %v804 = vunpack.c.h.b16 %v175
      %v805 = vunpack.c.l.b16 %v176
      %v806 = vunpack.c.h.b16 %v176
      %v807 = vunpack.c.l.b16 %v177
      %v808 = vunpack.c.h.b16 %v177
      %v809 = vunpack.c.l.b16 %v178
      %v810 = vunpack.c.h.b16 %v178
      %v811 = vunpack.c.l.b16 %v179
      %v812 = vunpack.c.h.b16 %v179
      %v813 = vunpack.c.l.b16 %v180
      %v814 = vunpack.c.h.b16 %v180
      %v815 = vunpack.c.l.b16 %v181
      %v816 = vunpack.c.h.b16 %v181
      %v817 = vunpack.c.l.b16 %v182
      %v818 = vunpack.c.h.b16 %v182
      %v819 = vunpack.c.l.b16 %v183
      %v820 = vunpack.c.h.b16 %v183
      %v821 = vunpack.c.l.b16 %v184
      %v822 = vunpack.c.h.b16 %v184
      %v823 = vunpack.c.l.b16 %v185
      %v824 = vunpack.c.h.b16 %v185
      %v825 = vunpack.c.l.b16 %v186
      %v826 = vunpack.c.h.b16 %v186
      %v827 = vunpack.c.l.b16 %v187
      %v828 = vunpack.c.h.b16 %v187
      %v829 = vunpack.c.l.b16 %v188
      %v830 = vunpack.c.h.b16 %v188
      %v831 = vunpack.c.l.b16 %v189
      %v832 = vunpack.c.h.b16 %v189
      %v833 = vunpack.c.l.b16 %v190
      %v834 = vunpack.c.h.b16 %v190
      %v835 = vunpack.c.l.b16 %v191
      %v836 = vunpack.c.h.b16 %v191
      %v837 = vunpack.c.l.b16 %v192
      %v838 = vunpack.c.h.b16 %v192
      %v839 = vunpack.c.l.b16 %v193
      %v840 = vunpack.c.h.b16 %v193
      %v841 = vunpack.c.l.b16 %v194
      %v842 = vunpack.c.h.b16 %v194
      %v843 = vunpack.c.l.b16 %v195
      %v844 = vunpack.c.h.b16 %v195
      %v845 = vunpack.c.l.b16 %v196
      %v846 = vunpack.c.h.b16 %v196
      %v847 = vunpack.c.l.b16 %v197
      %v848 = vunpack.c.h.b16 %v197
      %v849 = vunpack.c.l.b16 %v198
      %v850 = vunpack.c.h.b16 %v198
      %v851 = vunpack.c.l.b16 %v199
      %v852 = vunpack.c.h.b16 %v199
      %v853 = vunpack.c.l.b16 %v200
      %v854 = vunpack.c.h.b16 %v200
      %v855 = vunpack.c.l.b16 %v201
      %v856 = vunpack.c.h.b16 %v201
      %v857 = vunpack.c.l.b16 %v202
      %v858 = vunpack.c.h.b16 %v202
      %v859 = vunpack.c.l.b16 %v203
      %v860 = vunpack.c.h.b16 %v203
      %v861 = vunpack.c.l.b16 %v204
      %v862 = vunpack.c.h.b16 %v204
      %v863 = vunpack.c.l.b16 %v205
      %v864 = vunpack.c.h.b16 %v205
      %v865 = vunpack.c.l.b16 %v206
      %v866 = vunpack.c.h.b16 %v206
      %v867 = vunpack.c.l.b16 %v207
      %v868 = vunpack.c.h.b16 %v207
      %v869 = vunpack.c.l.b16 %v208
      %v870 = vunpack.c.h.b16 %v208
      %v871 = vunpack.c.l.b16 %v209
      %v872 = vunpack.c.h.b16 %v209
      %v873 = vunpack.c.l.b16 %v210
      %v874 = vunpack.c.h.b16 %v210
      %v875 = vunpack.c.l.b16 %v211
      %v876 = vunpack.c.h.b16 %v211
      %v877 = vunpack.c.l.b16 %v212
      %v878 = vunpack.c.h.b16 %v212
      %v879 = vunpack.c.l.b16 %v213
      %v880 = vunpack.c.h.b16 %v213
      %v881 = vunpack.c.l.b16 %v214
      %v882 = vunpack.c.h.b16 %v214
      %v883 = vunpack.c.l.b16 %v215
      %v884 = vunpack.c.h.b16 %v215
      %v885 = vunpack.c.l.b16 %v216
      %v886 = vunpack.c.h.b16 %v216
      %v887 = vunpack.c.l.b16 %v217
      %v888 = vunpack.c.h.b16 %v217
      %v889 = vunpack.c.l.b16 %v218
      %v890 = vunpack.c.h.b16 %v218
      %v891 = vunpack.c.l.b16 %v219
      %v892 = vunpack.c.h.b16 %v219
      %v893 = vunpack.c.l.b16 %v220
      %v894 = vunpack.c.h.b16 %v220
      %v895 = vunpack.c.l.b16 %v221
      %v896 = vunpack.c.h.b16 %v221
      %v897 = vunpack.c.l.b16 %v222
      %v898 = vunpack.c.h.b16 %v222
      %v899 = vunpack.c.l.b16 %v223
      %v900 = vunpack.c.h.b16 %v223
      %v901 = vunpack.c.l.b16 %v224
      %v902 = vunpack.c.h.b16 %v224
      %v903 = vunpack.c.l.b16 %v225
      %v904 = vunpack.c.h.b16 %v225
      %v905 = vunpack.c.l.b16 %v226
      %v906 = vunpack.c.h.b16 %v226
      %v907 = vunpack.c.l.b16 %v227
      %v908 = vunpack.c.h.b16 %v227
      %v909 = vunpack.c.l.b16 %v228
      %v910 = vunpack.c.h.b16 %v228
      %v911 = vunpack.c.l.b16 %v229
      %v912 = vunpack.c.h.b16 %v229
      %v913 = vunpack.c.l.b16 %v230
      %v914 = vunpack.c.h.b16 %v230
      %v915 = vunpack.c.l.b16 %v231
      %v916 = vunpack.c.h.b16 %v231
      %v917 = vunpack.c.l.b16 %v232
      %v918 = vunpack.c.h.b16 %v232
      %v919 = vunpack.c.l.b16 %v233
      %v920 = vunpack.c.h.b16 %v233
      %v921 = vunpack.c.l.b16 %v234
      %v922 = vunpack.c.h.b16 %v234
      %v923 = vunpack.c.l.b16 %v235
      %v924 = vunpack.c.h.b16 %v235
      %v925 = vunpack.c.l.b16 %v236
      %v926 = vunpack.c.h.b16 %v236
      %v927 = vunpack.c.l.b16 %v237
      %v928 = vunpack.c.h.b16 %v237
      %v929 = vunpack.c.l.b16 %v238
      %v930 = vunpack.c.h.b16 %v238
      %v931 = vunpack.c.l.b16 %v239
      %v932 = vunpack.c.h.b16 %v239
      %v933 = vunpack.c.l.b16 %v240
      %v934 = vunpack.c.h.b16 %v240
      %v935 = vunpack.c.l.b16 %v241
      %v936 = vunpack.c.h.b16 %v241
      %v937 = vunpack.c.l.b16 %v242
      %v938 = vunpack.c.h.b16 %v242
      %v939 = vunpack.c.l.b16 %v243
      %v940 = vunpack.c.h.b16 %v243
      %v941 = vunpack.c.l.b16 %v244
      %v942 = vunpack.c.h.b16 %v244
      %v943 = vunpack.c.l.b16 %v245
      %v944 = vunpack.c.h.b16 %v245
      %v945 = vunpack.c.l.b16 %v246
      %v946 = vunpack.c.h.b16 %v246
      %v947 = vunpack.c.l.b16 %v247
      %v948 = vunpack.c.h.b16 %v247
      %v949 = vunpack.c.l.b16 %v248
      %v950 = vunpack.c.h.b16 %v248
      %v951 = vunpack.c.l.b16 %v249
      %v952 = vunpack.c.h.b16 %v249
      %v953 = vunpack.c.l.b16 %v250
      %v954 = vunpack.c.h.b16 %v250
      %v955 = vunpack.c.l.b16 %v251
      %v956 = vunpack.c.h.b16 %v251
      %v957 = vunpack.c.l.b16 %v252
      %v958 = vunpack.c.h.b16 %v252
      %v959 = vunpack.c.l.b16 %v253
      %v960 = vunpack.c.h.b16 %v253
      %v961 = vunpack.c.l.b16 %v254
      %v962 = vunpack.c.h.b16 %v254
      %v963 = vunpack.c.l.b16 %v255
      %v964 = vunpack.c.h.b16 %v255
      %v965 = vunpack.c.l.b16 %v256
      %v966 = vunpack.c.h.b16 %v256
      %v967 = vunpack.c.l.b16 %v257
      %v968 = vunpack.c.h.b16 %v257
      %v969 = vunpack.c.l.b16 %v258
      %v970 = vunpack.c.h.b16 %v258
      %v971 = vunpack.c.l.b16 %v259
      %v972 = vunpack.c.h.b16 %v259
      %v973 = vunpack.c.l.b16 %v260
      %v974 = vunpack.c.h.b16 %v260
      %v975 = vunpack.c.l.b16 %v261
      %v976 = vunpack.c.h.b16 %v261
      %v977 = vunpack.c.l.b16 %v262
      %v978 = vunpack.c.h.b16 %v262
      %v979 = vunpack.c.l.b16 %v263
      %v980 = vunpack.c.h.b16 %v263
      %v981 = vunpack.c.l.b16 %v264
      %v982 = vunpack.c.h.b16 %v264
      %v983 = vunpack.c.l.b16 %v265
      %v984 = vunpack.c.h.b16 %v265
      %v985 = vunpack.c.l.b16 %v266
      %v986 = vunpack.c.h.b16 %v266
      %v987 = vunpack.c.l.b16 %v267
      %v988 = vunpack.c.h.b16 %v267
      %v989 = vunpack.c.l.b16 %v268
      %v990 = vunpack.c.h.b16 %v268
      %v991 = vunpack.c.l.b16 %v269
      %v992 = vunpack.c.h.b16 %v269
      %v993 = vunpack.c.l.b16 %v270
      %v994 = vunpack.c.h.b16 %v270
      %v995 = vunpack.c.l.b16 %v271
      %v996 = vunpack.c.h.b16 %v271
      %v997 = vunpack.c.l.b16 %v272
      %v998 = vunpack.c.h.b16 %v272
      %v999 = vunpack.c.l.b16 %v273
      %v1000 = vunpack.c.h.b16 %v273
      %v1001 = vunpack.c.l.b16 %v274
      %v1002 = vunpack.c.h.b16 %v274
      %v1003 = vunpack.c.l.b16 %v275
      %v1004 = vunpack.c.h.b16 %v275
      %v1005 = vunpack.c.l.b16 %v276
      %v1006 = vunpack.c.h.b16 %v276
      %v1007 = vunpack.c.l.b16 %v277
      %v1008 = vunpack.c.h.b16 %v277
      %v1009 = vunpack.c.l.b16 %v278
      %v1010 = vunpack.c.h.b16 %v278
      %v1011 = vunpack.c.l.b16 %v279
      %v1012 = vunpack.c.h.b16 %v279
      %v1013 = vunpack.c.l.b16 %v280
      %v1014 = vunpack.c.h.b16 %v280
      %v1015 = vunpack.c.l.b16 %v281
      %v1016 = vunpack.c.h.b16 %v281
      %v1017 = vunpack.c.l.b16 %v282
      %v1018 = vunpack.c.h.b16 %v282
      %v1019 = vunpack.c.l.b16 %v283
      %v1020 = vunpack.c.h.b16 %v283
      %v1021 = vunpack.c.l.b16 %v284
      %v1022 = vunpack.c.h.b16 %v284
      %v1023 = vunpack.c.l.b16 %v285
      %v1024 = vunpack.c.h.b16 %v285
      %v1025 = vunpack.c.l.b16 %v286
      %v1026 = vunpack.c.h.b16 %v286
      %v1027 = vunpack.c.l.b16 %v287
      %v1028 = vunpack.c.h.b16 %v287
      %v1029 = vunpack.c.l.b16 %v288
      %v1030 = vunpack.c.h.b16 %v288
      %v1031 = vunpack.c.l.b16 %v289
      %v1032 = vunpack.c.h.b16 %v289
      %v1033 = vunpack.c.l.b16 %v290
      %v1034 = vunpack.c.h.b16 %v290
      %v1035 = vunpack.c.l.b16 %v291
      %v1036 = vunpack.c.h.b16 %v291
      %v1037 = vunpack.c.l.b16 %v292
      %v1038 = vunpack.c.h.b16 %v292
      %v1039 = vunpack.c.l.b16 %v293
      %v1040 = vunpack.c.h.b16 %v293
      %v1041 = vunpack.c.l.b16 %v294
      %v1042 = vunpack.c.h.b16 %v294
      %v1043 = vunpack.c.l.b16 %v295
      %v1044 = vunpack.c.h.b16 %v295
      %v1045 = vunpack.c.l.b16 %v296
      %v1046 = vunpack.c.h.b16 %v296
      %v1047 = vunpack.c.l.b16 %v297
      %v1048 = vunpack.c.h.b16 %v297
      %v1049 = vunpack.c.l.b16 %v298
      %v1050 = vunpack.c.h.b16 %v298
      %v1051 = vunpack.c.l.b16 %v299
      %v1052 = vunpack.c.h.b16 %v299
      %v1053 = vunpack.c.l.b16 %v300
      %v1054 = vunpack.c.h.b16 %v300
      %v1055 = vunpack.c.l.b16 %v301
      %v1056 = vunpack.c.h.b16 %v301
      %v1057 = vunpack.c.l.b16 %v302
      %v1058 = vunpack.c.h.b16 %v302
      %v1059 = vunpack.c.l.b16 %v303
      %v1060 = vunpack.c.h.b16 %v303
      %v1061 = vunpack.c.l.b16 %v304
      %v1062 = vunpack.c.h.b16 %v304
      %v1063 = vunpack.c.l.b16 %v305
      %v1064 = vunpack.c.h.b16 %v305
      %v1065 = vunpack.c.l.b16 %v306
      %v1066 = vunpack.c.h.b16 %v306
      %v1067 = vunpack.c.l.b16 %v307
      %v1068 = vunpack.c.h.b16 %v307
      %v1069 = vunpack.c.l.b16 %v308
      %v1070 = vunpack.c.h.b16 %v308
      %v1071 = vunpack.c.l.b16 %v309
      %v1072 = vunpack.c.h.b16 %v309
      %v1073 = vunpack.c.l.b16 %v310
      %v1074 = vunpack.c.h.b16 %v310
      %v1075 = vunpack.c.l.b16 %v311
      %v1076 = vunpack.c.h.b16 %v311
      %v1077 = vunpack.c.l.b16 %v312
      %v1078 = vunpack.c.h.b16 %v312
      %v1079 = vunpack.c.l.b16 %v313
      %v1080 = vunpack.c.h.b16 %v313
      %v1081 = vunpack.c.l.b16 %v314
      %v1082 = vunpack.c.h.b16 %v314
      %v1083 = vunpack.c.l.b16 %v315
      %v1084 = vunpack.c.h.b16 %v315
      %v1085 = vunpack.c.l.b16 %v316
      %v1086 = vunpack.c.h.b16 %v316
      %v1087 = vunpack.c.l.b16 %v317
      %v1088 = vunpack.c.h.b16 %v317
      %v1089 = vunpack.c.l.b16 %v318
      %v1090 = vunpack.c.h.b16 %v318
      %v1091 = vunpack.c.l.b16 %v319
      %v1092 = vunpack.c.h.b16 %v319
      %v1093 = vunpack.c.l.b16 %v320
      %v1094 = vunpack.c.h.b16 %v320
      %v1095 = vunpack.c.l.b16 %v321
      %v1096 = vunpack.c.h.b16 %v321
      %v1097 = vunpack.c.l.b16 %v322
      %v1098 = vunpack.c.h.b16 %v322
      %v1099 = vunpack.c.l.b16 %v323
      %v1100 = vunpack.c.h.b16 %v323
      %v1101 = vunpack.c.l.b16 %v324
      %v1102 = vunpack.c.h.b16 %v324
      %v1103 = vunpack.c.l.b16 %v325
      %v1104 = vunpack.c.h.b16 %v325
      %v1105 = vunpack.c.l.b16 %v326
      %v1106 = vunpack.c.h.b16 %v326
      %v1107 = vunpack.c.l.b16 %v327
      %v1108 = vunpack.c.h.b16 %v327
      %v1109 = vunpack.c.l.b16 %v328
      %v1110 = vunpack.c.h.b16 %v328
      %v1111 = vunpack.c.l.b16 %v329
      %v1112 = vunpack.c.h.b16 %v329
      %v1113 = vunpack.c.l.b16 %v330
      %v1114 = vunpack.c.h.b16 %v330
      %v1115 = vunpack.c.l.b16 %v331
      %v1116 = vunpack.c.h.b16 %v331
      %v1117 = vunpack.c.l.b16 %v332
      %v1118 = vunpack.c.h.b16 %v332
      %v1119 = vunpack.c.l.b16 %v333
      %v1120 = vunpack.c.h.b16 %v333
      %v1121 = vunpack.c.l.b16 %v334
      %v1122 = vunpack.c.h.b16 %v334
      %v1123 = vunpack.c.l.b16 %v335
      %v1124 = vunpack.c.h.b16 %v335
      %v1125 = vunpack.c.l.b16 %v336
      %v1126 = vunpack.c.h.b16 %v336
      %v1127 = vunpack.c.l.b16 %v337
      %v1128 = vunpack.c.h.b16 %v337
      %v1129 = vunpack.c.l.b16 %v338
      %v1130 = vunpack.c.h.b16 %v338
      %v1131 = vunpack.c.l.b16 %v339
      %v1132 = vunpack.c.h.b16 %v339
      %v1133 = vunpack.c.l.b16 %v340
      %v1134 = vunpack.c.h.b16 %v340
      %v1135 = vunpack.c.l.b16 %v341
      %v1136 = vunpack.c.h.b16 %v341
      %v1137 = vunpack.c.l.b16 %v342
      %v1138 = vunpack.c.h.b16 %v342
      %v1139 = vunpack.c.l.b16 %v343
      %v1140 = vunpack.c.h.b16 %v343
      %v1141 = vunpack.c.l.b16 %v344
      %v1142 = vunpack.c.h.b16 %v344
      %v1143 = vunpack.c.l.b16 %v345
      %v1144 = vunpack.c.h.b16 %v345
      %v1145 = vunpack.c.l.b16 %v346
      %v1146 = vunpack.c.h.b16 %v346
      %v1147 = vunpack.c.l.b16 %v347
      %v1148 = vunpack.c.h.b16 %v347
      %v1149 = vunpack.c.l.b16 %v348
      %v1150 = vunpack.c.h.b16 %v348
      %v1151 = vunpack.c.l.b16 %v349
      %v1152 = vunpack.c.h.b16 %v349
      %v1153 = vunpack.c.l.b16 %v350
      %v1154 = vunpack.c.h.b16 %v350
      %v1155 = vunpack.c.l.b16 %v351
      %v1156 = vunpack.c.h.b16 %v351
      %v1157 = vunpack.c.l.b16 %v352
      %v1158 = vunpack.c.h.b16 %v352
      %v1159 = vunpack.c.l.b16 %v353
      %v1160 = vunpack.c.h.b16 %v353
      %v1161 = vunpack.c.l.b16 %v354
      %v1162 = vunpack.c.h.b16 %v354
      %v1163 = vunpack.c.l.b16 %v355
      %v1164 = vunpack.c.h.b16 %v355
      %v1165 = vunpack.c.l.b16 %v356
      %v1166 = vunpack.c.h.b16 %v356
      %v1167 = vunpack.c.l.b16 %v357
      %v1168 = vunpack.c.h.b16 %v357
      %v1169 = vunpack.c.l.b16 %v358
      %v1170 = vunpack.c.h.b16 %v358
      %v1171 = vunpack.c.l.b16 %v359
      %v1172 = vunpack.c.h.b16 %v359
      %v1173 = vunpack.c.l.b16 %v360
      %v1174 = vunpack.c.h.b16 %v360
      %v1175 = vunpack.c.l.b16 %v361
      %v1176 = vunpack.c.h.b16 %v361
      %v1177 = vunpack.c.l.b16 %v362
      %v1178 = vunpack.c.h.b16 %v362
      %v1179 = vunpack.c.l.b16 %v363
      %v1180 = vunpack.c.h.b16 %v363
      %v1181 = vunpack.c.l.b16 %v364
      %v1182 = vunpack.c.h.b16 %v364
      %v1183 = vpack.c.b16 %v675, %v671
      %v1184 = vpack.c.b16 %v676, %v672
      %v1185 = vpack.c.b16 %v677, %v673
      %v1186 = vpack.c.b16 %v678, %v674
      %v1187 = vpack.c.b16 %v683, %v679
      %v1188 = vpack.c.b16 %v684, %v680
      %v1189 = vpack.c.b16 %v685, %v681
      %v1190 = vpack.c.b16 %v686, %v682
      %v1191 = vpack.c.b16 %v691, %v687
      %v1192 = vpack.c.b16 %v692, %v688
      %v1193 = vpack.c.b16 %v693, %v689
      %v1194 = vpack.c.b16 %v694, %v690
      %v1195 = vpack.c.b16 %v699, %v695
      %v1196 = vpack.c.b16 %v700, %v696
      %v1197 = vpack.c.b16 %v701, %v697
      %v1198 = vpack.c.b16 %v702, %v698
      %v1199 = vpack.c.b16 %v707, %v703
      %v1200 = vpack.c.b16 %v708, %v704
      %v1201 = vpack.c.b16 %v709, %v705
      %v1202 = vpack.c.b16 %v710, %v706
      %v1203 = vpack.c.b16 %v715, %v711
      %v1204 = vpack.c.b16 %v716, %v712
      %v1205 = vpack.c.b16 %v717, %v713
      %v1206 = vpack.c.b16 %v718, %v714
      %v1207 = vpack.c.b16 %v723, %v719
      %v1208 = vpack.c.b16 %v724, %v720
      %v1209 = vpack.c.b16 %v725, %v721
      %v1210 = vpack.c.b16 %v726, %v722
      %v1211 = vpack.c.b16 %v731, %v727
      %v1212 = vpack.c.b16 %v732, %v728
      %v1213 = vpack.c.b16 %v733, %v729
      %v1214 = vpack.c.b16 %v734, %v730
      %v1215 = vpack.c.b16 %v739, %v735
      %v1216 = vpack.c.b16 %v740, %v736
      %v1217 = vpack.c.b16 %v741, %v737
      %v1218 = vpack.c.b16 %v742, %v738
      %v1219 = vpack.c.b16 %v747, %v743
      %v1220 = vpack.c.b16 %v748, %v744
      %v1221 = vpack.c.b16 %v749, %v745
      %v1222 = vpack.c.b16 %v750, %v746
      %v1223 = vpack.c.b16 %v755, %v751
      %v1224 = vpack.c.b16 %v756, %v752
      %v1225 = vpack.c.b16 %v757, %v753
      %v1226 = vpack.c.b16 %v758, %v754
      %v1227 = vpack.c.b16 %v763, %v759
      %v1228 = vpack.c.b16 %v764, %v760
      %v1229 = vpack.c.b16 %v765, %v761
      %v1230 = vpack.c.b16 %v766, %v762
      %v1231 = vpack.c.b16 %v771, %v767
      %v1232 = vpack.c.b16 %v772, %v768
      %v1233 = vpack.c.b16 %v773, %v769
      %v1234 = vpack.c.b16 %v774, %v770
      %v1235 = vpack.c.b16 %v779, %v775
      %v1236 = vpack.c.b16 %v780, %v776
      %v1237 = vpack.c.b16 %v781, %v777
      %v1238 = vpack.c.b16 %v782, %v778
      %v1239 = vpack.c.b16 %v787, %v783
      %v1240 = vpack.c.b16 %v788, %v784
      %v1241 = vpack.c.b16 %v789, %v785
      %v1242 = vpack.c.b16 %v790, %v786
      %v1243 = vpack.c.b16 %v795, %v791
      %v1244 = vpack.c.b16 %v796, %v792
      %v1245 = vpack.c.b16 %v797, %v793
      %v1246 = vpack.c.b16 %v798, %v794
      %v1247 = vpack.c.b16 %v803, %v799
      %v1248 = vpack.c.b16 %v804, %v800
      %v1249 = vpack.c.b16 %v805, %v801
      %v1250 = vpack.c.b16 %v806, %v802
      %v1251 = vpack.c.b16 %v811, %v807
      %v1252 = vpack.c.b16 %v812, %v808
      %v1253 = vpack.c.b16 %v813, %v809
      %v1254 = vpack.c.b16 %v814, %v810
      %v1255 = vpack.c.b16 %v819, %v815
      %v1256 = vpack.c.b16 %v820, %v816
      %v1257 = vpack.c.b16 %v821, %v817
      %v1258 = vpack.c.b16 %v822, %v818
      %v1259 = vpack.c.b16 %v827, %v823
      %v1260 = vpack.c.b16 %v828, %v824
      %v1261 = vpack.c.b16 %v829, %v825
      %v1262 = vpack.c.b16 %v830, %v826
      %v1263 = vpack.c.b16 %v835, %v831
      %v1264 = vpack.c.b16 %v836, %v832
      %v1265 = vpack.c.b16 %v837, %v833
      %v1266 = vpack.c.b16 %v838, %v834
      %v1267 = vpack.c.b16 %v843, %v839
      %v1268 = vpack.c.b16 %v844, %v840
      %v1269 = vpack.c.b16 %v845, %v841
      %v1270 = vpack.c.b16 %v846, %v842
      %v1271 = vpack.c.b16 %v851, %v847
      %v1272 = vpack.c.b16 %v852, %v848
      %v1273 = vpack.c.b16 %v853, %v849
      %v1274 = vpack.c.b16 %v854, %v850
      %v1275 = vpack.c.b16 %v859, %v855
      %v1276 = vpack.c.b16 %v860, %v856
      %v1277 = vpack.c.b16 %v861, %v857
      %v1278 = vpack.c.b16 %v862, %v858
      %v1279 = vpack.c.b16 %v867, %v863
      %v1280 = vpack.c.b16 %v868, %v864
      %v1281 = vpack.c.b16 %v869, %v865
      %v1282 = vpack.c.b16 %v870, %v866
      %v1283 = vpack.c.b16 %v875, %v871
      %v1284 = vpack.c.b16 %v876, %v872
      %v1285 = vpack.c.b16 %v877, %v873
      %v1286 = vpack.c.b16 %v878, %v874
      %v1287 = vpack.c.b16 %v883, %v879
      %v1288 = vpack.c.b16 %v884, %v880
      %v1289 = vpack.c.b16 %v885, %v881
      %v1290 = vpack.c.b16 %v886, %v882
      %v1291 = vpack.c.b16 %v891, %v887
      %v1292 = vpack.c.b16 %v892, %v888
      %v1293 = vpack.c.b16 %v893, %v889
      %v1294 = vpack.c.b16 %v894, %v890
      %v1295 = vpack.c.b16 %v899, %v895
      %v1296 = vpack.c.b16 %v900, %v896
      %v1297 = vpack.c.b16 %v901, %v897
      %v1298 = vpack.c.b16 %v902, %v898
      %v1299 = vpack.c.b16 %v907, %v903
      %v1300 = vpack.c.b16 %v908, %v904
      %v1301 = vpack.c.b16 %v909, %v905
      %v1302 = vpack.c.b16 %v910, %v906
      %v1303 = vpack.c.b16 %v915, %v911
      %v1304 = vpack.c.b16 %v916, %v912
      %v1305 = vpack.c.b16 %v917, %v913
      %v1306 = vpack.c.b16 %v918, %v914
      %v1307 = vpack.c.b16 %v923, %v919
      %v1308 = vpack.c.b16 %v924, %v920
      %v1309 = vpack.c.b16 %v925, %v921
      %v1310 = vpack.c.b16 %v926, %v922
      %v1311 = vpack.c.b16 %v931, %v927
      %v1312 = vpack.c.b16 %v932, %v928
      %v1313 = vpack.c.b16 %v933, %v929
      %v1314 = vpack.c.b16 %v934, %v930
      %v1315 = vpack.c.b16 %v939, %v935
      %v1316 = vpack.c.b16 %v940, %v936
      %v1317 = vpack.c.b16 %v941, %v937
      %v1318 = vpack.c.b16 %v942, %v938
      %v1319 = vpack.c.b16 %v947, %v943
      %v1320 = vpack.c.b16 %v948, %v944
      %v1321 = vpack.c.b16 %v949, %v945
      %v1322 = vpack.c.b16 %v950, %v946
      %v1323 = vpack.c.b16 %v955, %v951
      %v1324 = vpack.c.b16 %v956, %v952
      %v1325 = vpack.c.b16 %v957, %v953
      %v1326 = vpack.c.b16 %v958, %v954
      %v1327 = vpack.c.b16 %v963, %v959
      %v1328 = vpack.c.b16 %v964, %v960
      %v1329 = vpack.c.b16 %v965, %v961
      %v1330 = vpack.c.b16 %v966, %v962
      %v1331 = vpack.c.b16 %v971, %v967
      %v1332 = vpack.c.b16 %v972, %v968
      %v1333 = vpack.c.b16 %v973, %v969
      %v1334 = vpack.c.b16 %v974, %v970
      %v1335 = vpack.c.b16 %v979, %v975
      %v1336 = vpack.c.b16 %v980, %v976
      %v1337 = vpack.c.b16 %v981, %v977
      %v1338 = vpack.c.b16 %v982, %v978
      %v1339 = vpack.c.b16 %v987, %v983
      %v1340 = vpack.c.b16 %v988, %v984
      %v1341 = vpack.c.b16 %v989, %v985
      %v1342 = vpack.c.b16 %v990, %v986
      %v1343 = vpack.c.b16 %v995, %v991
      %v1344 = vpack.c.b16 %v996, %v992
      %v1345 = vpack.c.b16 %v997, %v993
      %v1346 = vpack.c.b16 %v998, %v994
      %v1347 = vpack.c.b16 %v1003, %v999
      %v1348 = vpack.c.b16 %v1004, %v1000
      %v1349 = vpack.c.b16 %v1005, %v1001
      %v1350 = vpack.c.b16 %v1006, %v1002
      %v1351 = vpack.c.b16 %v1011, %v1007
      %v1352 = vpack.c.b16 %v1012, %v1008
      %v1353 = vpack.c.b16 %v1013, %v1009
      %v1354 = vpack.c.b16 %v1014, %v1010
      %v1355 = vpack.c.b16 %v1019, %v1015
      %v1356 = vpack.c.b16 %v1020, %v1016
      %v1357 = vpack.c.b16 %v1021, %v1017
      %v1358 = vpack.c.b16 %v1022, %v1018
      %v1359 = vpack.c.b16 %v1027, %v1023
      %v1360 = vpack.c.b16 %v1028, %v1024
      %v1361 = vpack.c.b16 %v1029, %v1025
      %v1362 = vpack.c.b16 %v1030, %v1026
      %v1363 = vpack.c.b16 %v1035, %v1031
      %v1364 = vpack.c.b16 %v1036, %v1032
      %v1365 = vpack.c.b16 %v1037, %v1033
      %v1366 = vpack.c.b16 %v1038, %v1034
      %v1367 = vpack.c.b16 %v1043, %v1039
      %v1368 = vpack.c.b16 %v1044, %v1040
      %v1369 = vpack.c.b16 %v1045, %v1041
      %v1370 = vpack.c.b16 %v1046, %v1042
      %v1371 = vpack.c.b16 %v1051, %v1047
      %v1372 = vpack.c.b16 %v1052, %v1048
      %v1373 = vpack.c.b16 %v1053, %v1049
      %v1374 = vpack.c.b16 %v1054, %v1050
      %v1375 = vpack.c.b16 %v1059, %v1055
      %v1376 = vpack.c.b16 %v1060, %v1056
      %v1377 = vpack.c.b16 %v1061, %v1057
      %v1378 = vpack.c.b16 %v1062, %v1058
      %v1379 = vpack.c.b16 %v1067, %v1063
      %v1380 = vpack.c.b16 %v1068, %v1064
      %v1381 = vpack.c.b16 %v1069, %v1065
      %v1382 = vpack.c.b16 %v1070, %v1066
      %v1383 = vpack.c.b16 %v1075, %v1071
      %v1384 = vpack.c.b16 %v1076, %v1072
      %v1385 = vpack.c.b16 %v1077, %v1073
      %v1386 = vpack.c.b16 %v1078, %v1074
      %v1387 = vpack.c.b16 %v1083, %v1079
      %v1388 = vpack.c.b16 %v1084, %v1080
      %v1389 = vpack.c.b16 %v1085, %v1081
      %v1390 = vpack.c.b16 %v1086, %v1082
      %v1391 = vpack.c.b16 %v1091, %v1087
      %v1392 = vpack.c.b16 %v1092, %v1088
      %v1393 = vpack.c.b16 %v1093, %v1089
      %v1394 = vpack.c.b16 %v1094, %v1090
      %v1395 = vpack.c.b16 %v1099, %v1095
      %v1396 = vpack.c.b16 %v1100, %v1096
      %v1397 = vpack.c.b16 %v1101, %v1097
      %v1398 = vpack.c.b16 %v1102, %v1098
      %v1399 = vpack.c.b16 %v1107, %v1103
      %v1400 = vpack.c.b16 %v1108, %v1104
      %v1401 = vpack.c.b16 %v1109, %v1105
      %v1402 = vpack.c.b16 %v1110, %v1106
      %v1403 = vpack.c.b16 %v1115, %v1111
      %v1404 = vpack.c.b16 %v1116, %v1112
      %v1405 = vpack.c.b16 %v1117, %v1113
      %v1406 = vpack.c.b16 %v1118, %v1114
      %v1407 = vpack.c.b16 %v1123, %v1119
      %v1408 = vpack.c.b16 %v1124, %v1120
      %v1409 = vpack.c.b16 %v1125, %v1121
      %v1410 = vpack.c.b16 %v1126, %v1122
      %v1411 = vpack.c.b16 %v1131, %v1127
      %v1412 = vpack.c.b16 %v1132, %v1128
      %v1413 = vpack.c.b16 %v1133, %v1129
      %v1414 = vpack.c.b16 %v1134, %v1130
      %v1415 = vpack.c.b16 %v1139, %v1135
      %v1416 = vpack.c.b16 %v1140, %v1136
      %v1417 = vpack.c.b16 %v1141, %v1137
      %v1418 = vpack.c.b16 %v1142, %v1138
      %v1419 = vpack.c.b16 %v1147, %v1143
      %v1420 = vpack.c.b16 %v1148, %v1144
      %v1421 = vpack.c.b16 %v1149, %v1145
      %v1422 = vpack.c.b16 %v1150, %v1146
      %v1423 = vpack.c.b16 %v1155, %v1151
      %v1424 = vpack.c.b16 %v1156, %v1152
      %v1425 = vpack.c.b16 %v1157, %v1153
      %v1426 = vpack.c.b16 %v1158, %v1154
      %v1427 = vpack.c.b16 %v1163, %v1159
      %v1428 = vpack.c.b16 %v1164, %v1160
      %v1429 = vpack.c.b16 %v1165, %v1161
      %v1430 = vpack.c.b16 %v1166, %v1162
      %v1431 = vpack.c.b16 %v1171, %v1167
      %v1432 = vpack.c.b16 %v1172, %v1168
      %v1433 = vpack.c.b16 %v1173, %v1169
      %v1434 = vpack.c.b16 %v1174, %v1170
      %v1435 = vpack.c.b16 %v1179, %v1175
      %v1436 = vpack.c.b16 %v1180, %v1176
      %v1437 = vpack.c.b16 %v1181, %v1177
      %v1438 = vpack.c.b16 %v1182, %v1178
      %1695 = vmatpush.bf16.msra.mxu0 %v1211
      %1696 = vmatpush.bf16.msra.mxu0 %v1207
      %1697 = vmatpush.bf16.msra.mxu0 %v1203
      %1698 = vmatpush.bf16.msra.mxu0 %v1199
      %1699 = vmatpush.bf16.msra.mxu0 %v1195
      %1700 = vmatpush.bf16.msra.mxu0 %v1191
      %1701 = vmatpush.bf16.msra.mxu0 %v1187
      %1702 = vmatpush.bf16.msra.mxu0 %v1183
      %1703 = vmatmul.bf16.gmra.mxu0 %v399
      %v1704 = vpop.f32.mrf.mxu0
      %v1705 = vadd.f32 %v367, %v1704
      %v1706 = vpop.f32.mrf.mxu0
      %v1707 = vadd.f32 %v367, %v1706
      %1708 = vdwg.mxu0
      %1709 = vmatpush.bf16.msra.mxu0 %v1243
      %1710 = vmatpush.bf16.msra.mxu0 %v1239
      %1711 = vmatpush.bf16.msra.mxu0 %v1235
      %1712 = vmatpush.bf16.msra.mxu0 %v1231
      %1713 = vmatpush.bf16.msra.mxu0 %v1227
      %1714 = vmatpush.bf16.msra.mxu0 %v1223
      %1715 = vmatpush.bf16.msra.mxu0 %v1219
      %1716 = vmatpush.bf16.msra.mxu0 %v1215
      %1717 = vmatmul.bf16.gmra.mxu0 %v400
      %v1718 = vpop.f32.mrf.mxu0
      %v1719 = vadd.f32 %v1705, %v1718
      %v1720 = vpop.f32.mrf.mxu0
      %v1721 = vadd.f32 %v1707, %v1720
      %1722 = vdwg.mxu0
      %1723 = vmatpush.bf16.msra.mxu0 %v1275
      %1724 = vmatpush.bf16.msra.mxu0 %v1271
      %1725 = vmatpush.bf16.msra.mxu0 %v1267
      %1726 = vmatpush.bf16.msra.mxu0 %v1263
      %1727 = vmatpush.bf16.msra.mxu0 %v1259
      %1728 = vmatpush.bf16.msra.mxu0 %v1255
      %1729 = vmatpush.bf16.msra.mxu0 %v1251
      %1730 = vmatpush.bf16.msra.mxu0 %v1247
      %1731 = vmatmul.bf16.gmra.mxu0 %v401
      %v1732 = vpop.f32.mrf.mxu0
      %v1733 = vadd.f32 %v1719, %v1732
      %v1734 = vpop.f32.mrf.mxu0
      %v1735 = vadd.f32 %v1721, %v1734
      %1736 = vdwg.mxu0
      %1737 = vmatpush.bf16.msra.mxu0 %v1307
      %1738 = vmatpush.bf16.msra.mxu0 %v1303
      %1739 = vmatpush.bf16.msra.mxu0 %v1299
      %1740 = vmatpush.bf16.msra.mxu0 %v1295
      %1741 = vmatpush.bf16.msra.mxu0 %v1291
      %1742 = vmatpush.bf16.msra.mxu0 %v1287
      %1743 = vmatpush.bf16.msra.mxu0 %v1283
      %1744 = vmatpush.bf16.msra.mxu0 %v1279
      %1745 = vmatmul.bf16.gmra.mxu0 %v402
      %v1746 = vpop.f32.mrf.mxu0
      %v1747 = vadd.f32 %v1733, %v1746
      %v1748 = vpop.f32.mrf.mxu0
      %v1749 = vadd.f32 %v1735, %v1748
      %1750 = vdwg.mxu0
      %1751 = vmatpush.bf16.msra.mxu0 %v1339
      %1752 = vmatpush.bf16.msra.mxu0 %v1335
      %1753 = vmatpush.bf16.msra.mxu0 %v1331
      %1754 = vmatpush.bf16.msra.mxu0 %v1327
      %1755 = vmatpush.bf16.msra.mxu0 %v1323
      %1756 = vmatpush.bf16.msra.mxu0 %v1319
      %1757 = vmatpush.bf16.msra.mxu0 %v1315
      %1758 = vmatpush.bf16.msra.mxu0 %v1311
      %1759 = vmatmul.bf16.gmra.mxu0 %v403
      %v1760 = vpop.f32.mrf.mxu0
      %v1761 = vadd.f32 %v1747, %v1760
      %v1762 = vpop.f32.mrf.mxu0
      %v1763 = vadd.f32 %v1749, %v1762
      %1764 = vdwg.mxu0
      %1765 = vmatpush.bf16.msra.mxu0 %v1371
      %1766 = vmatpush.bf16.msra.mxu0 %v1367
      %1767 = vmatpush.bf16.msra.mxu0 %v1363
      %1768 = vmatpush.bf16.msra.mxu0 %v1359
      %1769 = vmatpush.bf16.msra.mxu0 %v1355
      %1770 = vmatpush.bf16.msra.mxu0 %v1351
      %1771 = vmatpush.bf16.msra.mxu0 %v1347
      %1772 = vmatpush.bf16.msra.mxu0 %v1343
      %1773 = vmatmul.bf16.gmra.mxu0 %v404
      %v1774 = vpop.f32.mrf.mxu0
      %v1775 = vadd.f32 %v1761, %v1774
      %v1776 = vpop.f32.mrf.mxu0
      %v1777 = vadd.f32 %v1763, %v1776
      %1778 = vdwg.mxu0
      %1779 = vmatpush.bf16.msra.mxu0 %v1403
      %1780 = vmatpush.bf16.msra.mxu0 %v1399
      %1781 = vmatpush.bf16.msra.mxu0 %v1395
      %1782 = vmatpush.bf16.msra.mxu0 %v1391
      %1783 = vmatpush.bf16.msra.mxu0 %v1387
      %1784 = vmatpush.bf16.msra.mxu0 %v1383
      %1785 = vmatpush.bf16.msra.mxu0 %v1379
      %1786 = vmatpush.bf16.msra.mxu0 %v1375
      %1787 = vmatmul.bf16.gmra.mxu0 %v405
      %v1788 = vpop.f32.mrf.mxu0
      %v1789 = vadd.f32 %v1775, %v1788
      %v1790 = vpop.f32.mrf.mxu0
      %v1791 = vadd.f32 %v1777, %v1790
      %1792 = vdwg.mxu0
      %1793 = vmatpush.bf16.msra.mxu0 %v1435
      %1794 = vmatpush.bf16.msra.mxu0 %v1431
      %1795 = vmatpush.bf16.msra.mxu0 %v1427
      %1796 = vmatpush.bf16.msra.mxu0 %v1423
      %1797 = vmatpush.bf16.msra.mxu0 %v1419
      %1798 = vmatpush.bf16.msra.mxu0 %v1415
      %1799 = vmatpush.bf16.msra.mxu0 %v1411
      %1800 = vmatpush.bf16.msra.mxu0 %v1407
      %1801 = vmatmul.bf16.gmra.mxu0 %v406
      %v1802 = vpop.f32.mrf.mxu0
      %v1803 = vadd.f32 %v1789, %v1802
      %v1804 = vpop.f32.mrf.mxu0
      %v1805 = vadd.f32 %v1791, %v1804
      %1806 = vdwg.mxu0
      %1807 = vmatpush.bf16.msra.mxu0 %v1212
      %1808 = vmatpush.bf16.msra.mxu0 %v1208
      %1809 = vmatpush.bf16.msra.mxu0 %v1204
      %1810 = vmatpush.bf16.msra.mxu0 %v1200
      %1811 = vmatpush.bf16.msra.mxu0 %v1196
      %1812 = vmatpush.bf16.msra.mxu0 %v1192
      %1813 = vmatpush.bf16.msra.mxu0 %v1188
      %1814 = vmatpush.bf16.msra.mxu0 %v1184
      %1815 = vmatmul.bf16.gmra.mxu0 %v399
      %v1816 = vpop.f32.mrf.mxu0
      %v1817 = vadd.f32 %v368, %v1816
      %v1818 = vpop.f32.mrf.mxu0
      %v1819 = vadd.f32 %v368, %v1818
      %1820 = vdwg.mxu0
      %1821 = vmatpush.bf16.msra.mxu0 %v1244
      %1822 = vmatpush.bf16.msra.mxu0 %v1240
      %1823 = vmatpush.bf16.msra.mxu0 %v1236
      %1824 = vmatpush.bf16.msra.mxu0 %v1232
      %1825 = vmatpush.bf16.msra.mxu0 %v1228
      %1826 = vmatpush.bf16.msra.mxu0 %v1224
      %1827 = vmatpush.bf16.msra.mxu0 %v1220
      %1828 = vmatpush.bf16.msra.mxu0 %v1216
      %1829 = vmatmul.bf16.gmra.mxu0 %v400
      %v1830 = vpop.f32.mrf.mxu0
      %v1831 = vadd.f32 %v1817, %v1830
      %v1832 = vpop.f32.mrf.mxu0
      %v1833 = vadd.f32 %v1819, %v1832
      %1834 = vdwg.mxu0
      %1835 = vmatpush.bf16.msra.mxu0 %v1276
      %1836 = vmatpush.bf16.msra.mxu0 %v1272
      %1837 = vmatpush.bf16.msra.mxu0 %v1268
      %1838 = vmatpush.bf16.msra.mxu0 %v1264
      %1839 = vmatpush.bf16.msra.mxu0 %v1260
      %1840 = vmatpush.bf16.msra.mxu0 %v1256
      %1841 = vmatpush.bf16.msra.mxu0 %v1252
      %1842 = vmatpush.bf16.msra.mxu0 %v1248
      %1843 = vmatmul.bf16.gmra.mxu0 %v401
      %v1844 = vpop.f32.mrf.mxu0
      %v1845 = vadd.f32 %v1831, %v1844
      %v1846 = vpop.f32.mrf.mxu0
      %v1847 = vadd.f32 %v1833, %v1846
      %1848 = vdwg.mxu0
      %1849 = vmatpush.bf16.msra.mxu0 %v1308
      %1850 = vmatpush.bf16.msra.mxu0 %v1304
      %1851 = vmatpush.bf16.msra.mxu0 %v1300
      %1852 = vmatpush.bf16.msra.mxu0 %v1296
      %1853 = vmatpush.bf16.msra.mxu0 %v1292
      %1854 = vmatpush.bf16.msra.mxu0 %v1288
      %1855 = vmatpush.bf16.msra.mxu0 %v1284
      %1856 = vmatpush.bf16.msra.mxu0 %v1280
      %1857 = vmatmul.bf16.gmra.mxu0 %v402
      %v1858 = vpop.f32.mrf.mxu0
      %v1859 = vadd.f32 %v1845, %v1858
      %v1860 = vpop.f32.mrf.mxu0
      %v1861 = vadd.f32 %v1847, %v1860
      %1862 = vdwg.mxu0
      %1863 = vmatpush.bf16.msra.mxu0 %v1340
      %1864 = vmatpush.bf16.msra.mxu0 %v1336
      %1865 = vmatpush.bf16.msra.mxu0 %v1332
      %1866 = vmatpush.bf16.msra.mxu0 %v1328
      %1867 = vmatpush.bf16.msra.mxu0 %v1324
      %1868 = vmatpush.bf16.msra.mxu0 %v1320
      %1869 = vmatpush.bf16.msra.mxu0 %v1316
      %1870 = vmatpush.bf16.msra.mxu0 %v1312
      %1871 = vmatmul.bf16.gmra.mxu0 %v403
      %v1872 = vpop.f32.mrf.mxu0
      %v1873 = vadd.f32 %v1859, %v1872
      %v1874 = vpop.f32.mrf.mxu0
      %v1875 = vadd.f32 %v1861, %v1874
      %1876 = vdwg.mxu0
      %1877 = vmatpush.bf16.msra.mxu0 %v1372
      %1878 = vmatpush.bf16.msra.mxu0 %v1368
      %1879 = vmatpush.bf16.msra.mxu0 %v1364
      %1880 = vmatpush.bf16.msra.mxu0 %v1360
      %1881 = vmatpush.bf16.msra.mxu0 %v1356
      %1882 = vmatpush.bf16.msra.mxu0 %v1352
      %1883 = vmatpush.bf16.msra.mxu0 %v1348
      %1884 = vmatpush.bf16.msra.mxu0 %v1344
      %1885 = vmatmul.bf16.gmra.mxu0 %v404
      %v1886 = vpop.f32.mrf.mxu0
      %v1887 = vadd.f32 %v1873, %v1886
      %v1888 = vpop.f32.mrf.mxu0
      %v1889 = vadd.f32 %v1875, %v1888
      %1890 = vdwg.mxu0
      %1891 = vmatpush.bf16.msra.mxu0 %v1404
      %1892 = vmatpush.bf16.msra.mxu0 %v1400
      %1893 = vmatpush.bf16.msra.mxu0 %v1396
      %1894 = vmatpush.bf16.msra.mxu0 %v1392
      %1895 = vmatpush.bf16.msra.mxu0 %v1388
      %1896 = vmatpush.bf16.msra.mxu0 %v1384
      %1897 = vmatpush.bf16.msra.mxu0 %v1380
      %1898 = vmatpush.bf16.msra.mxu0 %v1376
      %1899 = vmatmul.bf16.gmra.mxu0 %v405
      %v1900 = vpop.f32.mrf.mxu0
      %v1901 = vadd.f32 %v1887, %v1900
      %v1902 = vpop.f32.mrf.mxu0
      %v1903 = vadd.f32 %v1889, %v1902
      %1904 = vdwg.mxu0
      %1905 = vmatpush.bf16.msra.mxu0 %v1436
      %1906 = vmatpush.bf16.msra.mxu0 %v1432
      %1907 = vmatpush.bf16.msra.mxu0 %v1428
      %1908 = vmatpush.bf16.msra.mxu0 %v1424
      %1909 = vmatpush.bf16.msra.mxu0 %v1420
      %1910 = vmatpush.bf16.msra.mxu0 %v1416
      %1911 = vmatpush.bf16.msra.mxu0 %v1412
      %1912 = vmatpush.bf16.msra.mxu0 %v1408
      %1913 = vmatmul.bf16.gmra.mxu0 %v406
      %v1914 = vpop.f32.mrf.mxu0
      %v1915 = vadd.f32 %v1901, %v1914
      %v1916 = vpop.f32.mrf.mxu0
      %v1917 = vadd.f32 %v1903, %v1916
      %1918 = vdwg.mxu0
      %1919 = vmatpush.bf16.msra.mxu0 %v1213
      %1920 = vmatpush.bf16.msra.mxu0 %v1209
      %1921 = vmatpush.bf16.msra.mxu0 %v1205
      %1922 = vmatpush.bf16.msra.mxu0 %v1201
      %1923 = vmatpush.bf16.msra.mxu0 %v1197
      %1924 = vmatpush.bf16.msra.mxu0 %v1193
      %1925 = vmatpush.bf16.msra.mxu0 %v1189
      %1926 = vmatpush.bf16.msra.mxu0 %v1185
      %1927 = vmatmul.bf16.gmra.mxu0 %v399
      %v1928 = vpop.f32.mrf.mxu0
      %v1929 = vadd.f32 %v369, %v1928
      %v1930 = vpop.f32.mrf.mxu0
      %v1931 = vadd.f32 %v369, %v1930
      %1932 = vdwg.mxu0
      %1933 = vmatpush.bf16.msra.mxu0 %v1245
      %1934 = vmatpush.bf16.msra.mxu0 %v1241
      %1935 = vmatpush.bf16.msra.mxu0 %v1237
      %1936 = vmatpush.bf16.msra.mxu0 %v1233
      %1937 = vmatpush.bf16.msra.mxu0 %v1229
      %1938 = vmatpush.bf16.msra.mxu0 %v1225
      %1939 = vmatpush.bf16.msra.mxu0 %v1221
      %1940 = vmatpush.bf16.msra.mxu0 %v1217
      %1941 = vmatmul.bf16.gmra.mxu0 %v400
      %v1942 = vpop.f32.mrf.mxu0
      %v1943 = vadd.f32 %v1929, %v1942
      %v1944 = vpop.f32.mrf.mxu0
      %v1945 = vadd.f32 %v1931, %v1944
      %1946 = vdwg.mxu0
      %1947 = vmatpush.bf16.msra.mxu0 %v1277
      %1948 = vmatpush.bf16.msra.mxu0 %v1273
      %1949 = vmatpush.bf16.msra.mxu0 %v1269
      %1950 = vmatpush.bf16.msra.mxu0 %v1265
      %1951 = vmatpush.bf16.msra.mxu0 %v1261
      %1952 = vmatpush.bf16.msra.mxu0 %v1257
      %1953 = vmatpush.bf16.msra.mxu0 %v1253
      %1954 = vmatpush.bf16.msra.mxu0 %v1249
      %1955 = vmatmul.bf16.gmra.mxu0 %v401
      %v1956 = vpop.f32.mrf.mxu0
      %v1957 = vadd.f32 %v1943, %v1956
      %v1958 = vpop.f32.mrf.mxu0
      %v1959 = vadd.f32 %v1945, %v1958
      %1960 = vdwg.mxu0
      %1961 = vmatpush.bf16.msra.mxu0 %v1309
      %1962 = vmatpush.bf16.msra.mxu0 %v1305
      %1963 = vmatpush.bf16.msra.mxu0 %v1301
      %1964 = vmatpush.bf16.msra.mxu0 %v1297
      %1965 = vmatpush.bf16.msra.mxu0 %v1293
      %1966 = vmatpush.bf16.msra.mxu0 %v1289
      %1967 = vmatpush.bf16.msra.mxu0 %v1285
      %1968 = vmatpush.bf16.msra.mxu0 %v1281
      %1969 = vmatmul.bf16.gmra.mxu0 %v402
      %v1970 = vpop.f32.mrf.mxu0
      %v1971 = vadd.f32 %v1957, %v1970
      %v1972 = vpop.f32.mrf.mxu0
      %v1973 = vadd.f32 %v1959, %v1972
      %1974 = vdwg.mxu0
      %1975 = vmatpush.bf16.msra.mxu0 %v1341
      %1976 = vmatpush.bf16.msra.mxu0 %v1337
      %1977 = vmatpush.bf16.msra.mxu0 %v1333
      %1978 = vmatpush.bf16.msra.mxu0 %v1329
      %1979 = vmatpush.bf16.msra.mxu0 %v1325
      %1980 = vmatpush.bf16.msra.mxu0 %v1321
      %1981 = vmatpush.bf16.msra.mxu0 %v1317
      %1982 = vmatpush.bf16.msra.mxu0 %v1313
      %1983 = vmatmul.bf16.gmra.mxu0 %v403
      %v1984 = vpop.f32.mrf.mxu0
      %v1985 = vadd.f32 %v1971, %v1984
      %v1986 = vpop.f32.mrf.mxu0
      %v1987 = vadd.f32 %v1973, %v1986
      %1988 = vdwg.mxu0
      %1989 = vmatpush.bf16.msra.mxu0 %v1373
      %1990 = vmatpush.bf16.msra.mxu0 %v1369
      %1991 = vmatpush.bf16.msra.mxu0 %v1365
      %1992 = vmatpush.bf16.msra.mxu0 %v1361
      %1993 = vmatpush.bf16.msra.mxu0 %v1357
      %1994 = vmatpush.bf16.msra.mxu0 %v1353
      %1995 = vmatpush.bf16.msra.mxu0 %v1349
      %1996 = vmatpush.bf16.msra.mxu0 %v1345
      %1997 = vmatmul.bf16.gmra.mxu0 %v404
      %v1998 = vpop.f32.mrf.mxu0
      %v1999 = vadd.f32 %v1985, %v1998
      %v2000 = vpop.f32.mrf.mxu0
      %v2001 = vadd.f32 %v1987, %v2000
      %2002 = vdwg.mxu0
      %2003 = vmatpush.bf16.msra.mxu0 %v1405
      %2004 = vmatpush.bf16.msra.mxu0 %v1401
      %2005 = vmatpush.bf16.msra.mxu0 %v1397
      %2006 = vmatpush.bf16.msra.mxu0 %v1393
      %2007 = vmatpush.bf16.msra.mxu0 %v1389
      %2008 = vmatpush.bf16.msra.mxu0 %v1385
      %2009 = vmatpush.bf16.msra.mxu0 %v1381
      %2010 = vmatpush.bf16.msra.mxu0 %v1377
      %2011 = vmatmul.bf16.gmra.mxu0 %v405
      %v2012 = vpop.f32.mrf.mxu0
      %v2013 = vadd.f32 %v1999, %v2012
      %v2014 = vpop.f32.mrf.mxu0
      %v2015 = vadd.f32 %v2001, %v2014
      %2016 = vdwg.mxu0
      %2017 = vmatpush.bf16.msra.mxu0 %v1437
      %2018 = vmatpush.bf16.msra.mxu0 %v1433
      %2019 = vmatpush.bf16.msra.mxu0 %v1429
      %2020 = vmatpush.bf16.msra.mxu0 %v1425
      %2021 = vmatpush.bf16.msra.mxu0 %v1421
      %2022 = vmatpush.bf16.msra.mxu0 %v1417
      %2023 = vmatpush.bf16.msra.mxu0 %v1413
      %2024 = vmatpush.bf16.msra.mxu0 %v1409
      %2025 = vmatmul.bf16.gmra.mxu0 %v406
      %v2026 = vpop.f32.mrf.mxu0
      %v2027 = vadd.f32 %v2013, %v2026
      %v2028 = vpop.f32.mrf.mxu0
      %v2029 = vadd.f32 %v2015, %v2028
      %2030 = vdwg.mxu0
      %2031 = vmatpush.bf16.msra.mxu0 %v1214
      %2032 = vmatpush.bf16.msra.mxu0 %v1210
      %2033 = vmatpush.bf16.msra.mxu0 %v1206
      %2034 = vmatpush.bf16.msra.mxu0 %v1202
      %2035 = vmatpush.bf16.msra.mxu0 %v1198
      %2036 = vmatpush.bf16.msra.mxu0 %v1194
      %2037 = vmatpush.bf16.msra.mxu0 %v1190
      %2038 = vmatpush.bf16.msra.mxu0 %v1186
      %2039 = vmatmul.bf16.gmra.mxu0 %v399
      %v2040 = vpop.f32.mrf.mxu0
      %v2041 = vadd.f32 %v370, %v2040
      %v2042 = vpop.f32.mrf.mxu0
      %v2043 = vadd.f32 %v370, %v2042
      %2044 = vdwg.mxu0
      %2045 = vmatpush.bf16.msra.mxu0 %v1246
      %2046 = vmatpush.bf16.msra.mxu0 %v1242
      %2047 = vmatpush.bf16.msra.mxu0 %v1238
      %2048 = vmatpush.bf16.msra.mxu0 %v1234
      %2049 = vmatpush.bf16.msra.mxu0 %v1230
      %2050 = vmatpush.bf16.msra.mxu0 %v1226
      %2051 = vmatpush.bf16.msra.mxu0 %v1222
      %2052 = vmatpush.bf16.msra.mxu0 %v1218
      %2053 = vmatmul.bf16.gmra.mxu0 %v400
      %v2054 = vpop.f32.mrf.mxu0
      %v2055 = vadd.f32 %v2041, %v2054
      %v2056 = vpop.f32.mrf.mxu0
      %v2057 = vadd.f32 %v2043, %v2056
      %2058 = vdwg.mxu0
      %2059 = vmatpush.bf16.msra.mxu0 %v1278
      %2060 = vmatpush.bf16.msra.mxu0 %v1274
      %2061 = vmatpush.bf16.msra.mxu0 %v1270
      %2062 = vmatpush.bf16.msra.mxu0 %v1266
      %2063 = vmatpush.bf16.msra.mxu0 %v1262
      %2064 = vmatpush.bf16.msra.mxu0 %v1258
      %2065 = vmatpush.bf16.msra.mxu0 %v1254
      %2066 = vmatpush.bf16.msra.mxu0 %v1250
      %2067 = vmatmul.bf16.gmra.mxu0 %v401
      %v2068 = vpop.f32.mrf.mxu0
      %v2069 = vadd.f32 %v2055, %v2068
      %v2070 = vpop.f32.mrf.mxu0
      %v2071 = vadd.f32 %v2057, %v2070
      %2072 = vdwg.mxu0
      %2073 = vmatpush.bf16.msra.mxu0 %v1310
      %2074 = vmatpush.bf16.msra.mxu0 %v1306
      %2075 = vmatpush.bf16.msra.mxu0 %v1302
      %2076 = vmatpush.bf16.msra.mxu0 %v1298
      %2077 = vmatpush.bf16.msra.mxu0 %v1294
      %2078 = vmatpush.bf16.msra.mxu0 %v1290
      %2079 = vmatpush.bf16.msra.mxu0 %v1286
      %2080 = vmatpush.bf16.msra.mxu0 %v1282
      %2081 = vmatmul.bf16.gmra.mxu0 %v402
      %v2082 = vpop.f32.mrf.mxu0
      %v2083 = vadd.f32 %v2069, %v2082
      %v2084 = vpop.f32.mrf.mxu0
      %v2085 = vadd.f32 %v2071, %v2084
      %2086 = vdwg.mxu0
      %2087 = vmatpush.bf16.msra.mxu0 %v1342
      %2088 = vmatpush.bf16.msra.mxu0 %v1338
      %2089 = vmatpush.bf16.msra.mxu0 %v1334
      %2090 = vmatpush.bf16.msra.mxu0 %v1330
      %2091 = vmatpush.bf16.msra.mxu0 %v1326
      %2092 = vmatpush.bf16.msra.mxu0 %v1322
      %2093 = vmatpush.bf16.msra.mxu0 %v1318
      %2094 = vmatpush.bf16.msra.mxu0 %v1314
      %2095 = vmatmul.bf16.gmra.mxu0 %v403
      %v2096 = vpop.f32.mrf.mxu0
      %v2097 = vadd.f32 %v2083, %v2096
      %v2098 = vpop.f32.mrf.mxu0
      %v2099 = vadd.f32 %v2085, %v2098
      %2100 = vdwg.mxu0
      %2101 = vmatpush.bf16.msra.mxu0 %v1374
      %2102 = vmatpush.bf16.msra.mxu0 %v1370
      %2103 = vmatpush.bf16.msra.mxu0 %v1366
      %2104 = vmatpush.bf16.msra.mxu0 %v1362
      %2105 = vmatpush.bf16.msra.mxu0 %v1358
      %2106 = vmatpush.bf16.msra.mxu0 %v1354
      %2107 = vmatpush.bf16.msra.mxu0 %v1350
      %2108 = vmatpush.bf16.msra.mxu0 %v1346
      %2109 = vmatmul.bf16.gmra.mxu0 %v404
      %v2110 = vpop.f32.mrf.mxu0
      %v2111 = vadd.f32 %v2097, %v2110
      %v2112 = vpop.f32.mrf.mxu0
      %v2113 = vadd.f32 %v2099, %v2112
      %2114 = vdwg.mxu0
      %2115 = vmatpush.bf16.msra.mxu0 %v1406
      %2116 = vmatpush.bf16.msra.mxu0 %v1402
      %2117 = vmatpush.bf16.msra.mxu0 %v1398
      %2118 = vmatpush.bf16.msra.mxu0 %v1394
      %2119 = vmatpush.bf16.msra.mxu0 %v1390
      %2120 = vmatpush.bf16.msra.mxu0 %v1386
      %2121 = vmatpush.bf16.msra.mxu0 %v1382
      %2122 = vmatpush.bf16.msra.mxu0 %v1378
      %2123 = vmatmul.bf16.gmra.mxu0 %v405
      %v2124 = vpop.f32.mrf.mxu0
      %v2125 = vadd.f32 %v2111, %v2124
      %v2126 = vpop.f32.mrf.mxu0
      %v2127 = vadd.f32 %v2113, %v2126
      %2128 = vdwg.mxu0
      %2129 = vmatpush.bf16.msra.mxu0 %v1438
      %2130 = vmatpush.bf16.msra.mxu0 %v1434
      %2131 = vmatpush.bf16.msra.mxu0 %v1430
      %2132 = vmatpush.bf16.msra.mxu0 %v1426
      %2133 = vmatpush.bf16.msra.mxu0 %v1422
      %2134 = vmatpush.bf16.msra.mxu0 %v1418
      %2135 = vmatpush.bf16.msra.mxu0 %v1414
      %2136 = vmatpush.bf16.msra.mxu0 %v1410
      %2137 = vmatmul.bf16.gmra.mxu0 %v406
      %v2138 = vpop.f32.mrf.mxu0
      %v2139 = vadd.f32 %v2125, %v2138
      %v2140 = vpop.f32.mrf.mxu0
      %v2141 = vadd.f32 %v2127, %v2140
      %2142 = vdwg.mxu0
      %v2143 = vmul.f32 %v1803, %v1803
      %v2144 = vmul.f32 %v1915, %v1915
      %v2145 = vmul.f32 %v2027, %v2027
      %v2146 = vmul.f32 %v2139, %v2139
      %v2147 = vmul.f32 %v1805, %v1805
      %v2148 = vmul.f32 %v1917, %v1917
      %v2149 = vmul.f32 %v2029, %v2029
      %v2150 = vmul.f32 %v2141, %v2141
      %v2151 = vadd.f32 %v2143, %v2144
      %v2152 = vadd.f32 %v2151, %v2145
      %v2153 = vadd.f32 %v2152, %v2146
      %2154 = vadd.xlane.f32.xlu0 %v2153
      %v2155 = vpop.xlane.xlu0 %2154
      %v2156 = vadd.f32 %v2147, %v2148
      %v2157 = vadd.f32 %v2156, %v2149
      %v2158 = vadd.f32 %v2157, %v2150
      %2159 = vadd.xlane.f32.xlu0 %v2158
      %v2160 = vpop.xlane.xlu0 %2159
      %v2161 = vrsqrt.pop %v2155
      %v2162 = vmul.f32 %v2161, %v2155
      %v2163 = vmul.f32 %v2162, %v2161
      %v2164 = vmul.f32 0.5, %v2163
      %v2165 = vsub.f32 1.5, %v2164
      %v2166 = vmul.f32 %v2161, %v2165
      %vm2167 = vweird.f32 %v2155
      %vm2168 = vweird.f32 %v2161
      %vm2169 = vmor %vm2167, %vm2168
      %v2170 = vsel %vm2169, %v2161, %v2166
      %v2171 = vrsqrt.pop %v2160
      %v2172 = vmul.f32 %v2171, %v2160
      %v2173 = vmul.f32 %v2172, %v2171
      %v2174 = vmul.f32 0.5, %v2173
      %v2175 = vsub.f32 1.5, %v2174
      %v2176 = vmul.f32 %v2171, %v2175
      %vm2177 = vweird.f32 %v2160
      %vm2178 = vweird.f32 %v2171
      %vm2179 = vmor %vm2177, %vm2178
      %v2180 = vsel %vm2179, %v2171, %v2176
      %v2181 = vmul.f32 %v1803, %v2170
      %v2182 = vmul.f32 %v1915, %v2170
      %v2183 = vmul.f32 %v2027, %v2170
      %v2184 = vmul.f32 %v2139, %v2170
      %v2185 = vmul.f32 %v1805, %v2180
      %v2186 = vmul.f32 %v1917, %v2180
      %v2187 = vmul.f32 %v2029, %v2180
      %v2188 = vmul.f32 %v2141, %v2180
      %v2189 = vld [vmem:[#allocation9] sm:$0xff]
      %v2190 = vld [vmem:[#allocation9 + $0x8] sm:$0xff]
      %v2191 = vld [vmem:[#allocation9 + $0x10] sm:$0xff]
      %v2192 = vld [vmem:[#allocation9 + $0x18] sm:$0xff]
      %v2193 = vunpack.c.l.bf16 %v2189
      %v2194 = vunpack.c.h.bf16 %v2189
      %v2195 = vunpack.c.l.bf16 %v2190
      %v2196 = vunpack.c.h.bf16 %v2190
      %v2197 = vunpack.c.l.bf16 %v2191
      %v2198 = vunpack.c.h.bf16 %v2191
      %v2199 = vunpack.c.l.bf16 %v2192
      %v2200 = vunpack.c.h.bf16 %v2192
      %v2201 = vsub.f32 %v2181, %v2193
      %v2202 = vsub.f32 %v2182, %v2194
      %v2203 = vsub.f32 %v2183, %v2195
      %v2204 = vsub.f32 %v2184, %v2196
      %v2205 = vsub.f32 %v2185, %v2197
      %v2206 = vsub.f32 %v2186, %v2198
      %v2207 = vsub.f32 %v2187, %v2199
      %v2208 = vsub.f32 %v2188, %v2200
      %v2209 = vmul.f32 %v2201, %v2201
      %v2210 = vmul.f32 %v2202, %v2202
      %v2211 = vmul.f32 %v2203, %v2203
      %v2212 = vmul.f32 %v2204, %v2204
      %v2213 = vmul.f32 %v2205, %v2205
      %v2214 = vmul.f32 %v2206, %v2206
      %v2215 = vmul.f32 %v2207, %v2207
      %v2216 = vmul.f32 %v2208, %v2208
      %v2217 = vadd.f32 %v2209, %v2210
      %v2218 = vadd.f32 %v2217, %v2211
      %v2219 = vadd.f32 %v2218, %v2212
      %2220 = vadd.xlane.f32.xlu0 %v2219
      %v2221 = vpop.xlane.xlu0 %2220
      %v2222 = vadd.f32 %v2213, %v2214
      %v2223 = vadd.f32 %v2222, %v2215
      %v2224 = vadd.f32 %v2223, %v2216
      %2225 = vadd.xlane.f32.xlu0 %v2224
      %v2226 = vpop.xlane.xlu0 %2225
      %v2227 = vrsqrt.pop %v2221
      %v2228 = vmul.f32 %v2227, %v2221
      %v2229 = vmul.f32 %v2228, %v2227
      %v2230 = vmul.f32 0.5, %v2229
      %v2231 = vsub.f32 1.5, %v2230
      %v2232 = vmul.f32 %v2227, %v2231
      %vm2233 = vweird.f32 %v2221
      %vm2234 = vweird.f32 %v2227
      %vm2235 = vmor %vm2233, %vm2234
      %v2236 = vsel %vm2235, %v2227, %v2232
      %v2237 = vrsqrt.pop %v2226
      %v2238 = vmul.f32 %v2237, %v2226
      %v2239 = vmul.f32 %v2238, %v2237
      %v2240 = vmul.f32 0.5, %v2239
      %v2241 = vsub.f32 1.5, %v2240
      %v2242 = vmul.f32 %v2237, %v2241
      %vm2243 = vweird.f32 %v2226
      %vm2244 = vweird.f32 %v2237
      %vm2245 = vmor %vm2243, %vm2244
      %v2246 = vsel %vm2245, %v2237, %v2242
      %v2247 = vmul.f32 %v2201, %v2236
      %v2248 = vmul.f32 %v2202, %v2236
      %v2249 = vmul.f32 %v2203, %v2236
      %v2250 = vmul.f32 %v2204, %v2236
      %v2251 = vmul.f32 %v2205, %v2246
      %v2252 = vmul.f32 %v2206, %v2246
      %v2253 = vmul.f32 %v2207, %v2246
      %v2254 = vmul.f32 %v2208, %v2246
      %v2255 = vpack.c.bf16 %v2248, %v2247
      %v2256 = vpack.c.bf16 %v2250, %v2249
      %v2257 = vpack.c.bf16 %v2252, %v2251
      %v2258 = vpack.c.bf16 %v2254, %v2253
      %2259 = vst [vmem:[#allocation2] sm:$0xff] %v2255
      %2260 = vst [vmem:[#allocation2 + $0x8] sm:$0xff] %v2256
      %2261 = vst [vmem:[#allocation2 + $0x10] sm:$0xff] %v2257
      %2262 = vst [vmem:[#allocation2 + $0x18] sm:$0xff] %v2258
    $region45: #{tpu_custom_call.1} parent=1 // pred_fallthru
      _
    %v2263 = vld [vmem:[#allocation2] sm:$0xff]
    %v2264 = vld [vmem:[#allocation2 + $0x8] sm:$0xff]
    %v2265 = vld [vmem:[#allocation2 + $0x10] sm:$0xff]
    %v2266 = vld [vmem:[#allocation2 + $0x18] sm:$0xff]
    %v2267 = vld [vmem:[#allocation11] sm:$0xf]
    %v2268 = vld [vmem:[#allocation11 + $0x4] sm:$0xf]
    %v2269 = vld [vmem:[#allocation11 + $0x8] sm:$0xf]
    %v2270 = vld [vmem:[#allocation11 + $0xc] sm:$0xf]
    %v2271 = vld [vmem:[#allocation11 + $0x10] sm:$0xf]
    %v2272 = vld [vmem:[#allocation11 + $0x14] sm:$0xf]
    %v2273 = vld [vmem:[#allocation11 + $0x18] sm:$0xf]
    %v2274 = vld [vmem:[#allocation11 + $0x1c] sm:$0xf]
    %v2275 = vld [vmem:[#allocation11 + $0x20] sm:$0xf]
    %v2276 = vld [vmem:[#allocation11 + $0x24] sm:$0xf]
    %v2277 = vld [vmem:[#allocation11 + $0x28] sm:$0xf]
    %v2278 = vld [vmem:[#allocation11 + $0x2c] sm:$0xf]
    %v2279 = vld [vmem:[#allocation11 + $0x30] sm:$0xf]
    %v2280 = vld [vmem:[#allocation11 + $0x34] sm:$0xf]
    %v2281 = vld [vmem:[#allocation11 + $0x38] sm:$0xf]
    %v2282 = vld [vmem:[#allocation11 + $0x3c] sm:$0xf]
    %v2283 = vld [vmem:[#allocation11 + $0x40] sm:$0xf]
    %v2284 = vld [vmem:[#allocation11 + $0x44] sm:$0xf]
    %v2285 = vld [vmem:[#allocation11 + $0x48] sm:$0xf]
    %v2286 = vld [vmem:[#allocation11 + $0x4c] sm:$0xf]
    %v2287 = vld [vmem:[#allocation11 + $0x50] sm:$0xf]
    %v2288 = vld [vmem:[#allocation11 + $0x54] sm:$0xf]
    %v2289 = vld [vmem:[#allocation11 + $0x58] sm:$0xf]
    %v2290 = vld [vmem:[#allocation11 + $0x5c] sm:$0xf]
    %v2291 = vld [vmem:[#allocation11 + $0x60] sm:$0xf]
    %v2292 = vld [vmem:[#allocation11 + $0x64] sm:$0xf]
    %v2293 = vld [vmem:[#allocation11 + $0x68] sm:$0xf]
    %v2294 = vld [vmem:[#allocation11 + $0x6c] sm:$0xf]
    %v2295 = vld [vmem:[#allocation11 + $0x70] sm:$0xf]
    %v2296 = vld [vmem:[#allocation11 + $0x74] sm:$0xf]
    %v2297 = vld [vmem:[#allocation11 + $0x78] sm:$0xf]
    %v2298 = vld [vmem:[#allocation11 + $0x7c] sm:$0xf]
    %v2299 = vld [vmem:[#allocation11 + $0x80] sm:$0xf]
    %v2300 = vld [vmem:[#allocation11 + $0x84] sm:$0xf]
    %v2301 = vld [vmem:[#allocation11 + $0x88] sm:$0xf]
    %v2302 = vld [vmem:[#allocation11 + $0x8c] sm:$0xf]
    %v2303 = vld [vmem:[#allocation11 + $0x90] sm:$0xf]
    %v2304 = vld [vmem:[#allocation11 + $0x94] sm:$0xf]
    %v2305 = vld [vmem:[#allocation11 + $0x98] sm:$0xf]
    %v2306 = vld [vmem:[#allocation11 + $0x9c] sm:$0xf]
    %v2307 = vld [vmem:[#allocation11 + $0xa0] sm:$0xf]
    %v2308 = vld [vmem:[#allocation11 + $0xa4] sm:$0xf]
    %v2309 = vld [vmem:[#allocation11 + $0xa8] sm:$0xf]
    %v2310 = vld [vmem:[#allocation11 + $0xac] sm:$0xf]
    %v2311 = vld [vmem:[#allocation11 + $0xb0] sm:$0xf]
    %v2312 = vld [vmem:[#allocation11 + $0xb4] sm:$0xf]
    %v2313 = vld [vmem:[#allocation11 + $0xb8] sm:$0xf]
    %v2314 = vld [vmem:[#allocation11 + $0xbc] sm:$0xf]
    %v2315 = vld [vmem:[#allocation11 + $0xc0] sm:$0xf]
    %v2316 = vld [vmem:[#allocation11 + $0xc4] sm:$0xf]
    %v2317 = vld [vmem:[#allocation11 + $0xc8] sm:$0xf]
    %v2318 = vld [vmem:[#allocation11 + $0xcc] sm:$0xf]
    %v2319 = vld [vmem:[#allocation11 + $0xd0] sm:$0xf]
    %v2320 = vld [vmem:[#allocation11 + $0xd4] sm:$0xf]
    %v2321 = vld [vmem:[#allocation11 + $0xd8] sm:$0xf]
    %v2322 = vld [vmem:[#allocation11 + $0xdc] sm:$0xf]
    %v2323 = vld [vmem:[#allocation11 + $0xe0] sm:$0xf]
    %v2324 = vld [vmem:[#allocation11 + $0xe4] sm:$0xf]
    %v2325 = vld [vmem:[#allocation11 + $0xe8] sm:$0xf]
    %v2326 = vld [vmem:[#allocation11 + $0xec] sm:$0xf]
    %v2327 = vld [vmem:[#allocation11 + $0xf0] sm:$0xf]
    %v2328 = vld [vmem:[#allocation11 + $0xf4] sm:$0xf]
    %v2329 = vld [vmem:[#allocation11 + $0xf8] sm:$0xf]
    %v2330 = vld [vmem:[#allocation11 + $0xfc] sm:$0xf]
    %v2335 = vunpack.c.l.b16 %v2263
    %v2336 = vunpack.c.h.b16 %v2263
    %v2337 = vunpack.c.l.b16 %v2264
    %v2338 = vunpack.c.h.b16 %v2264
    %v2339 = vunpack.c.l.b16 %v2265
    %v2340 = vunpack.c.h.b16 %v2265
    %v2341 = vunpack.c.l.b16 %v2266
    %v2342 = vunpack.c.h.b16 %v2266
    %v2343 = vpack.c.b16 %v2339, %v2335
    %v2344 = vpack.c.b16 %v2340, %v2336
    %v2345 = vpack.c.b16 %v2341, %v2337
    %v2346 = vpack.c.b16 %v2342, %v2338
    %v2415 = vunpack.c.l.b16 %v2267
    %v2416 = vunpack.c.l.b16 %v2268
    %v2417 = vunpack.c.l.b16 %v2269
    %v2418 = vunpack.c.l.b16 %v2270
    %v2419 = vunpack.c.l.b16 %v2271
    %v2420 = vunpack.c.l.b16 %v2272
    %v2421 = vunpack.c.l.b16 %v2273
    %v2422 = vunpack.c.l.b16 %v2274
    %v2423 = vunpack.c.l.b16 %v2275
    %v2424 = vunpack.c.l.b16 %v2276
    %v2425 = vunpack.c.l.b16 %v2277
    %v2426 = vunpack.c.l.b16 %v2278
    %v2427 = vunpack.c.l.b16 %v2279
    %v2428 = vunpack.c.l.b16 %v2280
    %v2429 = vunpack.c.l.b16 %v2281
    %v2430 = vunpack.c.l.b16 %v2282
    %v2431 = vunpack.c.l.b16 %v2283
    %v2432 = vunpack.c.l.b16 %v2284
    %v2433 = vunpack.c.l.b16 %v2285
    %v2434 = vunpack.c.l.b16 %v2286
    %v2435 = vunpack.c.l.b16 %v2287
    %v2436 = vunpack.c.l.b16 %v2288
    %v2437 = vunpack.c.l.b16 %v2289
    %v2438 = vunpack.c.l.b16 %v2290
    %v2439 = vunpack.c.l.b16 %v2291
    %v2440 = vunpack.c.l.b16 %v2292
    %v2441 = vunpack.c.l.b16 %v2293
    %v2442 = vunpack.c.l.b16 %v2294
    %v2443 = vunpack.c.l.b16 %v2295
    %v2444 = vunpack.c.l.b16 %v2296
    %v2445 = vunpack.c.l.b16 %v2297
    %v2446 = vunpack.c.l.b16 %v2298
    %v2447 = vunpack.c.l.b16 %v2299
    %v2448 = vunpack.c.l.b16 %v2300
    %v2449 = vunpack.c.l.b16 %v2301
    %v2450 = vunpack.c.l.b16 %v2302
    %v2451 = vunpack.c.l.b16 %v2303
    %v2452 = vunpack.c.l.b16 %v2304
    %v2453 = vunpack.c.l.b16 %v2305
    %v2454 = vunpack.c.l.b16 %v2306
    %v2455 = vunpack.c.l.b16 %v2307
    %v2456 = vunpack.c.l.b16 %v2308
    %v2457 = vunpack.c.l.b16 %v2309
    %v2458 = vunpack.c.l.b16 %v2310
    %v2459 = vunpack.c.l.b16 %v2311
    %v2460 = vunpack.c.l.b16 %v2312
    %v2461 = vunpack.c.l.b16 %v2313
    %v2462 = vunpack.c.l.b16 %v2314
    %v2463 = vunpack.c.l.b16 %v2315
    %v2464 = vunpack.c.l.b16 %v2316
    %v2465 = vunpack.c.l.b16 %v2317
    %v2466 = vunpack.c.l.b16 %v2318
    %v2467 = vunpack.c.l.b16 %v2319
    %v2468 = vunpack.c.l.b16 %v2320
    %v2469 = vunpack.c.l.b16 %v2321
    %v2470 = vunpack.c.l.b16 %v2322
    %v2471 = vunpack.c.l.b16 %v2323
    %v2472 = vunpack.c.l.b16 %v2324
    %v2473 = vunpack.c.l.b16 %v2325
    %v2474 = vunpack.c.l.b16 %v2326
    %v2475 = vunpack.c.l.b16 %v2327
    %v2476 = vunpack.c.l.b16 %v2328
    %v2477 = vunpack.c.l.b16 %v2329
    %v2478 = vunpack.c.l.b16 %v2330
    %v2479 = vpack.c.b16 %v2416, %v2415
    %v2480 = vpack.c.b16 %v2418, %v2417
    %v2481 = vpack.c.b16 %v2420, %v2419
    %v2482 = vpack.c.b16 %v2422, %v2421
    %v2483 = vpack.c.b16 %v2424, %v2423
    %v2484 = vpack.c.b16 %v2426, %v2425
    %v2485 = vpack.c.b16 %v2428, %v2427
    %v2486 = vpack.c.b16 %v2430, %v2429
    %v2487 = vpack.c.b16 %v2432, %v2431
    %v2488 = vpack.c.b16 %v2434, %v2433
    %v2489 = vpack.c.b16 %v2436, %v2435
    %v2490 = vpack.c.b16 %v2438, %v2437
    %v2491 = vpack.c.b16 %v2440, %v2439
    %v2492 = vpack.c.b16 %v2442, %v2441
    %v2493 = vpack.c.b16 %v2444, %v2443
    %v2494 = vpack.c.b16 %v2446, %v2445
    %v2495 = vpack.c.b16 %v2448, %v2447
    %v2496 = vpack.c.b16 %v2450, %v2449
    %v2497 = vpack.c.b16 %v2452, %v2451
    %v2498 = vpack.c.b16 %v2454, %v2453
    %v2499 = vpack.c.b16 %v2456, %v2455
    %v2500 = vpack.c.b16 %v2458, %v2457
    %v2501 = vpack.c.b16 %v2460, %v2459
    %v2502 = vpack.c.b16 %v2462, %v2461
    %v2503 = vpack.c.b16 %v2464, %v2463
    %v2504 = vpack.c.b16 %v2466, %v2465
    %v2505 = vpack.c.b16 %v2468, %v2467
    %v2506 = vpack.c.b16 %v2470, %v2469
    %v2507 = vpack.c.b16 %v2472, %v2471
    %v2508 = vpack.c.b16 %v2474, %v2473
    %v2509 = vpack.c.b16 %v2476, %v2475
    %v2510 = vpack.c.b16 %v2478, %v2477
    %2543 = vmatpush.bf16.msra.mxu0 %v2486
    %2544 = vmatpush.bf16.msra.mxu0 %v2485
    %2545 = vmatpush.bf16.msra.mxu0 %v2484
    %2546 = vmatpush.bf16.msra.mxu0 %v2483
    %2547 = vmatpush.bf16.msra.mxu0 %v2482
    %2548 = vmatpush.bf16.msra.mxu0 %v2481
    %2549 = vmatpush.bf16.msra.mxu0 %v2480
    %2550 = vmatpush.bf16.msra.mxu0 %v2479
    %2551 = vmatmul.bf16.gmra.mxu0 %v2343
    %v2552 = vpop.f32.mrf.mxu0
    %v2553 = vadd.f32 0.0, %v2552
    %v2554 = vpop.f32.mrf.mxu0
    %v2555 = vadd.f32 0.0, %v2554
    %2556 = vdwg.mxu0
    %2557 = vmatpush.bf16.msra.mxu0 %v2494
    %2558 = vmatpush.bf16.msra.mxu0 %v2493
    %2559 = vmatpush.bf16.msra.mxu0 %v2492
    %2560 = vmatpush.bf16.msra.mxu0 %v2491
    %2561 = vmatpush.bf16.msra.mxu0 %v2490
    %2562 = vmatpush.bf16.msra.mxu0 %v2489
    %2563 = vmatpush.bf16.msra.mxu0 %v2488
    %2564 = vmatpush.bf16.msra.mxu0 %v2487
    %2565 = vmatmul.bf16.gmra.mxu0 %v2344
    %v2566 = vpop.f32.mrf.mxu0
    %v2567 = vadd.f32 %v2553, %v2566
    %v2568 = vpop.f32.mrf.mxu0
    %v2569 = vadd.f32 %v2555, %v2568
    %2570 = vdwg.mxu0
    %2571 = vmatpush.bf16.msra.mxu0 %v2502
    %2572 = vmatpush.bf16.msra.mxu0 %v2501
    %2573 = vmatpush.bf16.msra.mxu0 %v2500
    %2574 = vmatpush.bf16.msra.mxu0 %v2499
    %2575 = vmatpush.bf16.msra.mxu0 %v2498
    %2576 = vmatpush.bf16.msra.mxu0 %v2497
    %2577 = vmatpush.bf16.msra.mxu0 %v2496
    %2578 = vmatpush.bf16.msra.mxu0 %v2495
    %2579 = vmatmul.bf16.gmra.mxu0 %v2345
    %v2580 = vpop.f32.mrf.mxu0
    %v2581 = vadd.f32 %v2567, %v2580
    %v2582 = vpop.f32.mrf.mxu0
    %v2583 = vadd.f32 %v2569, %v2582
    %2584 = vdwg.mxu0
    %2585 = vmatpush.bf16.msra.mxu0 %v2510
    %2586 = vmatpush.bf16.msra.mxu0 %v2509
    %2587 = vmatpush.bf16.msra.mxu0 %v2508
    %2588 = vmatpush.bf16.msra.mxu0 %v2507
    %2589 = vmatpush.bf16.msra.mxu0 %v2506
    %2590 = vmatpush.bf16.msra.mxu0 %v2505
    %2591 = vmatpush.bf16.msra.mxu0 %v2504
    %2592 = vmatpush.bf16.msra.mxu0 %v2503
    %2593 = vmatmul.bf16.gmra.mxu0 %v2346
    %v2594 = vpop.f32.mrf.mxu0
    %v2595 = vadd.f32 %v2581, %v2594
    %v2596 = vpop.f32.mrf.mxu0
    %v2597 = vadd.f32 %v2583, %v2596
    %2598 = vdwg.mxu0
    %2599 = vst [vmem:[#allocation12] sm:$0xff] %v2595
    %2600 = vst [vmem:[#allocation12 + $0x8] sm:$0xff] %v2597
    // Predicated region
    $region46: #{tpu_custom_call.1} parent=1 // pred_check
      _
    $region47: #{tpu_custom_call.1} parent=1 // pred_check_branch
      %2602 = sbr.rel (0) target = $region49
    $region48: #{tpu_custom_call.1} parent=1 // pred_region
      %2604 = vsyncadd [#allocation5], 0
      %s2605 = sshll.u32 [#allocation12], 4
      %s2606 = int_to_ptr.vmem [resolvable:$true] %s2605
      %s2607 = sshll.u32 %s5, 4
      %s2608 = int_to_ptr.hbm [resolvable:$true] %s2607
      %2613 = dma.vmem_to_hbm [thread:$0]  %s2606, 256, %s2608, [#allocation5], 128, 128, 8
    $region49: #{tpu_custom_call.1} parent=1 // pred_fallthru
      _
    // Predicated region
    $region50: #{tpu_custom_call.1} parent=1 // pred_check
      _
    $region51: #{tpu_custom_call.1} parent=1 // pred_check_branch
      %2615 = sbr.rel (0) target = $region53
    $region52: #{tpu_custom_call.1} parent=1 // pred_region
      %2617 = dma.done [#allocation5], 256
    $region53: #{tpu_custom_call.1} parent=1 // pred_fallthru
      _
    %2618 = vsyncpa [#allocation4], 1
    %2619 = vsyncpa [#allocation7], 1
    %2620 = vsyncpa [#allocation10], 1
    %2621 = vsyncpa [#allocation5], 1

</llo_original>
